<compile_context>
chip_gen: v5e
topology: v5e:2x2
jax: 0.10.0
libtpu: 0.0.40
codegen_flags: <defaults>
</compile_context>

<pallas_src>
import functools

import jax
import jax.numpy as jnp
from jax import lax
from jax.experimental import pallas as pl
from jax.experimental.pallas import tpu as pltpu


def _round_up(x, m):
    return ((x + m - 1) // m) * m


# VMEM block budget chosen so the same tiling fits every generation (v7x has
# only 64 MiB physical per TensorCore); the scoped limit leaves headroom for
# compiler-internal scratch.
_VMEM_BLOCK_BUDGET = 40 * 1024 * 1024
_VMEM_LIMIT_BYTES = 48 * 1024 * 1024
_MAX_TILE_N = 1024            # >= ~512 rows/step already sits at the HBM roofline


@functools.partial(jax.jit, static_argnames=("tile_n", "matmul_dtype"))
def semantic_attention(z, w1, b1, w2, *, tile_n=None, matmul_dtype=jnp.bfloat16):
    """HAN semantic attention (SemanticAttention.forward).

    z  : (N, M, D)  stacked per-metapath node embeddings
    w1 : (D, H)     first Linear weight, x @ W layout (torch weight.T)
    b1 : (H,)       first Linear bias
    w2 : (H,)       second Linear weight (no bias)
    returns (N, D)

    matmul_dtype: MXU input dtype for the score pass.  bf16 is the recommended
        default on v5e/v6e/v7x (MXU is bf16-native everywhere); accumulation and
        all VPU/EUP math stay f32.  Pass jnp.float32 for a bit-accurate path.
    tile_n: override for rows streamed per grid step (default: derived from a
        per-generation-safe VMEM budget).
    """
    N, M, D = z.shape
    H = w1.shape[1]
    MD, MH = M * D, M * H
    mm_dtype = jnp.dtype(matmul_dtype)
    z_itemsize = jnp.dtype(z.dtype).itemsize
    mm_itemsize = mm_dtype.itemsize

    # Pass-1 matmul formulation: kron(I_M, W1) packs the per-metapath projection
    # into a single aligned MXU matmul with K = M*D (fills the 256-wide MXU when
    # D is small); fall back to per-metapath (tile_n, D) @ (D, H) matmuls when D
    # is already MXU-wide or the block-diagonal weight would dominate VMEM.
    use_kron = (D < 256) and (M * MD * H * mm_itemsize) <= (8 << 20)
    w_bytes = (MD * MH if use_kron else D * H) * mm_itemsize
    n_wcols = MH if use_kron else H

    # Pass-2 formulation: for D % 128 != 0 the per-metapath slices are
    # lane-misaligned, so use one aligned MXU matmul against kron(beta, I_D);
    # for lane-aligned D keep the cheaper unrolled VPU FMA with beta in SMEM.
    pass2_mxu = (D % 128) != 0

    # ---- derive tile_n / VMEM usage from the actual block sizes --------------
    # (Pallas double-buffers every input/output block by default.)
    per_row1 = 2 * MD * z_itemsize + MD * mm_itemsize + 2 * MH * 4
    per_row2 = 2 * MD * z_itemsize + MD * 4 + 2 * D * 4
    fixed1 = 2 * w_bytes + 4 * n_wcols * 4 + 4 * 8 * MH * 4
    fixed2 = (2 * MD * D * 4) if pass2_mxu else (4 << 10)
    if tile_n is None:
        avail = max(_VMEM_BLOCK_BUDGET - max(fixed1, fixed2), 1 << 20)
        tile_n = min(avail // max(per_row1, per_row2), _MAX_TILE_N)
    tile_n = int(tile_n)
    tile_n = max(8, min((tile_n // 8) * 8, _round_up(N, 8)))
    num_tiles = pl.cdiv(N, tile_n)

    # v7x megacore split of the pass-1 reduction: per-core partial accumulators
    # combined in the wrapper.  Neutral on single-TensorCore chips (v5e/v6e).
    n_split = 2 if num_tiles >= 2 else 1
    tiles_per_core = pl.cdiv(num_tiles, n_split)
    any_mask = n_split * tiles_per_core * tile_n > N     # ragged / overflow tiles exist

    # Lane-dense presentation: each node row is M*D contiguous values (free
    # reshape), so DMAs are contiguous and no (M, D) sublane-padded blocks exist.
    z2 = z.reshape(N, MD)

    if use_kron:
        w1_mat = jnp.kron(jnp.eye(M, dtype=w1.dtype), w1).astype(mm_dtype)   # (MD, MH)
        b1_row = jnp.tile(b1, M).reshape(1, MH).astype(jnp.float32)
    else:
        w1_mat = w1.astype(mm_dtype)                                          # (D, H)
        b1_row = b1.reshape(1, H).astype(jnp.float32)

    # ------------- Pass 1: accumulate colsum(tanh(z @ W1 + b1)) ---------------
    # The w2 projection, /N mean and (M,)-softmax are finished in the wrapper,
    # so no (N, M) score matrix and no per-tile w2 multiply are ever produced.
    def score_kernel(z_ref, w1_ref, b1_ref, wsum_ref):
        c = pl.program_id(0)
        i = pl.program_id(1)

        @pl.when(i == 0)
        def _init():
            wsum_ref[...] = jnp.zeros_like(wsum_ref)

        zt = z_ref[...]
        if zt.dtype != mm_dtype:          # in-kernel cast: no extra HBM pass
            zt = zt.astype(mm_dtype)

        if use_kron:
            h = jnp.dot(zt, w1_ref[...], preferred_element_type=jnp.float32)   # MXU
            h = jnp.tanh(h + b1_ref[...])                                      # f32 EUP/VPU
        else:
            parts = []
            for m in range(M):
                hm = jnp.dot(zt[:, m * D:(m + 1) * D], w1_ref[...],
                             preferred_element_type=jnp.float32)
                parts.append(jnp.tanh(hm + b1_ref[...]))
            h = jnp.concatenate(parts, axis=1)                                  # (tile_n, MH)

        t = c * tiles_per_core + i                           # global node-tile index
        if not any_mask:
            wsum_ref[...] += jnp.sum(h, axis=0, keepdims=True)
        else:
            is_full = (t + 1) * tile_n <= N

            @pl.when(is_full)                                # hot path: no masking
            def _acc_full():
                wsum_ref[...] += jnp.sum(h, axis=0, keepdims=True)

            @pl.when(jnp.logical_not(is_full))               # boundary / overflow tiles only
            def _acc_masked():
                rows = lax.broadcasted_iota(jnp.int32, (tile_n, 1), 0) + t * tile_n
                hm = jnp.where(rows < N, h, 0.0)             # where (not *mask): NaN-safe
                wsum_ref[...] += jnp.sum(hm, axis=0, keepdims=True)

    wsum = pl.pallas_call(
        score_kernel,
        out_shape=jax.ShapeDtypeStruct((8 * n_split, MH), jnp.float32),
        grid=(n_split, tiles_per_core),
        in_specs=[
            pl.BlockSpec(
                (tile_n, MD),
                lambda c, i: (jnp.minimum(c * tiles_per_core + i, num_tiles - 1), 0),
            ),
            # TODO(synk): pipeline_mode=pl.Buffered(1) on these constant-index
            # operands would halve their VMEM residency once single-buffering is
            # universally supported by the grid pipeline; the tile budget above
            # already accounts for the double buffer.
            pl.BlockSpec(w1_mat.shape, lambda c, i: (0, 0)),
            pl.BlockSpec(b1_row.shape, lambda c, i: (0, 0)),
        ],
        out_specs=pl.BlockSpec((8, MH), lambda c, i: (c, 0)),   # per-core resident accumulator
        compiler_params=pltpu.CompilerParams(
            dimension_semantics=("parallel", "arbitrary"),
            vmem_limit_bytes=_VMEM_LIMIT_BYTES,
        ),
    )(z2, w1_mat, b1_row)

    # Tiny (M,)-sized tail: combine per-core partials, apply W2, mean over nodes,
    # softmax over metapaths.
    per_core = wsum.reshape(n_split, 8, MH)[:, 0, :]            # (n_split, MH)
    scores_sum = per_core.sum(axis=0).reshape(M, H)             # sum_n tanh(z W1 + b1)
    w_mean = jnp.dot(scores_sum, w2.astype(jnp.float32),
                     precision=jax.lax.Precision.HIGHEST) / N   # (M,)
    beta = jax.nn.softmax(w_mean, axis=0).astype(jnp.float32)

    # ------------- Pass 2: beta-weighted sum over metapaths -------------------
    if pass2_mxu:
        # kron(beta, I_D): one aligned MXU matmul per tile, avoiding
        # lane-misaligned sub-vreg slices when D % 128 != 0.  Stays f32.
        beta_sel = jnp.kron(beta.reshape(M, 1), jnp.eye(D, dtype=jnp.float32))  # (MD, D)

        def weighted_sum_kernel(z_ref, bsel_ref, o_ref):
            zt = z_ref[...]
            if zt.dtype != jnp.float32:
                zt = zt.astype(jnp.float32)
            o_ref[...] = jnp.dot(zt, bsel_ref[...],
                                 preferred_element_type=jnp.float32).astype(o_ref.dtype)

        in_specs2 = [
            pl.BlockSpec((tile_n, MD), lambda i: (i, 0)),       # streamed z tile
            pl.BlockSpec((MD, D), lambda i: (0, 0)),            # resident beta selector
        ]
        operands2 = (z2, beta_sel)
    else:
        def weighted_sum_kernel(beta_ref, z_ref, o_ref):
            # Unrolled VPU FMA over the small static M axis; lane-aligned slices.
            acc = beta_ref[0] * z_ref[:, 0:D].astype(jnp.float32)
            for m in range(1, M):
                acc = acc + beta_ref[m] * z_ref[:, m * D:(m + 1) * D].astype(jnp.float32)
            o_ref[...] = acc.astype(o_ref.dtype)

        in_specs2 = [
            pl.BlockSpec(memory_space=pltpu.MemorySpace.SMEM),  # beta (M,) scalars
            pl.BlockSpec((tile_n, MD), lambda i: (i, 0)),       # streamed z tile
        ]
        operands2 = (beta, z2)

    out = pl.pallas_call(
        weighted_sum_kernel,
        out_shape=jax.ShapeDtypeStruct((N, D), z.dtype),
        grid=(num_tiles,),
        in_specs=in_specs2,
        out_specs=pl.BlockSpec((tile_n, D), lambda i: (i, 0)),
        compiler_params=pltpu.CompilerParams(
            dimension_semantics=("parallel",),                  # shard over TCs on v7x
            vmem_limit_bytes=_VMEM_LIMIT_BYTES,
        ),
    )(*operands2)
    return out


def semantic_attention_ref(z, w1, b1, w2):
    """Pure-JAX f32 reference mirroring the PyTorch forward."""
    hp = jax.lax.Precision.HIGHEST
    h = jnp.tanh(jnp.einsum("nmd,dh->nmh", z, w1, precision=hp) + b1)
    s = jnp.einsum("nmh,h->nm", h, w2, precision=hp)   # project(z).squeeze(-1): (N, M)
    w = jnp.mean(s, axis=0)                            # (M,)
    beta = jax.nn.softmax(w, axis=0)                   # (M,)
    return jnp.sum(beta[None, :, None] * z, axis=1)    # (N, D)


if __name__ == "__main__":
    # Shapes consistent with HANLayer: N nodes, M metapaths,
    # D = out_size * num_heads, H = SemanticAttention hidden_size (default 128).
    root = jax.random.PRNGKey(0)

    def make_inputs(key, N, M, D, H):
        kz, kw1, kb1, kw2 = jax.random.split(key, 4)
        z = jax.random.normal(kz, (N, M, D), dtype=jnp.float32)
        w1 = jax.random.normal(kw1, (D, H), dtype=jnp.float32) * (1.0 / jnp.sqrt(D))
        b1 = jax.random.normal(kb1, (H,), dtype=jnp.float32) * 0.01
        w2 = jax.random.normal(kw2, (H,), dtype=jnp.float32) * (1.0 / jnp.sqrt(H))
        return z, w1, b1, w2

    keys = jax.random.split(root, 4)

    # 1) Main config, exact f32 MXU path (valid on every generation).
    z, w1, b1, w2 = make_inputs(keys[0], 1000, 4, 64, 128)
    ref = semantic_attention_ref(z, w1, b1, w2)
    out = jax.block_until_ready(
        semantic_attention(z, w1, b1, w2, matmul_dtype=jnp.float32))
    assert out.shape == (1000, 64)
    assert jnp.allclose(out, ref, atol=2e-3, rtol=2e-3), "f32 kernel mismatch"

    # 2) Default bf16 MXU-input path (recommended on v5e/v6e/v7x); tile_n=256
    #    forces 4 node tiles so the two-core pass-1 split (2 tiles/core) runs.
    out_bf16 = jax.block_until_ready(semantic_attention(z, w1, b1, w2, tile_n=256))
    assert jnp.allclose(out_bf16, ref, atol=5e-2, rtol=5e-2), "bf16 kernel mismatch"

    # 3) Ragged N (not a multiple of tile_n nor of 8) with an odd tile count
    #    (num_tiles=5 split 3+2): exercises the clamped index_map, the pl.when
    #    masked accumulation and partial-output-block writeback in pass 2.
    z, w1, b1, w2 = make_inputs(keys[1], 237, 3, 64, 32)
    ref = semantic_attention_ref(z, w1, b1, w2)
    out = jax.block_until_ready(
        semantic_attention(z, w1, b1, w2, tile_n=48, matmul_dtype=jnp.float32))
    assert out.shape == (237, 64)
    assert jnp.allclose(out, ref, atol=2e-3, rtol=2e-3), "ragged kernel mismatch"

    # 4) Lane-aligned D (D % 128 == 0): pass-2 unrolled VPU FMA path (SMEM beta).
    z, w1, b1, w2 = make_inputs(keys[2], 200, 2, 128, 64)
    ref = semantic_attention_ref(z, w1, b1, w2)
    out = jax.block_until_ready(
        semantic_attention(z, w1, b1, w2, matmul_dtype=jnp.float32))
    assert jnp.allclose(out, ref, atol=2e-3, rtol=2e-3), "aligned-D kernel mismatch"

    # 5) Wide D (>= 256): per-metapath matmul fallback instead of kron(I_M, W1).
    z, w1, b1, w2 = make_inputs(keys[3], 160, 2, 256, 128)
    ref = semantic_attention_ref(z, w1, b1, w2)
    out = jax.block_until_ready(
        semantic_attention(z, w1, b1, w2, matmul_dtype=jnp.float32))
    assert jnp.allclose(out, ref, atol=2e-3, rtol=2e-3), "wide-D kernel mismatch"

    print("KERNEL_OK")
</pallas_src>

<mosaic_0001>
module attributes {stable_mosaic.version = 11 : i64} {
  func.func @score_kernel(%arg0: i32, %arg1: i32, %arg2: memref<1000x256xf32, #tpu.memory_space<vmem>>, %arg3: memref<256x512xf32, #tpu.memory_space<vmem>>, %arg4: memref<1x512xf32, #tpu.memory_space<vmem>>, %arg5: memref<8x512xf32, #tpu.memory_space<vmem>>) attributes {dimension_semantics = [#tpu.dimension_semantics<parallel>, #tpu.dimension_semantics<arbitrary>], iteration_bounds = array<i64: 1, 1>, scalar_prefetch = 0 : i64, scratch_operands = 0 : i64, tpu.core_type = #tpu.core_type<tc>, window_params = [{transform_indices = @transform_0, window_bounds = array<i64: 1000, 256>}, {pipeline_mode = #tpu.pipeline_mode<synchronous>, transform_indices = @transform_1, window_bounds = array<i64: 256, 512>}, {pipeline_mode = #tpu.pipeline_mode<synchronous>, transform_indices = @transform_2, window_bounds = array<i64: 1, 512>}, {transform_indices = @transform_3, window_bounds = array<i64: 8, 512>}]} {
    %c0_i32 = arith.constant 0 : i32
    %0 = arith.cmpi eq, %arg1, %c0_i32 : i32
    %1 = arith.extui %0 : i1 to i32
    %c0_i32_0 = arith.constant 0 : i32
    %2 = arith.cmpi ne, %1, %c0_i32_0 : i32
    scf.if %2 {
      %cst_11 = arith.constant 0.000000e+00 : f32
      %16 = vector.broadcast %cst_11 : f32 to vector<8x512xf32>
      %c0_12 = arith.constant 0 : index
      %c0_13 = arith.constant 0 : index
      %17 = vector.load %arg5[%c0_12, %c0_13] : memref<8x512xf32, #tpu.memory_space<vmem>>, vector<8x512xf32>
      tpu.vector_store %arg5[%c0_12, %c0_13], %16 {strides = array<i32>} : memref<8x512xf32, #tpu.memory_space<vmem>>, vector<8x512xf32>,
    } else {
    }
    %c0 = arith.constant 0 : index
    %c0_1 = arith.constant 0 : index
    %3 = vector.load %arg2[%c0, %c0_1] : memref<1000x256xf32, #tpu.memory_space<vmem>>, vector<1000x256xf32>
    %c0_2 = arith.constant 0 : index
    %c0_3 = arith.constant 0 : index
    %4 = vector.load %arg3[%c0_2, %c0_3] : memref<256x512xf32, #tpu.memory_space<vmem>>, vector<256x512xf32>
    %cst = arith.constant dense<0.000000e+00> : vector<1000x512xf32>
    %5 = tpu.matmul %3, %4, %cst {dimension_numbers = #tpu.dot_dimension_numbers<[1], [0], [0], [1], [0, 0, 1, 1], [], []>} : vector<1000x256xf32>, vector<256x512xf32>, vector<1000x512xf32> -> vector<1000x512xf32>
    %c0_4 = arith.constant 0 : index
    %c0_5 = arith.constant 0 : index
    %6 = vector.load %arg4[%c0_4, %c0_5] : memref<1x512xf32, #tpu.memory_space<vmem>>, vector<1x512xf32>
    %7 = vector.broadcast %6 : vector<1x512xf32> to vector<1000x512xf32>
    %8 = arith.addf %5, %7 : vector<1000x512xf32>
    %9 = math.tanh %8 : vector<1000x512xf32>
    %c0_6 = arith.constant 0 : index
    %c0_7 = arith.constant 0 : index
    %10 = vector.load %arg5[%c0_6, %c0_7] : memref<8x512xf32, #tpu.memory_space<vmem>>, vector<8x512xf32>
    %cst_8 = arith.constant dense<0.000000e+00> : vector<512xf32>
    %11 = vector.multi_reduction <add>, %9, %cst_8 [0] : vector<1000x512xf32> to vector<512xf32>
    %12 = vector.shape_cast %11 : vector<512xf32> to vector<1x512xf32>
    %13 = vector.broadcast %12 : vector<1x512xf32> to vector<8x512xf32>
    %14 = arith.addf %10, %13 : vector<8x512xf32>
    %c0_9 = arith.constant 0 : index
    %c0_10 = arith.constant 0 : index
    %15 = vector.load %arg5[%c0_9, %c0_10] : memref<8x512xf32, #tpu.memory_space<vmem>>, vector<8x512xf32>
    tpu.vector_store %arg5[%c0_9, %c0_10], %14 {strides = array<i32>} : memref<8x512xf32, #tpu.memory_space<vmem>>, vector<8x512xf32>,
    return
  }
  func.func @transform_0(%arg0: i32, %arg1: i32) -> (i32, i32) {
    %c1_i32 = arith.constant 1 : i32
    %0 = arith.muli %arg0, %c1_i32 : i32
    %1 = arith.addi %0, %arg1 : i32
    %c0_i32 = arith.constant 0 : i32
    %2 = arith.minsi %1, %c0_i32 : i32
    %c0_i32_0 = arith.constant 0 : i32
    %c0_i32_1 = arith.constant 0 : i32
    return %2, %c0_i32_0 : i32, i32
  }
  func.func @transform_1(%arg0: i32, %arg1: i32) -> (i32, i32) {
    %c0_i32 = arith.constant 0 : i32
    %c0_i32_0 = arith.constant 0 : i32
    %c0_i32_1 = arith.constant 0 : i32
    return %c0_i32, %c0_i32_0 : i32, i32
  }
  func.func @transform_2(%arg0: i32, %arg1: i32) -> (i32, i32) {
    %c0_i32 = arith.constant 0 : i32
    %c0_i32_0 = arith.constant 0 : i32
    %c0_i32_1 = arith.constant 0 : i32
    return %c0_i32, %c0_i32_0 : i32, i32
  }
  func.func @transform_3(%arg0: i32, %arg1: i32) -> (i32, i32) {
    %c0_i32 = arith.constant 0 : i32
    %c0_i32_0 = arith.constant 0 : i32
    return %arg0, %c0_i32 : i32, i32
  }
}

module attributes {stable_mosaic.version = 11 : i64} {
  func.func @weighted_sum_kernel(%arg0: i32, %arg1: memref<1000x256xf32, #tpu.memory_space<vmem>>, %arg2: memref<256x64xf32, #tpu.memory_space<vmem>>, %arg3: memref<1000x64xf32, #tpu.memory_space<vmem>>) attributes {dimension_semantics = [#tpu.dimension_semantics<parallel>], iteration_bounds = array<i64: 1>, scalar_prefetch = 0 : i64, scratch_operands = 0 : i64, tpu.core_type = #tpu.core_type<tc>, window_params = [{transform_indices = @transform_0, window_bounds = array<i64: 1000, 256>}, {pipeline_mode = #tpu.pipeline_mode<synchronous>, transform_indices = @transform_1, window_bounds = array<i64: 256, 64>}, {transform_indices = @transform_2, window_bounds = array<i64: 1000, 64>}]} {
    %c0 = arith.constant 0 : index
    %c0_0 = arith.constant 0 : index
    %0 = vector.load %arg1[%c0, %c0_0] : memref<1000x256xf32, #tpu.memory_space<vmem>>, vector<1000x256xf32>
    %c0_1 = arith.constant 0 : index
    %c0_2 = arith.constant 0 : index
    %1 = vector.load %arg2[%c0_1, %c0_2] : memref<256x64xf32, #tpu.memory_space<vmem>>, vector<256x64xf32>
    %cst = arith.constant dense<0.000000e+00> : vector<1000x64xf32>
    %2 = tpu.matmul %0, %1, %cst {dimension_numbers = #tpu.dot_dimension_numbers<[1], [0], [0], [1], [0, 0, 1, 1], [], []>} : vector<1000x256xf32>, vector<256x64xf32>, vector<1000x64xf32> -> vector<1000x64xf32>
    %c0_3 = arith.constant 0 : index
    %c0_4 = arith.constant 0 : index
    %3 = vector.load %arg3[%c0_3, %c0_4] : memref<1000x64xf32, #tpu.memory_space<vmem>>, vector<1000x64xf32>
    tpu.vector_store %arg3[%c0_3, %c0_4], %2 {strides = array<i32>} : memref<1000x64xf32, #tpu.memory_space<vmem>>, vector<1000x64xf32>,
    return
  }
  func.func @transform_0(%arg0: i32) -> (i32, i32) {
    %c0_i32 = arith.constant 0 : i32
    %c0_i32_0 = arith.constant 0 : i32
    return %arg0, %c0_i32 : i32, i32
  }
  func.func @transform_1(%arg0: i32) -> (i32, i32) {
    %c0_i32 = arith.constant 0 : i32
    %c0_i32_0 = arith.constant 0 : i32
    %c0_i32_1 = arith.constant 0 : i32
    return %c0_i32, %c0_i32_0 : i32, i32
  }
  func.func @transform_2(%arg0: i32) -> (i32, i32) {
    %c0_i32 = arith.constant 0 : i32
    %c0_i32_0 = arith.constant 0 : i32
    return %arg0, %c0_i32 : i32, i32
  }
}

</mosaic_0001>

<llo_original>
// kernel: tile.8
$region0: #{tile.8}
  #allocation0 [shape = 's32[1]{0}', space=sflag, size = 0x4, scoped, tag = 'scoped memory for tile.8']
  %s0 = inlined_call_operand.vmem [shape: f32[128], index: 0, kind: input, shape index: {}]
  %s1 = inlined_call_operand.vmem [shape: f32[4,128], index: 1, kind: output, shape index: {}]
  // Predicated region
  $region2: #{tile.8} parent=0 // pred_check
    _
  $region3: #{tile.8} parent=0 // pred_check_branch
    %3 = sbr.rel (0) target = $region5
  $region4: #{tile.8} parent=0 // pred_region
    _
  $region5: #{tile.8} parent=0 // pred_fallthru
    _
  %v4 = vld [vmem:[%s0] ss:$0 sm:$0xff]
  %5 = vst [vmem:[%s1] sm:$0xf] %v4

// kernel: semantic_attention.3
$region0: #{semantic_attention.3}
  #allocation0 [shape = 'u32[]', space=smem, size = 0x4, offset = 0x4, fixed_abs, tag = 'smem constant byte address 0x4 - core index']
  #allocation1 [shape = 'u32[72,128]{1,0:T(1,128)}', space=vmem, size = 0x9000, scoped, tag = 'internal scratch']
  %s0 = inlined_call_operand.vmem [shape: f32[1000,256], index: 0, kind: input, shape index: {}]
  %s1 = inlined_call_operand.vmem [shape: f32[256,64], index: 1, kind: input, shape index: {}]
  %s2 = inlined_call_operand.vmem [shape: f32[1000,64], index: 2, kind: output, shape index: {}]
  %s3 = sld [smem:[#allocation0]]
  $region18: #{semantic_attention.3} parent=0
    _
  %s5 = ssub.s32 1, %s3
  %s6 = scalar_select 0, %s5, %s3
  // Predicated region
  $region2: #{semantic_attention.3} parent=0 // pred_check
    _
  $region3: #{semantic_attention.3} parent=0 // pred_check_branch
    %8 = sbr.rel (0) target = $region5
  $region4: #{semantic_attention.3} parent=0 // pred_region
    _
  $region5: #{semantic_attention.3} parent=0 // pred_fallthru
    _
  // Predicated region
  $region6: #{semantic_attention.3} parent=0 // pred_check
    _
  $region7: #{semantic_attention.3} parent=0 // pred_check_branch
    %10 = sbr.rel (0) target = $region9
  $region8: #{semantic_attention.3} parent=0 // pred_region
    _
  $region9: #{semantic_attention.3} parent=0 // pred_fallthru
    _
  %v11 = vld [vmem:[%s0] sm:$0xff]
  %v12 = vld [vmem:[%s0 + $0x8] sm:$0xff]
  %v13 = vld [vmem:[%s0 + $0x10] sm:$0xff]
  %v14 = vld [vmem:[%s0 + $0x18] sm:$0xff]
  %v15 = vld [vmem:[%s0 + $0x20] sm:$0xff]
  %v16 = vld [vmem:[%s0 + $0x28] sm:$0xff]
  %v17 = vld [vmem:[%s0 + $0x30] sm:$0xff]
  %v18 = vld [vmem:[%s0 + $0x38] sm:$0xff]
  %v19 = vld [vmem:[%s0 + $0x40] sm:$0xff]
  %v20 = vld [vmem:[%s0 + $0x48] sm:$0xff]
  %v21 = vld [vmem:[%s0 + $0x50] sm:$0xff]
  %v22 = vld [vmem:[%s0 + $0x58] sm:$0xff]
  %v23 = vld [vmem:[%s0 + $0x60] sm:$0xff]
  %v24 = vld [vmem:[%s0 + $0x68] sm:$0xff]
  %v25 = vld [vmem:[%s0 + $0x70] sm:$0xff]
  %v26 = vld [vmem:[%s0 + $0x78] sm:$0xff]
  %v27 = vld [vmem:[%s0 + $0x80] sm:$0xff]
  %v28 = vld [vmem:[%s0 + $0x88] sm:$0xff]
  %v29 = vld [vmem:[%s0 + $0x90] sm:$0xff]
  %v30 = vld [vmem:[%s0 + $0x98] sm:$0xff]
  %v31 = vld [vmem:[%s0 + $0xa0] sm:$0xff]
  %v32 = vld [vmem:[%s0 + $0xa8] sm:$0xff]
  %v33 = vld [vmem:[%s0 + $0xb0] sm:$0xff]
  %v34 = vld [vmem:[%s0 + $0xb8] sm:$0xff]
  %v35 = vld [vmem:[%s0 + $0xc0] sm:$0xff]
  %v36 = vld [vmem:[%s0 + $0xc8] sm:$0xff]
  %v37 = vld [vmem:[%s0 + $0xd0] sm:$0xff]
  %v38 = vld [vmem:[%s0 + $0xd8] sm:$0xff]
  %v39 = vld [vmem:[%s0 + $0xe0] sm:$0xff]
  %v40 = vld [vmem:[%s0 + $0xe8] sm:$0xff]
  %v41 = vld [vmem:[%s0 + $0xf0] sm:$0xff]
  %v42 = vld [vmem:[%s0 + $0xf8] sm:$0xff]
  %v43 = vld [vmem:[%s0 + $0x100] sm:$0xff]
  %v44 = vld [vmem:[%s0 + $0x108] sm:$0xff]
  %v45 = vld [vmem:[%s0 + $0x110] sm:$0xff]
  %v46 = vld [vmem:[%s0 + $0x118] sm:$0xff]
  %v47 = vld [vmem:[%s0 + $0x120] sm:$0xff]
  %v48 = vld [vmem:[%s0 + $0x128] sm:$0xff]
  %v49 = vld [vmem:[%s0 + $0x130] sm:$0xff]
  %v50 = vld [vmem:[%s0 + $0x138] sm:$0xff]
  %v51 = vld [vmem:[%s0 + $0x140] sm:$0xff]
  %v52 = vld [vmem:[%s0 + $0x148] sm:$0xff]
  %v53 = vld [vmem:[%s0 + $0x150] sm:$0xff]
  %v54 = vld [vmem:[%s0 + $0x158] sm:$0xff]
  %v55 = vld [vmem:[%s0 + $0x160] sm:$0xff]
  %v56 = vld [vmem:[%s0 + $0x168] sm:$0xff]
  %v57 = vld [vmem:[%s0 + $0x170] sm:$0xff]
  %v58 = vld [vmem:[%s0 + $0x178] sm:$0xff]
  %v59 = vld [vmem:[%s0 + $0x180] sm:$0xff]
  %v60 = vld [vmem:[%s0 + $0x188] sm:$0xff]
  %v61 = vld [vmem:[%s0 + $0x190] sm:$0xff]
  %v62 = vld [vmem:[%s0 + $0x198] sm:$0xff]
  %v63 = vld [vmem:[%s0 + $0x1a0] sm:$0xff]
  %v64 = vld [vmem:[%s0 + $0x1a8] sm:$0xff]
  %v65 = vld [vmem:[%s0 + $0x1b0] sm:$0xff]
  %v66 = vld [vmem:[%s0 + $0x1b8] sm:$0xff]
  %v67 = vld [vmem:[%s0 + $0x1c0] sm:$0xff]
  %v68 = vld [vmem:[%s0 + $0x1c8] sm:$0xff]
  %v69 = vld [vmem:[%s0 + $0x1d0] sm:$0xff]
  %v70 = vld [vmem:[%s0 + $0x1d8] sm:$0xff]
  %v71 = vld [vmem:[%s0 + $0x1e0] sm:$0xff]
  %v72 = vld [vmem:[%s0 + $0x1e8] sm:$0xff]
  %v73 = vld [vmem:[%s0 + $0x1f0] sm:$0xff]
  %v74 = vld [vmem:[%s0 + $0x1f8] sm:$0xff]
  %v75 = vld [vmem:[%s0 + $0x200] sm:$0xff]
  %v76 = vld [vmem:[%s0 + $0x208] sm:$0xff]
  %v77 = vld [vmem:[%s0 + $0x210] sm:$0xff]
  %v78 = vld [vmem:[%s0 + $0x218] sm:$0xff]
  %v79 = vld [vmem:[%s0 + $0x220] sm:$0xff]
  %v80 = vld [vmem:[%s0 + $0x228] sm:$0xff]
  %v81 = vld [vmem:[%s0 + $0x230] sm:$0xff]
  %v82 = vld [vmem:[%s0 + $0x238] sm:$0xff]
  %v83 = vld [vmem:[%s0 + $0x240] sm:$0xff]
  %v84 = vld [vmem:[%s0 + $0x248] sm:$0xff]
  %v85 = vld [vmem:[%s0 + $0x250] sm:$0xff]
  %v86 = vld [vmem:[%s0 + $0x258] sm:$0xff]
  %v87 = vld [vmem:[%s0 + $0x260] sm:$0xff]
  %v88 = vld [vmem:[%s0 + $0x268] sm:$0xff]
  %v89 = vld [vmem:[%s0 + $0x270] sm:$0xff]
  %v90 = vld [vmem:[%s0 + $0x278] sm:$0xff]
  %v91 = vld [vmem:[%s0 + $0x280] sm:$0xff]
  %v92 = vld [vmem:[%s0 + $0x288] sm:$0xff]
  %v93 = vld [vmem:[%s0 + $0x290] sm:$0xff]
  %v94 = vld [vmem:[%s0 + $0x298] sm:$0xff]
  %v95 = vld [vmem:[%s0 + $0x2a0] sm:$0xff]
  %v96 = vld [vmem:[%s0 + $0x2a8] sm:$0xff]
  %v97 = vld [vmem:[%s0 + $0x2b0] sm:$0xff]
  %v98 = vld [vmem:[%s0 + $0x2b8] sm:$0xff]
  %v99 = vld [vmem:[%s0 + $0x2c0] sm:$0xff]
  %v100 = vld [vmem:[%s0 + $0x2c8] sm:$0xff]
  %v101 = vld [vmem:[%s0 + $0x2d0] sm:$0xff]
  %v102 = vld [vmem:[%s0 + $0x2d8] sm:$0xff]
  %v103 = vld [vmem:[%s0 + $0x2e0] sm:$0xff]
  %v104 = vld [vmem:[%s0 + $0x2e8] sm:$0xff]
  %v105 = vld [vmem:[%s0 + $0x2f0] sm:$0xff]
  %v106 = vld [vmem:[%s0 + $0x2f8] sm:$0xff]
  %v107 = vld [vmem:[%s0 + $0x300] sm:$0xff]
  %v108 = vld [vmem:[%s0 + $0x308] sm:$0xff]
  %v109 = vld [vmem:[%s0 + $0x310] sm:$0xff]
  %v110 = vld [vmem:[%s0 + $0x318] sm:$0xff]
  %v111 = vld [vmem:[%s0 + $0x320] sm:$0xff]
  %v112 = vld [vmem:[%s0 + $0x328] sm:$0xff]
  %v113 = vld [vmem:[%s0 + $0x330] sm:$0xff]
  %v114 = vld [vmem:[%s0 + $0x338] sm:$0xff]
  %v115 = vld [vmem:[%s0 + $0x340] sm:$0xff]
  %v116 = vld [vmem:[%s0 + $0x348] sm:$0xff]
  %v117 = vld [vmem:[%s0 + $0x350] sm:$0xff]
  %v118 = vld [vmem:[%s0 + $0x358] sm:$0xff]
  %v119 = vld [vmem:[%s0 + $0x360] sm:$0xff]
  %v120 = vld [vmem:[%s0 + $0x368] sm:$0xff]
  %v121 = vld [vmem:[%s0 + $0x370] sm:$0xff]
  %v122 = vld [vmem:[%s0 + $0x378] sm:$0xff]
  %v123 = vld [vmem:[%s0 + $0x380] sm:$0xff]
  %v124 = vld [vmem:[%s0 + $0x388] sm:$0xff]
  %v125 = vld [vmem:[%s0 + $0x390] sm:$0xff]
  %v126 = vld [vmem:[%s0 + $0x398] sm:$0xff]
  %v127 = vld [vmem:[%s0 + $0x3a0] sm:$0xff]
  %v128 = vld [vmem:[%s0 + $0x3a8] sm:$0xff]
  %v129 = vld [vmem:[%s0 + $0x3b0] sm:$0xff]
  %v130 = vld [vmem:[%s0 + $0x3b8] sm:$0xff]
  %v131 = vld [vmem:[%s0 + $0x3c0] sm:$0xff]
  %v132 = vld [vmem:[%s0 + $0x3c8] sm:$0xff]
  %v133 = vld [vmem:[%s0 + $0x3d0] sm:$0xff]
  %v134 = vld [vmem:[%s0 + $0x3d8] sm:$0xff]
  %v135 = vld [vmem:[%s0 + $0x3e0] sm:$0xff]
  %v136 = vld [vmem:[%s0 + $0x3e8] sm:$0xff]
  %v137 = vld [vmem:[%s0 + $0x3f0] sm:$0xff]
  %v138 = vld [vmem:[%s0 + $0x3f8] sm:$0xff]
  %v139 = vld [vmem:[%s0 + $0x400] sm:$0xff]
  %v140 = vld [vmem:[%s0 + $0x408] sm:$0xff]
  %v141 = vld [vmem:[%s0 + $0x410] sm:$0xff]
  %v142 = vld [vmem:[%s0 + $0x418] sm:$0xff]
  %v143 = vld [vmem:[%s0 + $0x420] sm:$0xff]
  %v144 = vld [vmem:[%s0 + $0x428] sm:$0xff]
  %v145 = vld [vmem:[%s0 + $0x430] sm:$0xff]
  %v146 = vld [vmem:[%s0 + $0x438] sm:$0xff]
  %v147 = vld [vmem:[%s0 + $0x440] sm:$0xff]
  %v148 = vld [vmem:[%s0 + $0x448] sm:$0xff]
  %v149 = vld [vmem:[%s0 + $0x450] sm:$0xff]
  %v150 = vld [vmem:[%s0 + $0x458] sm:$0xff]
  %v151 = vld [vmem:[%s0 + $0x460] sm:$0xff]
  %v152 = vld [vmem:[%s0 + $0x468] sm:$0xff]
  %v153 = vld [vmem:[%s0 + $0x470] sm:$0xff]
  %v154 = vld [vmem:[%s0 + $0x478] sm:$0xff]
  %v155 = vld [vmem:[%s0 + $0x480] sm:$0xff]
  %v156 = vld [vmem:[%s0 + $0x488] sm:$0xff]
  %v157 = vld [vmem:[%s0 + $0x490] sm:$0xff]
  %v158 = vld [vmem:[%s0 + $0x498] sm:$0xff]
  %v159 = vld [vmem:[%s0 + $0x4a0] sm:$0xff]
  %v160 = vld [vmem:[%s0 + $0x4a8] sm:$0xff]
  %v161 = vld [vmem:[%s0 + $0x4b0] sm:$0xff]
  %v162 = vld [vmem:[%s0 + $0x4b8] sm:$0xff]
  %v163 = vld [vmem:[%s0 + $0x4c0] sm:$0xff]
  %v164 = vld [vmem:[%s0 + $0x4c8] sm:$0xff]
  %v165 = vld [vmem:[%s0 + $0x4d0] sm:$0xff]
  %v166 = vld [vmem:[%s0 + $0x4d8] sm:$0xff]
  %v167 = vld [vmem:[%s0 + $0x4e0] sm:$0xff]
  %v168 = vld [vmem:[%s0 + $0x4e8] sm:$0xff]
  %v169 = vld [vmem:[%s0 + $0x4f0] sm:$0xff]
  %v170 = vld [vmem:[%s0 + $0x4f8] sm:$0xff]
  %v171 = vld [vmem:[%s0 + $0x500] sm:$0xff]
  %v172 = vld [vmem:[%s0 + $0x508] sm:$0xff]
  %v173 = vld [vmem:[%s0 + $0x510] sm:$0xff]
  %v174 = vld [vmem:[%s0 + $0x518] sm:$0xff]
  %v175 = vld [vmem:[%s0 + $0x520] sm:$0xff]
  %v176 = vld [vmem:[%s0 + $0x528] sm:$0xff]
  %v177 = vld [vmem:[%s0 + $0x530] sm:$0xff]
  %v178 = vld [vmem:[%s0 + $0x538] sm:$0xff]
  %v179 = vld [vmem:[%s0 + $0x540] sm:$0xff]
  %v180 = vld [vmem:[%s0 + $0x548] sm:$0xff]
  %v181 = vld [vmem:[%s0 + $0x550] sm:$0xff]
  %v182 = vld [vmem:[%s0 + $0x558] sm:$0xff]
  %v183 = vld [vmem:[%s0 + $0x560] sm:$0xff]
  %v184 = vld [vmem:[%s0 + $0x568] sm:$0xff]
  %v185 = vld [vmem:[%s0 + $0x570] sm:$0xff]
  %v186 = vld [vmem:[%s0 + $0x578] sm:$0xff]
  %v187 = vld [vmem:[%s0 + $0x580] sm:$0xff]
  %v188 = vld [vmem:[%s0 + $0x588] sm:$0xff]
  %v189 = vld [vmem:[%s0 + $0x590] sm:$0xff]
  %v190 = vld [vmem:[%s0 + $0x598] sm:$0xff]
  %v191 = vld [vmem:[%s0 + $0x5a0] sm:$0xff]
  %v192 = vld [vmem:[%s0 + $0x5a8] sm:$0xff]
  %v193 = vld [vmem:[%s0 + $0x5b0] sm:$0xff]
  %v194 = vld [vmem:[%s0 + $0x5b8] sm:$0xff]
  %v195 = vld [vmem:[%s0 + $0x5c0] sm:$0xff]
  %v196 = vld [vmem:[%s0 + $0x5c8] sm:$0xff]
  %v197 = vld [vmem:[%s0 + $0x5d0] sm:$0xff]
  %v198 = vld [vmem:[%s0 + $0x5d8] sm:$0xff]
  %v199 = vld [vmem:[%s0 + $0x5e0] sm:$0xff]
  %v200 = vld [vmem:[%s0 + $0x5e8] sm:$0xff]
  %v201 = vld [vmem:[%s0 + $0x5f0] sm:$0xff]
  %v202 = vld [vmem:[%s0 + $0x5f8] sm:$0xff]
  %v203 = vld [vmem:[%s0 + $0x600] sm:$0xff]
  %v204 = vld [vmem:[%s0 + $0x608] sm:$0xff]
  %v205 = vld [vmem:[%s0 + $0x610] sm:$0xff]
  %v206 = vld [vmem:[%s0 + $0x618] sm:$0xff]
  %v207 = vld [vmem:[%s0 + $0x620] sm:$0xff]
  %v208 = vld [vmem:[%s0 + $0x628] sm:$0xff]
  %v209 = vld [vmem:[%s0 + $0x630] sm:$0xff]
  %v210 = vld [vmem:[%s0 + $0x638] sm:$0xff]
  %v211 = vld [vmem:[%s0 + $0x640] sm:$0xff]
  %v212 = vld [vmem:[%s0 + $0x648] sm:$0xff]
  %v213 = vld [vmem:[%s0 + $0x650] sm:$0xff]
  %v214 = vld [vmem:[%s0 + $0x658] sm:$0xff]
  %v215 = vld [vmem:[%s0 + $0x660] sm:$0xff]
  %v216 = vld [vmem:[%s0 + $0x668] sm:$0xff]
  %v217 = vld [vmem:[%s0 + $0x670] sm:$0xff]
  %v218 = vld [vmem:[%s0 + $0x678] sm:$0xff]
  %v219 = vld [vmem:[%s0 + $0x680] sm:$0xff]
  %v220 = vld [vmem:[%s0 + $0x688] sm:$0xff]
  %v221 = vld [vmem:[%s0 + $0x690] sm:$0xff]
  %v222 = vld [vmem:[%s0 + $0x698] sm:$0xff]
  %v223 = vld [vmem:[%s0 + $0x6a0] sm:$0xff]
  %v224 = vld [vmem:[%s0 + $0x6a8] sm:$0xff]
  %v225 = vld [vmem:[%s0 + $0x6b0] sm:$0xff]
  %v226 = vld [vmem:[%s0 + $0x6b8] sm:$0xff]
  %v227 = vld [vmem:[%s0 + $0x6c0] sm:$0xff]
  %v228 = vld [vmem:[%s0 + $0x6c8] sm:$0xff]
  %v229 = vld [vmem:[%s0 + $0x6d0] sm:$0xff]
  %v230 = vld [vmem:[%s0 + $0x6d8] sm:$0xff]
  %v231 = vld [vmem:[%s0 + $0x6e0] sm:$0xff]
  %v232 = vld [vmem:[%s0 + $0x6e8] sm:$0xff]
  %v233 = vld [vmem:[%s0 + $0x6f0] sm:$0xff]
  %v234 = vld [vmem:[%s0 + $0x6f8] sm:$0xff]
  %v235 = vld [vmem:[%s0 + $0x700] sm:$0xff]
  %v236 = vld [vmem:[%s0 + $0x708] sm:$0xff]
  %v237 = vld [vmem:[%s0 + $0x710] sm:$0xff]
  %v238 = vld [vmem:[%s0 + $0x718] sm:$0xff]
  %v239 = vld [vmem:[%s0 + $0x720] sm:$0xff]
  %v240 = vld [vmem:[%s0 + $0x728] sm:$0xff]
  %v241 = vld [vmem:[%s0 + $0x730] sm:$0xff]
  %v242 = vld [vmem:[%s0 + $0x738] sm:$0xff]
  %v243 = vld [vmem:[%s0 + $0x740] sm:$0xff]
  %v244 = vld [vmem:[%s0 + $0x748] sm:$0xff]
  %v245 = vld [vmem:[%s0 + $0x750] sm:$0xff]
  %v246 = vld [vmem:[%s0 + $0x758] sm:$0xff]
  %v247 = vld [vmem:[%s0 + $0x760] sm:$0xff]
  %v248 = vld [vmem:[%s0 + $0x768] sm:$0xff]
  %v249 = vld [vmem:[%s0 + $0x770] sm:$0xff]
  %v250 = vld [vmem:[%s0 + $0x778] sm:$0xff]
  %v251 = vld [vmem:[%s0 + $0x780] sm:$0xff]
  %v252 = vld [vmem:[%s0 + $0x788] sm:$0xff]
  %v253 = vld [vmem:[%s0 + $0x790] sm:$0xff]
  %v254 = vld [vmem:[%s0 + $0x798] sm:$0xff]
  %v255 = vld [vmem:[%s0 + $0x7a0] sm:$0xff]
  %v256 = vld [vmem:[%s0 + $0x7a8] sm:$0xff]
  %v257 = vld [vmem:[%s0 + $0x7b0] sm:$0xff]
  %v258 = vld [vmem:[%s0 + $0x7b8] sm:$0xff]
  %v259 = vld [vmem:[%s0 + $0x7c0] sm:$0xff]
  %v260 = vld [vmem:[%s0 + $0x7c8] sm:$0xff]
  %v261 = vld [vmem:[%s1] sm:$0xff]
  %v262 = vld [vmem:[%s1 + $0x8] sm:$0xff]
  %v263 = vld [vmem:[%s1 + $0x10] sm:$0xff]
  %v264 = vld [vmem:[%s1 + $0x18] sm:$0xff]
  %v265 = vld [vmem:[%s1 + $0x20] sm:$0xff]
  %v266 = vld [vmem:[%s1 + $0x28] sm:$0xff]
  %v267 = vld [vmem:[%s1 + $0x30] sm:$0xff]
  %v268 = vld [vmem:[%s1 + $0x38] sm:$0xff]
  %v269 = vld [vmem:[%s1 + $0x40] sm:$0xff]
  %v270 = vld [vmem:[%s1 + $0x48] sm:$0xff]
  %v271 = vld [vmem:[%s1 + $0x50] sm:$0xff]
  %v272 = vld [vmem:[%s1 + $0x58] sm:$0xff]
  %v273 = vld [vmem:[%s1 + $0x60] sm:$0xff]
  %v274 = vld [vmem:[%s1 + $0x68] sm:$0xff]
  %v275 = vld [vmem:[%s1 + $0x70] sm:$0xff]
  %v276 = vld [vmem:[%s1 + $0x78] sm:$0xff]
  %v277 = vld [vmem:[%s1 + $0x80] sm:$0xff]
  %v278 = vld [vmem:[%s1 + $0x88] sm:$0xff]
  %v279 = vld [vmem:[%s1 + $0x90] sm:$0xff]
  %v280 = vld [vmem:[%s1 + $0x98] sm:$0xff]
  %v281 = vld [vmem:[%s1 + $0xa0] sm:$0xff]
  %v282 = vld [vmem:[%s1 + $0xa8] sm:$0xff]
  %v283 = vld [vmem:[%s1 + $0xb0] sm:$0xff]
  %v284 = vld [vmem:[%s1 + $0xb8] sm:$0xff]
  %v285 = vld [vmem:[%s1 + $0xc0] sm:$0xff]
  %v286 = vld [vmem:[%s1 + $0xc8] sm:$0xff]
  %v287 = vld [vmem:[%s1 + $0xd0] sm:$0xff]
  %v288 = vld [vmem:[%s1 + $0xd8] sm:$0xff]
  %v289 = vld [vmem:[%s1 + $0xe0] sm:$0xff]
  %v290 = vld [vmem:[%s1 + $0xe8] sm:$0xff]
  %v291 = vld [vmem:[%s1 + $0xf0] sm:$0xff]
  %v292 = vld [vmem:[%s1 + $0xf8] sm:$0xff]
  %293 = vmatpush.msra.mxu0 %v276
  %294 = vmatpush.msra.mxu0 %v275
  %295 = vmatpush.msra.mxu0 %v274
  %296 = vmatpush.msra.mxu0 %v273
  %297 = vmatpush.msra.mxu0 %v272
  %298 = vmatpush.msra.mxu0 %v271
  %299 = vmatpush.msra.mxu0 %v270
  %300 = vmatpush.msra.mxu0 %v269
  %301 = vmatpush.msra.mxu0 %v268
  %302 = vmatpush.msra.mxu0 %v267
  %303 = vmatpush.msra.mxu0 %v266
  %304 = vmatpush.msra.mxu0 %v265
  %305 = vmatpush.msra.mxu0 %v264
  %306 = vmatpush.msra.mxu0 %v263
  %307 = vmatpush.msra.mxu0 %v262
  %308 = vmatpush.msra.mxu0 %v261
  %309 = vmatmul.f32.gmra.mxu0 %v11
  %v310 = vpop.f32.mrf.mxu0
  %v311 = vadd.f32 0.0, %v310
  %312 = vmatmul.f32.gmra.mxu0 %v13
  %v313 = vpop.f32.mrf.mxu0
  %v314 = vadd.f32 0.0, %v313
  %315 = vmatmul.f32.gmra.mxu0 %v15
  %v316 = vpop.f32.mrf.mxu0
  %v317 = vadd.f32 0.0, %v316
  %318 = vmatmul.f32.gmra.mxu0 %v17
  %v319 = vpop.f32.mrf.mxu0
  %v320 = vadd.f32 0.0, %v319
  %321 = vmatmul.f32.gmra.mxu0 %v19
  %v322 = vpop.f32.mrf.mxu0
  %v323 = vadd.f32 0.0, %v322
  %324 = vmatmul.f32.gmra.mxu0 %v21
  %v325 = vpop.f32.mrf.mxu0
  %v326 = vadd.f32 0.0, %v325
  %327 = vmatmul.f32.gmra.mxu0 %v23
  %v328 = vpop.f32.mrf.mxu0
  %v329 = vadd.f32 0.0, %v328
  %330 = vmatmul.f32.gmra.mxu0 %v25
  %v331 = vpop.f32.mrf.mxu0
  %v332 = vadd.f32 0.0, %v331
  %333 = vmatmul.f32.gmra.mxu0 %v27
  %v334 = vpop.f32.mrf.mxu0
  %v335 = vadd.f32 0.0, %v334
  %336 = vmatmul.f32.gmra.mxu0 %v29
  %v337 = vpop.f32.mrf.mxu0
  %v338 = vadd.f32 0.0, %v337
  %339 = vmatmul.f32.gmra.mxu0 %v31
  %v340 = vpop.f32.mrf.mxu0
  %v341 = vadd.f32 0.0, %v340
  %342 = vmatmul.f32.gmra.mxu0 %v33
  %v343 = vpop.f32.mrf.mxu0
  %v344 = vadd.f32 0.0, %v343
  %345 = vmatmul.f32.gmra.mxu0 %v35
  %v346 = vpop.f32.mrf.mxu0
  %v347 = vadd.f32 0.0, %v346
  %348 = vmatmul.f32.gmra.mxu0 %v37
  %v349 = vpop.f32.mrf.mxu0
  %v350 = vadd.f32 0.0, %v349
  %351 = vmatmul.f32.gmra.mxu0 %v39
  %v352 = vpop.f32.mrf.mxu0
  %v353 = vadd.f32 0.0, %v352
  %354 = vmatmul.f32.gmra.mxu0 %v41
  %v355 = vpop.f32.mrf.mxu0
  %v356 = vadd.f32 0.0, %v355
  %357 = vmatmul.f32.gmra.mxu0 %v43
  %v358 = vpop.f32.mrf.mxu0
  %v359 = vadd.f32 0.0, %v358
  %360 = vmatmul.f32.gmra.mxu0 %v45
  %v361 = vpop.f32.mrf.mxu0
  %v362 = vadd.f32 0.0, %v361
  %363 = vmatmul.f32.gmra.mxu0 %v47
  %v364 = vpop.f32.mrf.mxu0
  %v365 = vadd.f32 0.0, %v364
  %366 = vmatmul.f32.gmra.mxu0 %v49
  %v367 = vpop.f32.mrf.mxu0
  %v368 = vadd.f32 0.0, %v367
  %369 = vmatmul.f32.gmra.mxu0 %v51
  %v370 = vpop.f32.mrf.mxu0
  %v371 = vadd.f32 0.0, %v370
  %372 = vmatmul.f32.gmra.mxu0 %v53
  %v373 = vpop.f32.mrf.mxu0
  %v374 = vadd.f32 0.0, %v373
  %375 = vmatmul.f32.gmra.mxu0 %v55
  %v376 = vpop.f32.mrf.mxu0
  %v377 = vadd.f32 0.0, %v376
  %378 = vmatmul.f32.gmra.mxu0 %v57
  %v379 = vpop.f32.mrf.mxu0
  %v380 = vadd.f32 0.0, %v379
  %381 = vmatmul.f32.gmra.mxu0 %v59
  %v382 = vpop.f32.mrf.mxu0
  %v383 = vadd.f32 0.0, %v382
  %384 = vmatmul.f32.gmra.mxu0 %v61
  %v385 = vpop.f32.mrf.mxu0
  %v386 = vadd.f32 0.0, %v385
  %387 = vmatmul.f32.gmra.mxu0 %v63
  %v388 = vpop.f32.mrf.mxu0
  %v389 = vadd.f32 0.0, %v388
  %390 = vmatmul.f32.gmra.mxu0 %v65
  %v391 = vpop.f32.mrf.mxu0
  %v392 = vadd.f32 0.0, %v391
  %393 = vmatmul.f32.gmra.mxu0 %v67
  %v394 = vpop.f32.mrf.mxu0
  %v395 = vadd.f32 0.0, %v394
  %396 = vmatmul.f32.gmra.mxu0 %v69
  %v397 = vpop.f32.mrf.mxu0
  %v398 = vadd.f32 0.0, %v397
  %399 = vmatmul.f32.gmra.mxu0 %v71
  %v400 = vpop.f32.mrf.mxu0
  %v401 = vadd.f32 0.0, %v400
  %402 = vmatmul.f32.gmra.mxu0 %v73
  %v403 = vpop.f32.mrf.mxu0
  %v404 = vadd.f32 0.0, %v403
  %405 = vmatmul.f32.gmra.mxu0 %v75
  %v406 = vpop.f32.mrf.mxu0
  %v407 = vadd.f32 0.0, %v406
  %408 = vmatmul.f32.gmra.mxu0 %v77
  %v409 = vpop.f32.mrf.mxu0
  %v410 = vadd.f32 0.0, %v409
  %411 = vmatmul.f32.gmra.mxu0 %v79
  %v412 = vpop.f32.mrf.mxu0
  %v413 = vadd.f32 0.0, %v412
  %414 = vmatmul.f32.gmra.mxu0 %v81
  %v415 = vpop.f32.mrf.mxu0
  %v416 = vadd.f32 0.0, %v415
  %417 = vmatmul.f32.gmra.mxu0 %v83
  %v418 = vpop.f32.mrf.mxu0
  %v419 = vadd.f32 0.0, %v418
  %420 = vmatmul.f32.gmra.mxu0 %v85
  %v421 = vpop.f32.mrf.mxu0
  %v422 = vadd.f32 0.0, %v421
  %423 = vmatmul.f32.gmra.mxu0 %v87
  %v424 = vpop.f32.mrf.mxu0
  %v425 = vadd.f32 0.0, %v424
  %426 = vmatmul.f32.gmra.mxu0 %v89
  %v427 = vpop.f32.mrf.mxu0
  %v428 = vadd.f32 0.0, %v427
  %429 = vmatmul.f32.gmra.mxu0 %v91
  %v430 = vpop.f32.mrf.mxu0
  %v431 = vadd.f32 0.0, %v430
  %432 = vmatmul.f32.gmra.mxu0 %v93
  %v433 = vpop.f32.mrf.mxu0
  %v434 = vadd.f32 0.0, %v433
  %435 = vmatmul.f32.gmra.mxu0 %v95
  %v436 = vpop.f32.mrf.mxu0
  %v437 = vadd.f32 0.0, %v436
  %438 = vmatmul.f32.gmra.mxu0 %v97
  %v439 = vpop.f32.mrf.mxu0
  %v440 = vadd.f32 0.0, %v439
  %441 = vmatmul.f32.gmra.mxu0 %v99
  %v442 = vpop.f32.mrf.mxu0
  %v443 = vadd.f32 0.0, %v442
  %444 = vmatmul.f32.gmra.mxu0 %v101
  %v445 = vpop.f32.mrf.mxu0
  %v446 = vadd.f32 0.0, %v445
  %447 = vmatmul.f32.gmra.mxu0 %v103
  %v448 = vpop.f32.mrf.mxu0
  %v449 = vadd.f32 0.0, %v448
  %450 = vmatmul.f32.gmra.mxu0 %v105
  %v451 = vpop.f32.mrf.mxu0
  %v452 = vadd.f32 0.0, %v451
  %453 = vmatmul.f32.gmra.mxu0 %v107
  %v454 = vpop.f32.mrf.mxu0
  %v455 = vadd.f32 0.0, %v454
  %456 = vmatmul.f32.gmra.mxu0 %v109
  %v457 = vpop.f32.mrf.mxu0
  %v458 = vadd.f32 0.0, %v457
  %459 = vmatmul.f32.gmra.mxu0 %v111
  %v460 = vpop.f32.mrf.mxu0
  %v461 = vadd.f32 0.0, %v460
  %462 = vmatmul.f32.gmra.mxu0 %v113
  %v463 = vpop.f32.mrf.mxu0
  %v464 = vadd.f32 0.0, %v463
  %465 = vmatmul.f32.gmra.mxu0 %v115
  %v466 = vpop.f32.mrf.mxu0
  %v467 = vadd.f32 0.0, %v466
  %468 = vmatmul.f32.gmra.mxu0 %v117
  %v469 = vpop.f32.mrf.mxu0
  %v470 = vadd.f32 0.0, %v469
  %471 = vmatmul.f32.gmra.mxu0 %v119
  %v472 = vpop.f32.mrf.mxu0
  %v473 = vadd.f32 0.0, %v472
  %474 = vmatmul.f32.gmra.mxu0 %v121
  %v475 = vpop.f32.mrf.mxu0
  %v476 = vadd.f32 0.0, %v475
  %477 = vmatmul.f32.gmra.mxu0 %v123
  %v478 = vpop.f32.mrf.mxu0
  %v479 = vadd.f32 0.0, %v478
  %480 = vmatmul.f32.gmra.mxu0 %v125
  %v481 = vpop.f32.mrf.mxu0
  %v482 = vadd.f32 0.0, %v481
  %483 = vmatmul.f32.gmra.mxu0 %v127
  %v484 = vpop.f32.mrf.mxu0
  %v485 = vadd.f32 0.0, %v484
  %486 = vmatmul.f32.gmra.mxu0 %v129
  %v487 = vpop.f32.mrf.mxu0
  %v488 = vadd.f32 0.0, %v487
  %489 = vmatmul.f32.gmra.mxu0 %v131
  %v490 = vpop.f32.mrf.mxu0
  %v491 = vadd.f32 0.0, %v490
  %492 = vmatmul.f32.gmra.mxu0 %v133
  %v493 = vpop.f32.mrf.mxu0
  %v494 = vadd.f32 0.0, %v493
  %495 = vmatmul.f32.gmra.mxu0 %v135
  %v496 = vpop.f32.mrf.mxu0
  %v497 = vadd.f32 0.0, %v496
  %498 = vmatmul.f32.gmra.mxu0 %v137
  %v499 = vpop.f32.mrf.mxu0
  %v500 = vadd.f32 0.0, %v499
  %501 = vmatmul.f32.gmra.mxu0 %v139
  %v502 = vpop.f32.mrf.mxu0
  %v503 = vadd.f32 0.0, %v502
  %504 = vmatmul.f32.gmra.mxu0 %v141
  %v505 = vpop.f32.mrf.mxu0
  %v506 = vadd.f32 0.0, %v505
  %507 = vmatmul.f32.gmra.mxu0 %v143
  %v508 = vpop.f32.mrf.mxu0
  %v509 = vadd.f32 0.0, %v508
  %510 = vmatmul.f32.gmra.mxu0 %v145
  %v511 = vpop.f32.mrf.mxu0
  %v512 = vadd.f32 0.0, %v511
  %513 = vmatmul.f32.gmra.mxu0 %v147
  %v514 = vpop.f32.mrf.mxu0
  %v515 = vadd.f32 0.0, %v514
  %516 = vmatmul.f32.gmra.mxu0 %v149
  %v517 = vpop.f32.mrf.mxu0
  %v518 = vadd.f32 0.0, %v517
  %519 = vmatmul.f32.gmra.mxu0 %v151
  %v520 = vpop.f32.mrf.mxu0
  %v521 = vadd.f32 0.0, %v520
  %522 = vmatmul.f32.gmra.mxu0 %v153
  %v523 = vpop.f32.mrf.mxu0
  %v524 = vadd.f32 0.0, %v523
  %525 = vmatmul.f32.gmra.mxu0 %v155
  %v526 = vpop.f32.mrf.mxu0
  %v527 = vadd.f32 0.0, %v526
  %528 = vmatmul.f32.gmra.mxu0 %v157
  %v529 = vpop.f32.mrf.mxu0
  %v530 = vadd.f32 0.0, %v529
  %531 = vmatmul.f32.gmra.mxu0 %v159
  %v532 = vpop.f32.mrf.mxu0
  %v533 = vadd.f32 0.0, %v532
  %534 = vmatmul.f32.gmra.mxu0 %v161
  %v535 = vpop.f32.mrf.mxu0
  %v536 = vadd.f32 0.0, %v535
  %537 = vmatmul.f32.gmra.mxu0 %v163
  %v538 = vpop.f32.mrf.mxu0
  %v539 = vadd.f32 0.0, %v538
  %540 = vmatmul.f32.gmra.mxu0 %v165
  %v541 = vpop.f32.mrf.mxu0
  %v542 = vadd.f32 0.0, %v541
  %543 = vmatmul.f32.gmra.mxu0 %v167
  %v544 = vpop.f32.mrf.mxu0
  %v545 = vadd.f32 0.0, %v544
  %546 = vmatmul.f32.gmra.mxu0 %v169
  %v547 = vpop.f32.mrf.mxu0
  %v548 = vadd.f32 0.0, %v547
  %549 = vmatmul.f32.gmra.mxu0 %v171
  %v550 = vpop.f32.mrf.mxu0
  %v551 = vadd.f32 0.0, %v550
  %552 = vmatmul.f32.gmra.mxu0 %v173
  %v553 = vpop.f32.mrf.mxu0
  %v554 = vadd.f32 0.0, %v553
  %555 = vmatmul.f32.gmra.mxu0 %v175
  %v556 = vpop.f32.mrf.mxu0
  %v557 = vadd.f32 0.0, %v556
  %558 = vmatmul.f32.gmra.mxu0 %v177
  %v559 = vpop.f32.mrf.mxu0
  %v560 = vadd.f32 0.0, %v559
  %561 = vmatmul.f32.gmra.mxu0 %v179
  %v562 = vpop.f32.mrf.mxu0
  %v563 = vadd.f32 0.0, %v562
  %564 = vmatmul.f32.gmra.mxu0 %v181
  %v565 = vpop.f32.mrf.mxu0
  %v566 = vadd.f32 0.0, %v565
  %567 = vmatmul.f32.gmra.mxu0 %v183
  %v568 = vpop.f32.mrf.mxu0
  %v569 = vadd.f32 0.0, %v568
  %570 = vmatmul.f32.gmra.mxu0 %v185
  %v571 = vpop.f32.mrf.mxu0
  %v572 = vadd.f32 0.0, %v571
  %573 = vmatmul.f32.gmra.mxu0 %v187
  %v574 = vpop.f32.mrf.mxu0
  %v575 = vadd.f32 0.0, %v574
  %576 = vmatmul.f32.gmra.mxu0 %v189
  %v577 = vpop.f32.mrf.mxu0
  %v578 = vadd.f32 0.0, %v577
  %579 = vmatmul.f32.gmra.mxu0 %v191
  %v580 = vpop.f32.mrf.mxu0
  %v581 = vadd.f32 0.0, %v580
  %582 = vmatmul.f32.gmra.mxu0 %v193
  %v583 = vpop.f32.mrf.mxu0
  %v584 = vadd.f32 0.0, %v583
  %585 = vmatmul.f32.gmra.mxu0 %v195
  %v586 = vpop.f32.mrf.mxu0
  %v587 = vadd.f32 0.0, %v586
  %588 = vmatmul.f32.gmra.mxu0 %v197
  %v589 = vpop.f32.mrf.mxu0
  %v590 = vadd.f32 0.0, %v589
  %591 = vmatmul.f32.gmra.mxu0 %v199
  %v592 = vpop.f32.mrf.mxu0
  %v593 = vadd.f32 0.0, %v592
  %594 = vmatmul.f32.gmra.mxu0 %v201
  %v595 = vpop.f32.mrf.mxu0
  %v596 = vadd.f32 0.0, %v595
  %597 = vmatmul.f32.gmra.mxu0 %v203
  %v598 = vpop.f32.mrf.mxu0
  %v599 = vadd.f32 0.0, %v598
  %600 = vmatmul.f32.gmra.mxu0 %v205
  %v601 = vpop.f32.mrf.mxu0
  %v602 = vadd.f32 0.0, %v601
  %603 = vmatmul.f32.gmra.mxu0 %v207
  %v604 = vpop.f32.mrf.mxu0
  %v605 = vadd.f32 0.0, %v604
  %606 = vmatmul.f32.gmra.mxu0 %v209
  %v607 = vpop.f32.mrf.mxu0
  %v608 = vadd.f32 0.0, %v607
  %609 = vmatmul.f32.gmra.mxu0 %v211
  %v610 = vpop.f32.mrf.mxu0
  %v611 = vadd.f32 0.0, %v610
  %612 = vmatmul.f32.gmra.mxu0 %v213
  %v613 = vpop.f32.mrf.mxu0
  %v614 = vadd.f32 0.0, %v613
  %615 = vmatmul.f32.gmra.mxu0 %v215
  %v616 = vpop.f32.mrf.mxu0
  %v617 = vadd.f32 0.0, %v616
  %618 = vmatmul.f32.gmra.mxu0 %v217
  %v619 = vpop.f32.mrf.mxu0
  %v620 = vadd.f32 0.0, %v619
  %621 = vmatmul.f32.gmra.mxu0 %v219
  %v622 = vpop.f32.mrf.mxu0
  %v623 = vadd.f32 0.0, %v622
  %624 = vmatmul.f32.gmra.mxu0 %v221
  %v625 = vpop.f32.mrf.mxu0
  %v626 = vadd.f32 0.0, %v625
  %627 = vmatmul.f32.gmra.mxu0 %v223
  %v628 = vpop.f32.mrf.mxu0
  %v629 = vadd.f32 0.0, %v628
  %630 = vmatmul.f32.gmra.mxu0 %v225
  %v631 = vpop.f32.mrf.mxu0
  %v632 = vadd.f32 0.0, %v631
  %633 = vmatmul.f32.gmra.mxu0 %v227
  %v634 = vpop.f32.mrf.mxu0
  %v635 = vadd.f32 0.0, %v634
  %636 = vmatmul.f32.gmra.mxu0 %v229
  %v637 = vpop.f32.mrf.mxu0
  %v638 = vadd.f32 0.0, %v637
  %639 = vmatmul.f32.gmra.mxu0 %v231
  %v640 = vpop.f32.mrf.mxu0
  %v641 = vadd.f32 0.0, %v640
  %642 = vmatmul.f32.gmra.mxu0 %v233
  %v643 = vpop.f32.mrf.mxu0
  %v644 = vadd.f32 0.0, %v643
  %645 = vmatmul.f32.gmra.mxu0 %v235
  %v646 = vpop.f32.mrf.mxu0
  %v647 = vadd.f32 0.0, %v646
  %648 = vmatmul.f32.gmra.mxu0 %v237
  %v649 = vpop.f32.mrf.mxu0
  %v650 = vadd.f32 0.0, %v649
  %651 = vmatmul.f32.gmra.mxu0 %v239
  %v652 = vpop.f32.mrf.mxu0
  %v653 = vadd.f32 0.0, %v652
  %654 = vmatmul.f32.gmra.mxu0 %v241
  %v655 = vpop.f32.mrf.mxu0
  %v656 = vadd.f32 0.0, %v655
  %657 = vmatmul.f32.gmra.mxu0 %v243
  %v658 = vpop.f32.mrf.mxu0
  %v659 = vadd.f32 0.0, %v658
  %660 = vmatmul.f32.gmra.mxu0 %v245
  %v661 = vpop.f32.mrf.mxu0
  %v662 = vadd.f32 0.0, %v661
  %663 = vmatmul.f32.gmra.mxu0 %v247
  %v664 = vpop.f32.mrf.mxu0
  %v665 = vadd.f32 0.0, %v664
  %666 = vmatmul.f32.gmra.mxu0 %v249
  %v667 = vpop.f32.mrf.mxu0
  %v668 = vadd.f32 0.0, %v667
  %669 = vmatmul.f32.gmra.mxu0 %v251
  %v670 = vpop.f32.mrf.mxu0
  %v671 = vadd.f32 0.0, %v670
  %672 = vmatmul.f32.gmra.mxu0 %v253
  %v673 = vpop.f32.mrf.mxu0
  %v674 = vadd.f32 0.0, %v673
  %675 = vmatmul.f32.gmra.mxu0 %v255
  %v676 = vpop.f32.mrf.mxu0
  %v677 = vadd.f32 0.0, %v676
  %678 = vmatmul.f32.gmra.mxu0 %v257
  %v679 = vpop.f32.mrf.mxu0
  %v680 = vadd.f32 0.0, %v679
  %681 = vmatmul.f32.gmra.mxu0 %v259
  %v682 = vpop.f32.mrf.mxu0
  %v683 = vadd.f32 0.0, %v682
  %684 = vdwg.mxu0
  %685 = vmatpush.msra.mxu0 %v292
  %686 = vmatpush.msra.mxu0 %v291
  %687 = vmatpush.msra.mxu0 %v290
  %688 = vmatpush.msra.mxu0 %v289
  %689 = vmatpush.msra.mxu0 %v288
  %690 = vmatpush.msra.mxu0 %v287
  %691 = vmatpush.msra.mxu0 %v286
  %692 = vmatpush.msra.mxu0 %v285
  %693 = vmatpush.msra.mxu0 %v284
  %694 = vmatpush.msra.mxu0 %v283
  %695 = vmatpush.msra.mxu0 %v282
  %696 = vmatpush.msra.mxu0 %v281
  %697 = vmatpush.msra.mxu0 %v280
  %698 = vmatpush.msra.mxu0 %v279
  %699 = vmatpush.msra.mxu0 %v278
  %700 = vmatpush.msra.mxu0 %v277
  %701 = vmatmul.f32.gmra.mxu0 %v12
  %v702 = vpop.f32.mrf.mxu0
  %v703 = vadd.f32 %v311, %v702
  %704 = vmatmul.f32.gmra.mxu0 %v14
  %v705 = vpop.f32.mrf.mxu0
  %v706 = vadd.f32 %v314, %v705
  %707 = vmatmul.f32.gmra.mxu0 %v16
  %v708 = vpop.f32.mrf.mxu0
  %v709 = vadd.f32 %v317, %v708
  %710 = vmatmul.f32.gmra.mxu0 %v18
  %v711 = vpop.f32.mrf.mxu0
  %v712 = vadd.f32 %v320, %v711
  %713 = vmatmul.f32.gmra.mxu0 %v20
  %v714 = vpop.f32.mrf.mxu0
  %v715 = vadd.f32 %v323, %v714
  %716 = vmatmul.f32.gmra.mxu0 %v22
  %v717 = vpop.f32.mrf.mxu0
  %v718 = vadd.f32 %v326, %v717
  %719 = vmatmul.f32.gmra.mxu0 %v24
  %v720 = vpop.f32.mrf.mxu0
  %v721 = vadd.f32 %v329, %v720
  %722 = vmatmul.f32.gmra.mxu0 %v26
  %v723 = vpop.f32.mrf.mxu0
  %v724 = vadd.f32 %v332, %v723
  %725 = vmatmul.f32.gmra.mxu0 %v28
  %v726 = vpop.f32.mrf.mxu0
  %v727 = vadd.f32 %v335, %v726
  %728 = vmatmul.f32.gmra.mxu0 %v30
  %v729 = vpop.f32.mrf.mxu0
  %v730 = vadd.f32 %v338, %v729
  %731 = vmatmul.f32.gmra.mxu0 %v32
  %v732 = vpop.f32.mrf.mxu0
  %v733 = vadd.f32 %v341, %v732
  %734 = vmatmul.f32.gmra.mxu0 %v34
  %v735 = vpop.f32.mrf.mxu0
  %v736 = vadd.f32 %v344, %v735
  %737 = vmatmul.f32.gmra.mxu0 %v36
  %v738 = vpop.f32.mrf.mxu0
  %v739 = vadd.f32 %v347, %v738
  %740 = vmatmul.f32.gmra.mxu0 %v38
  %v741 = vpop.f32.mrf.mxu0
  %v742 = vadd.f32 %v350, %v741
  %743 = vmatmul.f32.gmra.mxu0 %v40
  %v744 = vpop.f32.mrf.mxu0
  %v745 = vadd.f32 %v353, %v744
  %746 = vmatmul.f32.gmra.mxu0 %v42
  %v747 = vpop.f32.mrf.mxu0
  %v748 = vadd.f32 %v356, %v747
  %749 = vmatmul.f32.gmra.mxu0 %v44
  %v750 = vpop.f32.mrf.mxu0
  %v751 = vadd.f32 %v359, %v750
  %752 = vmatmul.f32.gmra.mxu0 %v46
  %v753 = vpop.f32.mrf.mxu0
  %v754 = vadd.f32 %v362, %v753
  %755 = vmatmul.f32.gmra.mxu0 %v48
  %v756 = vpop.f32.mrf.mxu0
  %v757 = vadd.f32 %v365, %v756
  %758 = vmatmul.f32.gmra.mxu0 %v50
  %v759 = vpop.f32.mrf.mxu0
  %v760 = vadd.f32 %v368, %v759
  %761 = vmatmul.f32.gmra.mxu0 %v52
  %v762 = vpop.f32.mrf.mxu0
  %v763 = vadd.f32 %v371, %v762
  %764 = vmatmul.f32.gmra.mxu0 %v54
  %v765 = vpop.f32.mrf.mxu0
  %v766 = vadd.f32 %v374, %v765
  %767 = vmatmul.f32.gmra.mxu0 %v56
  %v768 = vpop.f32.mrf.mxu0
  %v769 = vadd.f32 %v377, %v768
  %770 = vmatmul.f32.gmra.mxu0 %v58
  %v771 = vpop.f32.mrf.mxu0
  %v772 = vadd.f32 %v380, %v771
  %773 = vmatmul.f32.gmra.mxu0 %v60
  %v774 = vpop.f32.mrf.mxu0
  %v775 = vadd.f32 %v383, %v774
  %776 = vmatmul.f32.gmra.mxu0 %v62
  %v777 = vpop.f32.mrf.mxu0
  %v778 = vadd.f32 %v386, %v777
  %779 = vmatmul.f32.gmra.mxu0 %v64
  %v780 = vpop.f32.mrf.mxu0
  %v781 = vadd.f32 %v389, %v780
  %782 = vmatmul.f32.gmra.mxu0 %v66
  %v783 = vpop.f32.mrf.mxu0
  %v784 = vadd.f32 %v392, %v783
  %785 = vmatmul.f32.gmra.mxu0 %v68
  %v786 = vpop.f32.mrf.mxu0
  %v787 = vadd.f32 %v395, %v786
  %788 = vmatmul.f32.gmra.mxu0 %v70
  %v789 = vpop.f32.mrf.mxu0
  %v790 = vadd.f32 %v398, %v789
  %791 = vmatmul.f32.gmra.mxu0 %v72
  %v792 = vpop.f32.mrf.mxu0
  %v793 = vadd.f32 %v401, %v792
  %794 = vmatmul.f32.gmra.mxu0 %v74
  %v795 = vpop.f32.mrf.mxu0
  %v796 = vadd.f32 %v404, %v795
  %797 = vmatmul.f32.gmra.mxu0 %v76
  %v798 = vpop.f32.mrf.mxu0
  %v799 = vadd.f32 %v407, %v798
  %800 = vmatmul.f32.gmra.mxu0 %v78
  %v801 = vpop.f32.mrf.mxu0
  %v802 = vadd.f32 %v410, %v801
  %803 = vmatmul.f32.gmra.mxu0 %v80
  %v804 = vpop.f32.mrf.mxu0
  %v805 = vadd.f32 %v413, %v804
  %806 = vmatmul.f32.gmra.mxu0 %v82
  %v807 = vpop.f32.mrf.mxu0
  %v808 = vadd.f32 %v416, %v807
  %809 = vmatmul.f32.gmra.mxu0 %v84
  %v810 = vpop.f32.mrf.mxu0
  %v811 = vadd.f32 %v419, %v810
  %812 = vmatmul.f32.gmra.mxu0 %v86
  %v813 = vpop.f32.mrf.mxu0
  %v814 = vadd.f32 %v422, %v813
  %815 = vmatmul.f32.gmra.mxu0 %v88
  %v816 = vpop.f32.mrf.mxu0
  %v817 = vadd.f32 %v425, %v816
  %818 = vmatmul.f32.gmra.mxu0 %v90
  %v819 = vpop.f32.mrf.mxu0
  %v820 = vadd.f32 %v428, %v819
  %821 = vmatmul.f32.gmra.mxu0 %v92
  %v822 = vpop.f32.mrf.mxu0
  %v823 = vadd.f32 %v431, %v822
  %824 = vmatmul.f32.gmra.mxu0 %v94
  %v825 = vpop.f32.mrf.mxu0
  %v826 = vadd.f32 %v434, %v825
  %827 = vmatmul.f32.gmra.mxu0 %v96
  %v828 = vpop.f32.mrf.mxu0
  %v829 = vadd.f32 %v437, %v828
  %830 = vmatmul.f32.gmra.mxu0 %v98
  %v831 = vpop.f32.mrf.mxu0
  %v832 = vadd.f32 %v440, %v831
  %833 = vmatmul.f32.gmra.mxu0 %v100
  %v834 = vpop.f32.mrf.mxu0
  %v835 = vadd.f32 %v443, %v834
  %836 = vmatmul.f32.gmra.mxu0 %v102
  %v837 = vpop.f32.mrf.mxu0
  %v838 = vadd.f32 %v446, %v837
  %839 = vmatmul.f32.gmra.mxu0 %v104
  %v840 = vpop.f32.mrf.mxu0
  %v841 = vadd.f32 %v449, %v840
  %842 = vmatmul.f32.gmra.mxu0 %v106
  %v843 = vpop.f32.mrf.mxu0
  %v844 = vadd.f32 %v452, %v843
  %845 = vmatmul.f32.gmra.mxu0 %v108
  %v846 = vpop.f32.mrf.mxu0
  %v847 = vadd.f32 %v455, %v846
  %848 = vmatmul.f32.gmra.mxu0 %v110
  %v849 = vpop.f32.mrf.mxu0
  %v850 = vadd.f32 %v458, %v849
  %851 = vmatmul.f32.gmra.mxu0 %v112
  %v852 = vpop.f32.mrf.mxu0
  %v853 = vadd.f32 %v461, %v852
  %854 = vmatmul.f32.gmra.mxu0 %v114
  %v855 = vpop.f32.mrf.mxu0
  %v856 = vadd.f32 %v464, %v855
  %857 = vmatmul.f32.gmra.mxu0 %v116
  %v858 = vpop.f32.mrf.mxu0
  %v859 = vadd.f32 %v467, %v858
  %860 = vmatmul.f32.gmra.mxu0 %v118
  %v861 = vpop.f32.mrf.mxu0
  %v862 = vadd.f32 %v470, %v861
  %863 = vmatmul.f32.gmra.mxu0 %v120
  %v864 = vpop.f32.mrf.mxu0
  %v865 = vadd.f32 %v473, %v864
  %866 = vmatmul.f32.gmra.mxu0 %v122
  %v867 = vpop.f32.mrf.mxu0
  %v868 = vadd.f32 %v476, %v867
  %869 = vmatmul.f32.gmra.mxu0 %v124
  %v870 = vpop.f32.mrf.mxu0
  %v871 = vadd.f32 %v479, %v870
  %872 = vmatmul.f32.gmra.mxu0 %v126
  %v873 = vpop.f32.mrf.mxu0
  %v874 = vadd.f32 %v482, %v873
  %875 = vmatmul.f32.gmra.mxu0 %v128
  %v876 = vpop.f32.mrf.mxu0
  %v877 = vadd.f32 %v485, %v876
  %878 = vmatmul.f32.gmra.mxu0 %v130
  %v879 = vpop.f32.mrf.mxu0
  %v880 = vadd.f32 %v488, %v879
  %881 = vmatmul.f32.gmra.mxu0 %v132
  %v882 = vpop.f32.mrf.mxu0
  %v883 = vadd.f32 %v491, %v882
  %884 = vmatmul.f32.gmra.mxu0 %v134
  %v885 = vpop.f32.mrf.mxu0
  %v886 = vadd.f32 %v494, %v885
  %887 = vmatmul.f32.gmra.mxu0 %v136
  %v888 = vpop.f32.mrf.mxu0
  %v889 = vadd.f32 %v497, %v888
  %890 = vmatmul.f32.gmra.mxu0 %v138
  %v891 = vpop.f32.mrf.mxu0
  %v892 = vadd.f32 %v500, %v891
  %893 = vmatmul.f32.gmra.mxu0 %v140
  %v894 = vpop.f32.mrf.mxu0
  %v895 = vadd.f32 %v503, %v894
  %896 = vmatmul.f32.gmra.mxu0 %v142
  %v897 = vpop.f32.mrf.mxu0
  %v898 = vadd.f32 %v506, %v897
  %899 = vmatmul.f32.gmra.mxu0 %v144
  %v900 = vpop.f32.mrf.mxu0
  %v901 = vadd.f32 %v509, %v900
  %902 = vmatmul.f32.gmra.mxu0 %v146
  %v903 = vpop.f32.mrf.mxu0
  %v904 = vadd.f32 %v512, %v903
  %905 = vmatmul.f32.gmra.mxu0 %v148
  %v906 = vpop.f32.mrf.mxu0
  %v907 = vadd.f32 %v515, %v906
  %908 = vmatmul.f32.gmra.mxu0 %v150
  %v909 = vpop.f32.mrf.mxu0
  %v910 = vadd.f32 %v518, %v909
  %911 = vmatmul.f32.gmra.mxu0 %v152
  %v912 = vpop.f32.mrf.mxu0
  %v913 = vadd.f32 %v521, %v912
  %914 = vmatmul.f32.gmra.mxu0 %v154
  %v915 = vpop.f32.mrf.mxu0
  %v916 = vadd.f32 %v524, %v915
  %917 = vmatmul.f32.gmra.mxu0 %v156
  %v918 = vpop.f32.mrf.mxu0
  %v919 = vadd.f32 %v527, %v918
  %920 = vmatmul.f32.gmra.mxu0 %v158
  %v921 = vpop.f32.mrf.mxu0
  %v922 = vadd.f32 %v530, %v921
  %923 = vmatmul.f32.gmra.mxu0 %v160
  %v924 = vpop.f32.mrf.mxu0
  %v925 = vadd.f32 %v533, %v924
  %926 = vmatmul.f32.gmra.mxu0 %v162
  %v927 = vpop.f32.mrf.mxu0
  %v928 = vadd.f32 %v536, %v927
  %929 = vmatmul.f32.gmra.mxu0 %v164
  %v930 = vpop.f32.mrf.mxu0
  %v931 = vadd.f32 %v539, %v930
  %932 = vmatmul.f32.gmra.mxu0 %v166
  %v933 = vpop.f32.mrf.mxu0
  %v934 = vadd.f32 %v542, %v933
  %935 = vmatmul.f32.gmra.mxu0 %v168
  %v936 = vpop.f32.mrf.mxu0
  %v937 = vadd.f32 %v545, %v936
  %938 = vmatmul.f32.gmra.mxu0 %v170
  %v939 = vpop.f32.mrf.mxu0
  %v940 = vadd.f32 %v548, %v939
  %941 = vmatmul.f32.gmra.mxu0 %v172
  %v942 = vpop.f32.mrf.mxu0
  %v943 = vadd.f32 %v551, %v942
  %944 = vmatmul.f32.gmra.mxu0 %v174
  %v945 = vpop.f32.mrf.mxu0
  %v946 = vadd.f32 %v554, %v945
  %947 = vmatmul.f32.gmra.mxu0 %v176
  %v948 = vpop.f32.mrf.mxu0
  %v949 = vadd.f32 %v557, %v948
  %950 = vmatmul.f32.gmra.mxu0 %v178
  %v951 = vpop.f32.mrf.mxu0
  %v952 = vadd.f32 %v560, %v951
  %953 = vmatmul.f32.gmra.mxu0 %v180
  %v954 = vpop.f32.mrf.mxu0
  %v955 = vadd.f32 %v563, %v954
  %956 = vmatmul.f32.gmra.mxu0 %v182
  %v957 = vpop.f32.mrf.mxu0
  %v958 = vadd.f32 %v566, %v957
  %959 = vmatmul.f32.gmra.mxu0 %v184
  %v960 = vpop.f32.mrf.mxu0
  %v961 = vadd.f32 %v569, %v960
  %962 = vmatmul.f32.gmra.mxu0 %v186
  %v963 = vpop.f32.mrf.mxu0
  %v964 = vadd.f32 %v572, %v963
  %965 = vmatmul.f32.gmra.mxu0 %v188
  %v966 = vpop.f32.mrf.mxu0
  %v967 = vadd.f32 %v575, %v966
  %968 = vmatmul.f32.gmra.mxu0 %v190
  %v969 = vpop.f32.mrf.mxu0
  %v970 = vadd.f32 %v578, %v969
  %971 = vmatmul.f32.gmra.mxu0 %v192
  %v972 = vpop.f32.mrf.mxu0
  %v973 = vadd.f32 %v581, %v972
  %974 = vmatmul.f32.gmra.mxu0 %v194
  %v975 = vpop.f32.mrf.mxu0
  %v976 = vadd.f32 %v584, %v975
  %977 = vmatmul.f32.gmra.mxu0 %v196
  %v978 = vpop.f32.mrf.mxu0
  %v979 = vadd.f32 %v587, %v978
  %980 = vmatmul.f32.gmra.mxu0 %v198
  %v981 = vpop.f32.mrf.mxu0
  %v982 = vadd.f32 %v590, %v981
  %983 = vmatmul.f32.gmra.mxu0 %v200
  %v984 = vpop.f32.mrf.mxu0
  %v985 = vadd.f32 %v593, %v984
  %986 = vmatmul.f32.gmra.mxu0 %v202
  %v987 = vpop.f32.mrf.mxu0
  %v988 = vadd.f32 %v596, %v987
  %989 = vmatmul.f32.gmra.mxu0 %v204
  %v990 = vpop.f32.mrf.mxu0
  %v991 = vadd.f32 %v599, %v990
  %992 = vmatmul.f32.gmra.mxu0 %v206
  %v993 = vpop.f32.mrf.mxu0
  %v994 = vadd.f32 %v602, %v993
  %995 = vmatmul.f32.gmra.mxu0 %v208
  %v996 = vpop.f32.mrf.mxu0
  %v997 = vadd.f32 %v605, %v996
  %998 = vmatmul.f32.gmra.mxu0 %v210
  %v999 = vpop.f32.mrf.mxu0
  %v1000 = vadd.f32 %v608, %v999
  %1001 = vmatmul.f32.gmra.mxu0 %v212
  %v1002 = vpop.f32.mrf.mxu0
  %v1003 = vadd.f32 %v611, %v1002
  %1004 = vmatmul.f32.gmra.mxu0 %v214
  %v1005 = vpop.f32.mrf.mxu0
  %v1006 = vadd.f32 %v614, %v1005
  %1007 = vmatmul.f32.gmra.mxu0 %v216
  %v1008 = vpop.f32.mrf.mxu0
  %v1009 = vadd.f32 %v617, %v1008
  %1010 = vmatmul.f32.gmra.mxu0 %v218
  %v1011 = vpop.f32.mrf.mxu0
  %v1012 = vadd.f32 %v620, %v1011
  %1013 = vmatmul.f32.gmra.mxu0 %v220
  %v1014 = vpop.f32.mrf.mxu0
  %v1015 = vadd.f32 %v623, %v1014
  %1016 = vmatmul.f32.gmra.mxu0 %v222
  %v1017 = vpop.f32.mrf.mxu0
  %v1018 = vadd.f32 %v626, %v1017
  %1019 = vmatmul.f32.gmra.mxu0 %v224
  %v1020 = vpop.f32.mrf.mxu0
  %v1021 = vadd.f32 %v629, %v1020
  %1022 = vmatmul.f32.gmra.mxu0 %v226
  %v1023 = vpop.f32.mrf.mxu0
  %v1024 = vadd.f32 %v632, %v1023
  %1025 = vmatmul.f32.gmra.mxu0 %v228
  %v1026 = vpop.f32.mrf.mxu0
  %v1027 = vadd.f32 %v635, %v1026
  %1028 = vmatmul.f32.gmra.mxu0 %v230
  %v1029 = vpop.f32.mrf.mxu0
  %v1030 = vadd.f32 %v638, %v1029
  %1031 = vmatmul.f32.gmra.mxu0 %v232
  %v1032 = vpop.f32.mrf.mxu0
  %v1033 = vadd.f32 %v641, %v1032
  %1034 = vmatmul.f32.gmra.mxu0 %v234
  %v1035 = vpop.f32.mrf.mxu0
  %v1036 = vadd.f32 %v644, %v1035
  %1037 = vmatmul.f32.gmra.mxu0 %v236
  %v1038 = vpop.f32.mrf.mxu0
  %v1039 = vadd.f32 %v647, %v1038
  %1040 = vmatmul.f32.gmra.mxu0 %v238
  %v1041 = vpop.f32.mrf.mxu0
  %v1042 = vadd.f32 %v650, %v1041
  %1043 = vmatmul.f32.gmra.mxu0 %v240
  %v1044 = vpop.f32.mrf.mxu0
  %v1045 = vadd.f32 %v653, %v1044
  %1046 = vmatmul.f32.gmra.mxu0 %v242
  %v1047 = vpop.f32.mrf.mxu0
  %v1048 = vadd.f32 %v656, %v1047
  %1049 = vmatmul.f32.gmra.mxu0 %v244
  %v1050 = vpop.f32.mrf.mxu0
  %v1051 = vadd.f32 %v659, %v1050
  %1052 = vmatmul.f32.gmra.mxu0 %v246
  %v1053 = vpop.f32.mrf.mxu0
  %v1054 = vadd.f32 %v662, %v1053
  %1055 = vmatmul.f32.gmra.mxu0 %v248
  %v1056 = vpop.f32.mrf.mxu0
  %v1057 = vadd.f32 %v665, %v1056
  %1058 = vmatmul.f32.gmra.mxu0 %v250
  %v1059 = vpop.f32.mrf.mxu0
  %v1060 = vadd.f32 %v668, %v1059
  %1061 = vmatmul.f32.gmra.mxu0 %v252
  %v1062 = vpop.f32.mrf.mxu0
  %v1063 = vadd.f32 %v671, %v1062
  %1064 = vmatmul.f32.gmra.mxu0 %v254
  %v1065 = vpop.f32.mrf.mxu0
  %v1066 = vadd.f32 %v674, %v1065
  %1067 = vmatmul.f32.gmra.mxu0 %v256
  %v1068 = vpop.f32.mrf.mxu0
  %v1069 = vadd.f32 %v677, %v1068
  %1070 = vmatmul.f32.gmra.mxu0 %v258
  %v1071 = vpop.f32.mrf.mxu0
  %v1072 = vadd.f32 %v680, %v1071
  %1073 = vmatmul.f32.gmra.mxu0 %v260
  %v1074 = vpop.f32.mrf.mxu0
  %v1075 = vadd.f32 %v683, %v1074
  %1076 = vdwg.mxu0
  %vm1077 = vcmask 523264
  %1078 = vst.msk [vmem:[%s2] sm:$0xff] %vm1077, %v703
  %1079 = vst.msk [vmem:[%s2 + $0x8] sm:$0xff] %vm1077, %v706
  %1080 = vst.msk [vmem:[%s2 + $0x10] sm:$0xff] %vm1077, %v709
  %1081 = vst.msk [vmem:[%s2 + $0x18] sm:$0xff] %vm1077, %v712
  %1082 = vst.msk [vmem:[%s2 + $0x20] sm:$0xff] %vm1077, %v715
  %1083 = vst.msk [vmem:[%s2 + $0x28] sm:$0xff] %vm1077, %v718
  %1084 = vst.msk [vmem:[%s2 + $0x30] sm:$0xff] %vm1077, %v721
  %1085 = vst.msk [vmem:[%s2 + $0x38] sm:$0xff] %vm1077, %v724
  %1086 = vst.msk [vmem:[%s2 + $0x40] sm:$0xff] %vm1077, %v727
  %1087 = vst.msk [vmem:[%s2 + $0x48] sm:$0xff] %vm1077, %v730
  %1088 = vst.msk [vmem:[%s2 + $0x50] sm:$0xff] %vm1077, %v733
  %1089 = vst.msk [vmem:[%s2 + $0x58] sm:$0xff] %vm1077, %v736
  %1090 = vst.msk [vmem:[%s2 + $0x60] sm:$0xff] %vm1077, %v739
  %1091 = vst.msk [vmem:[%s2 + $0x68] sm:$0xff] %vm1077, %v742
  %1092 = vst.msk [vmem:[%s2 + $0x70] sm:$0xff] %vm1077, %v745
  %1093 = vst.msk [vmem:[%s2 + $0x78] sm:$0xff] %vm1077, %v748
  %1094 = vst.msk [vmem:[%s2 + $0x80] sm:$0xff] %vm1077, %v751
  %1095 = vst.msk [vmem:[%s2 + $0x88] sm:$0xff] %vm1077, %v754
  %1096 = vst.msk [vmem:[%s2 + $0x90] sm:$0xff] %vm1077, %v757
  %1097 = vst.msk [vmem:[%s2 + $0x98] sm:$0xff] %vm1077, %v760
  %1098 = vst.msk [vmem:[%s2 + $0xa0] sm:$0xff] %vm1077, %v763
  %1099 = vst.msk [vmem:[%s2 + $0xa8] sm:$0xff] %vm1077, %v766
  %1100 = vst.msk [vmem:[%s2 + $0xb0] sm:$0xff] %vm1077, %v769
  %1101 = vst.msk [vmem:[%s2 + $0xb8] sm:$0xff] %vm1077, %v772
  %1102 = vst.msk [vmem:[%s2 + $0xc0] sm:$0xff] %vm1077, %v775
  %1103 = vst.msk [vmem:[%s2 + $0xc8] sm:$0xff] %vm1077, %v778
  %1104 = vst.msk [vmem:[%s2 + $0xd0] sm:$0xff] %vm1077, %v781
  %1105 = vst.msk [vmem:[%s2 + $0xd8] sm:$0xff] %vm1077, %v784
  %1106 = vst.msk [vmem:[%s2 + $0xe0] sm:$0xff] %vm1077, %v787
  %1107 = vst.msk [vmem:[%s2 + $0xe8] sm:$0xff] %vm1077, %v790
  %1108 = vst.msk [vmem:[%s2 + $0xf0] sm:$0xff] %vm1077, %v793
  %1109 = vst.msk [vmem:[%s2 + $0xf8] sm:$0xff] %vm1077, %v796
  %1110 = vst.msk [vmem:[%s2 + $0x100] sm:$0xff] %vm1077, %v799
  %1111 = vst.msk [vmem:[%s2 + $0x108] sm:$0xff] %vm1077, %v802
  %1112 = vst.msk [vmem:[%s2 + $0x110] sm:$0xff] %vm1077, %v805
  %1113 = vst.msk [vmem:[%s2 + $0x118] sm:$0xff] %vm1077, %v808
  %1114 = vst.msk [vmem:[%s2 + $0x120] sm:$0xff] %vm1077, %v811
  %1115 = vst.msk [vmem:[%s2 + $0x128] sm:$0xff] %vm1077, %v814
  %1116 = vst.msk [vmem:[%s2 + $0x130] sm:$0xff] %vm1077, %v817
  %1117 = vst.msk [vmem:[%s2 + $0x138] sm:$0xff] %vm1077, %v820
  %1118 = vst.msk [vmem:[%s2 + $0x140] sm:$0xff] %vm1077, %v823
  %1119 = vst.msk [vmem:[%s2 + $0x148] sm:$0xff] %vm1077, %v826
  %1120 = vst.msk [vmem:[%s2 + $0x150] sm:$0xff] %vm1077, %v829
  %1121 = vst.msk [vmem:[%s2 + $0x158] sm:$0xff] %vm1077, %v832
  %1122 = vst.msk [vmem:[%s2 + $0x160] sm:$0xff] %vm1077, %v835
  %1123 = vst.msk [vmem:[%s2 + $0x168] sm:$0xff] %vm1077, %v838
  %1124 = vst.msk [vmem:[%s2 + $0x170] sm:$0xff] %vm1077, %v841
  %1125 = vst.msk [vmem:[%s2 + $0x178] sm:$0xff] %vm1077, %v844
  %1126 = vst.msk [vmem:[%s2 + $0x180] sm:$0xff] %vm1077, %v847
  %1127 = vst.msk [vmem:[%s2 + $0x188] sm:$0xff] %vm1077, %v850
  %1128 = vst.msk [vmem:[%s2 + $0x190] sm:$0xff] %vm1077, %v853
  %1129 = vst.msk [vmem:[%s2 + $0x198] sm:$0xff] %vm1077, %v856
  %1130 = vst.msk [vmem:[%s2 + $0x1a0] sm:$0xff] %vm1077, %v859
  %1131 = vst.msk [vmem:[%s2 + $0x1a8] sm:$0xff] %vm1077, %v862
  %1132 = vst.msk [vmem:[%s2 + $0x1b0] sm:$0xff] %vm1077, %v865
  %1133 = vst.msk [vmem:[%s2 + $0x1b8] sm:$0xff] %vm1077, %v868
  %1134 = vst.msk [vmem:[%s2 + $0x1c0] sm:$0xff] %vm1077, %v871
  %1135 = vst.msk [vmem:[%s2 + $0x1c8] sm:$0xff] %vm1077, %v874
  %1136 = vst.msk [vmem:[%s2 + $0x1d0] sm:$0xff] %vm1077, %v877
  %1137 = vst.msk [vmem:[%s2 + $0x1d8] sm:$0xff] %vm1077, %v880
  %1138 = vst.msk [vmem:[%s2 + $0x1e0] sm:$0xff] %vm1077, %v883
  %1139 = vst.msk [vmem:[%s2 + $0x1e8] sm:$0xff] %vm1077, %v886
  %1140 = vst.msk [vmem:[%s2 + $0x1f0] sm:$0xff] %vm1077, %v889
  %1141 = vst.msk [vmem:[%s2 + $0x1f8] sm:$0xff] %vm1077, %v892
  %1142 = vst.msk [vmem:[%s2 + $0x200] sm:$0xff] %vm1077, %v895
  %1143 = vst.msk [vmem:[%s2 + $0x208] sm:$0xff] %vm1077, %v898
  %1144 = vst.msk [vmem:[%s2 + $0x210] sm:$0xff] %vm1077, %v901
  %1145 = vst.msk [vmem:[%s2 + $0x218] sm:$0xff] %vm1077, %v904
  %1146 = vst.msk [vmem:[%s2 + $0x220] sm:$0xff] %vm1077, %v907
  %1147 = vst.msk [vmem:[%s2 + $0x228] sm:$0xff] %vm1077, %v910
  %1148 = vst.msk [vmem:[%s2 + $0x230] sm:$0xff] %vm1077, %v913
  %1149 = vst.msk [vmem:[%s2 + $0x238] sm:$0xff] %vm1077, %v916
  %1150 = vst.msk [vmem:[%s2 + $0x240] sm:$0xff] %vm1077, %v919
  %1151 = vst.msk [vmem:[%s2 + $0x248] sm:$0xff] %vm1077, %v922
  %1152 = vst.msk [vmem:[%s2 + $0x250] sm:$0xff] %vm1077, %v925
  %1153 = vst.msk [vmem:[%s2 + $0x258] sm:$0xff] %vm1077, %v928
  %1154 = vst.msk [vmem:[%s2 + $0x260] sm:$0xff] %vm1077, %v931
  %1155 = vst.msk [vmem:[%s2 + $0x268] sm:$0xff] %vm1077, %v934
  %1156 = vst.msk [vmem:[%s2 + $0x270] sm:$0xff] %vm1077, %v937
  %1157 = vst.msk [vmem:[%s2 + $0x278] sm:$0xff] %vm1077, %v940
  %1158 = vst.msk [vmem:[%s2 + $0x280] sm:$0xff] %vm1077, %v943
  %1159 = vst.msk [vmem:[%s2 + $0x288] sm:$0xff] %vm1077, %v946
  %1160 = vst.msk [vmem:[%s2 + $0x290] sm:$0xff] %vm1077, %v949
  %1161 = vst.msk [vmem:[%s2 + $0x298] sm:$0xff] %vm1077, %v952
  %1162 = vst.msk [vmem:[%s2 + $0x2a0] sm:$0xff] %vm1077, %v955
  %1163 = vst.msk [vmem:[%s2 + $0x2a8] sm:$0xff] %vm1077, %v958
  %1164 = vst.msk [vmem:[%s2 + $0x2b0] sm:$0xff] %vm1077, %v961
  %1165 = vst.msk [vmem:[%s2 + $0x2b8] sm:$0xff] %vm1077, %v964
  %1166 = vst.msk [vmem:[%s2 + $0x2c0] sm:$0xff] %vm1077, %v967
  %1167 = vst.msk [vmem:[%s2 + $0x2c8] sm:$0xff] %vm1077, %v970
  %1168 = vst.msk [vmem:[%s2 + $0x2d0] sm:$0xff] %vm1077, %v973
  %1169 = vst.msk [vmem:[%s2 + $0x2d8] sm:$0xff] %vm1077, %v976
  %1170 = vst.msk [vmem:[%s2 + $0x2e0] sm:$0xff] %vm1077, %v979
  %1171 = vst.msk [vmem:[%s2 + $0x2e8] sm:$0xff] %vm1077, %v982
  %1172 = vst.msk [vmem:[%s2 + $0x2f0] sm:$0xff] %vm1077, %v985
  %1173 = vst.msk [vmem:[%s2 + $0x2f8] sm:$0xff] %vm1077, %v988
  %1174 = vst.msk [vmem:[%s2 + $0x300] sm:$0xff] %vm1077, %v991
  %1175 = vst.msk [vmem:[%s2 + $0x308] sm:$0xff] %vm1077, %v994
  %1176 = vst.msk [vmem:[%s2 + $0x310] sm:$0xff] %vm1077, %v997
  %1177 = vst.msk [vmem:[%s2 + $0x318] sm:$0xff] %vm1077, %v1000
  %1178 = vst.msk [vmem:[%s2 + $0x320] sm:$0xff] %vm1077, %v1003
  %1179 = vst.msk [vmem:[%s2 + $0x328] sm:$0xff] %vm1077, %v1006
  %1180 = vst.msk [vmem:[%s2 + $0x330] sm:$0xff] %vm1077, %v1009
  %1181 = vst.msk [vmem:[%s2 + $0x338] sm:$0xff] %vm1077, %v1012
  %1182 = vst.msk [vmem:[%s2 + $0x340] sm:$0xff] %vm1077, %v1015
  %1183 = vst.msk [vmem:[%s2 + $0x348] sm:$0xff] %vm1077, %v1018
  %1184 = vst.msk [vmem:[%s2 + $0x350] sm:$0xff] %vm1077, %v1021
  %1185 = vst.msk [vmem:[%s2 + $0x358] sm:$0xff] %vm1077, %v1024
  %1186 = vst.msk [vmem:[%s2 + $0x360] sm:$0xff] %vm1077, %v1027
  %1187 = vst.msk [vmem:[%s2 + $0x368] sm:$0xff] %vm1077, %v1030
  %1188 = vst.msk [vmem:[%s2 + $0x370] sm:$0xff] %vm1077, %v1033
  %1189 = vst.msk [vmem:[%s2 + $0x378] sm:$0xff] %vm1077, %v1036
  %1190 = vst.msk [vmem:[%s2 + $0x380] sm:$0xff] %vm1077, %v1039
  %1191 = vst.msk [vmem:[%s2 + $0x388] sm:$0xff] %vm1077, %v1042
  %1192 = vst.msk [vmem:[%s2 + $0x390] sm:$0xff] %vm1077, %v1045
  %1193 = vst.msk [vmem:[%s2 + $0x398] sm:$0xff] %vm1077, %v1048
  %1194 = vst.msk [vmem:[%s2 + $0x3a0] sm:$0xff] %vm1077, %v1051
  %1195 = vst.msk [vmem:[%s2 + $0x3a8] sm:$0xff] %vm1077, %v1054
  %1196 = vst.msk [vmem:[%s2 + $0x3b0] sm:$0xff] %vm1077, %v1057
  %1197 = vst.msk [vmem:[%s2 + $0x3b8] sm:$0xff] %vm1077, %v1060
  %1198 = vst.msk [vmem:[%s2 + $0x3c0] sm:$0xff] %vm1077, %v1063
  %1199 = vst.msk [vmem:[%s2 + $0x3c8] sm:$0xff] %vm1077, %v1066
  %1200 = vst.msk [vmem:[%s2 + $0x3d0] sm:$0xff] %vm1077, %v1069
  %1201 = vst.msk [vmem:[%s2 + $0x3d8] sm:$0xff] %vm1077, %v1072
  %1202 = vst.msk [vmem:[%s2 + $0x3e0] sm:$0xff] %vm1077, %v1075
  // Predicated region
  $region10: #{semantic_attention.3} parent=0 // pred_check
    _
  $region11: #{semantic_attention.3} parent=0 // pred_check_branch
    %1204 = sbr.rel (0) target = $region13
  $region12: #{semantic_attention.3} parent=0 // pred_region
    _
  $region13: #{semantic_attention.3} parent=0 // pred_fallthru
    _
  // Predicated region
  $region14: #{semantic_attention.3} parent=0 // pred_check
    _
  $region15: #{semantic_attention.3} parent=0 // pred_check_branch
    %1206 = sbr.rel (0) target = $region17
  $region16: #{semantic_attention.3} parent=0 // pred_region
    _
  $region17: #{semantic_attention.3} parent=0 // pred_fallthru
    _

// kernel: semantic_attention.2
$region0: #{semantic_attention.2}
  #allocation0 [shape = 'u32[]', space=smem, size = 0x4, offset = 0x4, fixed_abs, tag = 'smem constant byte address 0x4 - core index']
  #allocation1 [shape = 'u32[72,128]{1,0:T(1,128)}', space=vmem, size = 0x9000, scoped, tag = 'internal scratch']
  %s0 = inlined_call_operand.vmem [shape: f32[1000,256], index: 0, kind: input, shape index: {}]
  %s1 = inlined_call_operand.vmem [shape: f32[256,512], index: 1, kind: input, shape index: {}]
  %s2 = inlined_call_operand.vmem [shape: f32[1,512], index: 2, kind: input, shape index: {}]
  %s3 = inlined_call_operand.vmem [shape: f32[8,512], index: 3, kind: output, shape index: {}]
  %s4 = sld [smem:[#allocation0]]
  $region26: #{semantic_attention.2} parent=0
    _
  %s6 = ssub.s32 1, %s4
  %s7 = scalar_select 0, %s6, %s4
  // Predicated region
  $region2: #{semantic_attention.2} parent=0 // pred_check
    _
  $region3: #{semantic_attention.2} parent=0 // pred_check_branch
    %9 = sbr.rel (0) target = $region5
  $region4: #{semantic_attention.2} parent=0 // pred_region
    %s10 = sadd.s32 0, 0
    %p11 = scmp.lt.s32.totalorder %s10, 0
    %s12 = scalar_select %p11, %s10, 0
    %s13 = smul.u32 125, %s12
    %p14 = scmp.lt.s32.totalorder %s13, 124
    %s15 = scalar_select %p14, %s13, 124
    %s16 = smul.addr %s15, 2
    %s17 = smul.addr %s16, 8
    %s18 = scalar_lea.vmem %s0, %s17
    %s19 = sadd.s32 0, 0
    %p20 = scmp.lt.s32.totalorder %s19, 0
    %s21 = scalar_select %p20, %s19, 0
    %s22 = smul.u32 125, %s21
  $region5: #{semantic_attention.2} parent=0 // pred_fallthru
    _
  // Predicated region
  $region6: #{semantic_attention.2} parent=0 // pred_check
    _
  $region7: #{semantic_attention.2} parent=0 // pred_check_branch
    %24 = sbr.rel (0) target = $region9
  $region8: #{semantic_attention.2} parent=0 // pred_region
    _
  $region9: #{semantic_attention.2} parent=0 // pred_fallthru
    _
  // Predicated region
  $region10: #{semantic_attention.2} parent=0 // pred_check
    _
  $region11: #{semantic_attention.2} parent=0 // pred_check_branch
    %26 = sbr.rel (0) target = $region13
  $region12: #{semantic_attention.2} parent=0 // pred_region
    _
  $region13: #{semantic_attention.2} parent=0 // pred_fallthru
    _
  %s27 = sadd.s32 0, 0
  %p28 = scmp.lt.s32.totalorder %s27, 0
  %s29 = scalar_select %p28, %s27, 0
  %s30 = smul.u32 125, %s29
  %p31 = scmp.lt.s32.totalorder %s30, 124
  %s32 = scalar_select %p31, %s30, 124
  %s33 = smul.addr %s32, 2
  %s34 = smul.addr %s33, 8
  %s35 = scalar_lea.vmem %s0, %s34
  %s36 = sadd.s32 0, 0
  %p37 = scmp.lt.s32.totalorder %s36, 0
  %s38 = scalar_select %p37, %s36, 0
  %s39 = smul.u32 125, %s38
  %p40 = scmp.lt.s32.totalorder %s39, 124
  %s41 = scalar_select %p40, %s39, 124
  %s42 = smul.addr %s41, 2
  %s43 = smul.addr %s42, 8
  %s44 = scalar_lea.vmem %s0, %s43
  %s45 = sadd.s32 0, 0
  %p46 = scmp.lt.s32.totalorder %s45, 0
  %s47 = scalar_select %p46, %s45, 0
  %s48 = smul.u32 125, %s47
  %p49 = scmp.eq.s32.totalorder 0, 0
  // Predicated region
  $region14: #{semantic_attention.2} parent=0 // pred_check
    %p50 = pneg %p49
  $region15: #{semantic_attention.2} parent=0 // pred_check_branch
    %52 = sbr.rel (%p50) target = $region17
  $region16: #{semantic_attention.2} parent=0 // pred_region
    %53 = vst [vmem:[%s3] sm:$0xff] 0.0
    %54 = vst [vmem:[%s3 + $0x8] sm:$0xff] 0.0
    %55 = vst [vmem:[%s3 + $0x10] sm:$0xff] 0.0
    %56 = vst [vmem:[%s3 + $0x18] sm:$0xff] 0.0
  $region17: #{semantic_attention.2} parent=0 // pred_fallthru
    _
  %v57 = vld [vmem:[%s44] sm:$0xff]
  %v58 = vld [vmem:[%s44 + $0x8] sm:$0xff]
  %v59 = vld [vmem:[%s44 + $0x10] sm:$0xff]
  %v60 = vld [vmem:[%s44 + $0x18] sm:$0xff]
  %v61 = vld [vmem:[%s44 + $0x20] sm:$0xff]
  %v62 = vld [vmem:[%s44 + $0x28] sm:$0xff]
  %v63 = vld [vmem:[%s44 + $0x30] sm:$0xff]
  %v64 = vld [vmem:[%s44 + $0x38] sm:$0xff]
  %v65 = vld [vmem:[%s44 + $0x40] sm:$0xff]
  %v66 = vld [vmem:[%s44 + $0x48] sm:$0xff]
  %v67 = vld [vmem:[%s44 + $0x50] sm:$0xff]
  %v68 = vld [vmem:[%s44 + $0x58] sm:$0xff]
  %v69 = vld [vmem:[%s44 + $0x60] sm:$0xff]
  %v70 = vld [vmem:[%s44 + $0x68] sm:$0xff]
  %v71 = vld [vmem:[%s44 + $0x70] sm:$0xff]
  %v72 = vld [vmem:[%s44 + $0x78] sm:$0xff]
  %v73 = vld [vmem:[%s44 + $0x80] sm:$0xff]
  %v74 = vld [vmem:[%s44 + $0x88] sm:$0xff]
  %v75 = vld [vmem:[%s44 + $0x90] sm:$0xff]
  %v76 = vld [vmem:[%s44 + $0x98] sm:$0xff]
  %v77 = vld [vmem:[%s44 + $0xa0] sm:$0xff]
  %v78 = vld [vmem:[%s44 + $0xa8] sm:$0xff]
  %v79 = vld [vmem:[%s44 + $0xb0] sm:$0xff]
  %v80 = vld [vmem:[%s44 + $0xb8] sm:$0xff]
  %v81 = vld [vmem:[%s44 + $0xc0] sm:$0xff]
  %v82 = vld [vmem:[%s44 + $0xc8] sm:$0xff]
  %v83 = vld [vmem:[%s44 + $0xd0] sm:$0xff]
  %v84 = vld [vmem:[%s44 + $0xd8] sm:$0xff]
  %v85 = vld [vmem:[%s44 + $0xe0] sm:$0xff]
  %v86 = vld [vmem:[%s44 + $0xe8] sm:$0xff]
  %v87 = vld [vmem:[%s44 + $0xf0] sm:$0xff]
  %v88 = vld [vmem:[%s44 + $0xf8] sm:$0xff]
  %v89 = vld [vmem:[%s44 + $0x100] sm:$0xff]
  %v90 = vld [vmem:[%s44 + $0x108] sm:$0xff]
  %v91 = vld [vmem:[%s44 + $0x110] sm:$0xff]
  %v92 = vld [vmem:[%s44 + $0x118] sm:$0xff]
  %v93 = vld [vmem:[%s44 + $0x120] sm:$0xff]
  %v94 = vld [vmem:[%s44 + $0x128] sm:$0xff]
  %v95 = vld [vmem:[%s44 + $0x130] sm:$0xff]
  %v96 = vld [vmem:[%s44 + $0x138] sm:$0xff]
  %v97 = vld [vmem:[%s44 + $0x140] sm:$0xff]
  %v98 = vld [vmem:[%s44 + $0x148] sm:$0xff]
  %v99 = vld [vmem:[%s44 + $0x150] sm:$0xff]
  %v100 = vld [vmem:[%s44 + $0x158] sm:$0xff]
  %v101 = vld [vmem:[%s44 + $0x160] sm:$0xff]
  %v102 = vld [vmem:[%s44 + $0x168] sm:$0xff]
  %v103 = vld [vmem:[%s44 + $0x170] sm:$0xff]
  %v104 = vld [vmem:[%s44 + $0x178] sm:$0xff]
  %v105 = vld [vmem:[%s44 + $0x180] sm:$0xff]
  %v106 = vld [vmem:[%s44 + $0x188] sm:$0xff]
  %v107 = vld [vmem:[%s44 + $0x190] sm:$0xff]
  %v108 = vld [vmem:[%s44 + $0x198] sm:$0xff]
  %v109 = vld [vmem:[%s44 + $0x1a0] sm:$0xff]
  %v110 = vld [vmem:[%s44 + $0x1a8] sm:$0xff]
  %v111 = vld [vmem:[%s44 + $0x1b0] sm:$0xff]
  %v112 = vld [vmem:[%s44 + $0x1b8] sm:$0xff]
  %v113 = vld [vmem:[%s44 + $0x1c0] sm:$0xff]
  %v114 = vld [vmem:[%s44 + $0x1c8] sm:$0xff]
  %v115 = vld [vmem:[%s44 + $0x1d0] sm:$0xff]
  %v116 = vld [vmem:[%s44 + $0x1d8] sm:$0xff]
  %v117 = vld [vmem:[%s44 + $0x1e0] sm:$0xff]
  %v118 = vld [vmem:[%s44 + $0x1e8] sm:$0xff]
  %v119 = vld [vmem:[%s44 + $0x1f0] sm:$0xff]
  %v120 = vld [vmem:[%s44 + $0x1f8] sm:$0xff]
  %v121 = vld [vmem:[%s44 + $0x200] sm:$0xff]
  %v122 = vld [vmem:[%s44 + $0x208] sm:$0xff]
  %v123 = vld [vmem:[%s44 + $0x210] sm:$0xff]
  %v124 = vld [vmem:[%s44 + $0x218] sm:$0xff]
  %v125 = vld [vmem:[%s44 + $0x220] sm:$0xff]
  %v126 = vld [vmem:[%s44 + $0x228] sm:$0xff]
  %v127 = vld [vmem:[%s44 + $0x230] sm:$0xff]
  %v128 = vld [vmem:[%s44 + $0x238] sm:$0xff]
  %v129 = vld [vmem:[%s44 + $0x240] sm:$0xff]
  %v130 = vld [vmem:[%s44 + $0x248] sm:$0xff]
  %v131 = vld [vmem:[%s44 + $0x250] sm:$0xff]
  %v132 = vld [vmem:[%s44 + $0x258] sm:$0xff]
  %v133 = vld [vmem:[%s44 + $0x260] sm:$0xff]
  %v134 = vld [vmem:[%s44 + $0x268] sm:$0xff]
  %v135 = vld [vmem:[%s44 + $0x270] sm:$0xff]
  %v136 = vld [vmem:[%s44 + $0x278] sm:$0xff]
  %v137 = vld [vmem:[%s44 + $0x280] sm:$0xff]
  %v138 = vld [vmem:[%s44 + $0x288] sm:$0xff]
  %v139 = vld [vmem:[%s44 + $0x290] sm:$0xff]
  %v140 = vld [vmem:[%s44 + $0x298] sm:$0xff]
  %v141 = vld [vmem:[%s44 + $0x2a0] sm:$0xff]
  %v142 = vld [vmem:[%s44 + $0x2a8] sm:$0xff]
  %v143 = vld [vmem:[%s44 + $0x2b0] sm:$0xff]
  %v144 = vld [vmem:[%s44 + $0x2b8] sm:$0xff]
  %v145 = vld [vmem:[%s44 + $0x2c0] sm:$0xff]
  %v146 = vld [vmem:[%s44 + $0x2c8] sm:$0xff]
  %v147 = vld [vmem:[%s44 + $0x2d0] sm:$0xff]
  %v148 = vld [vmem:[%s44 + $0x2d8] sm:$0xff]
  %v149 = vld [vmem:[%s44 + $0x2e0] sm:$0xff]
  %v150 = vld [vmem:[%s44 + $0x2e8] sm:$0xff]
  %v151 = vld [vmem:[%s44 + $0x2f0] sm:$0xff]
  %v152 = vld [vmem:[%s44 + $0x2f8] sm:$0xff]
  %v153 = vld [vmem:[%s44 + $0x300] sm:$0xff]
  %v154 = vld [vmem:[%s44 + $0x308] sm:$0xff]
  %v155 = vld [vmem:[%s44 + $0x310] sm:$0xff]
  %v156 = vld [vmem:[%s44 + $0x318] sm:$0xff]
  %v157 = vld [vmem:[%s44 + $0x320] sm:$0xff]
  %v158 = vld [vmem:[%s44 + $0x328] sm:$0xff]
  %v159 = vld [vmem:[%s44 + $0x330] sm:$0xff]
  %v160 = vld [vmem:[%s44 + $0x338] sm:$0xff]
  %v161 = vld [vmem:[%s44 + $0x340] sm:$0xff]
  %v162 = vld [vmem:[%s44 + $0x348] sm:$0xff]
  %v163 = vld [vmem:[%s44 + $0x350] sm:$0xff]
  %v164 = vld [vmem:[%s44 + $0x358] sm:$0xff]
  %v165 = vld [vmem:[%s44 + $0x360] sm:$0xff]
  %v166 = vld [vmem:[%s44 + $0x368] sm:$0xff]
  %v167 = vld [vmem:[%s44 + $0x370] sm:$0xff]
  %v168 = vld [vmem:[%s44 + $0x378] sm:$0xff]
  %v169 = vld [vmem:[%s44 + $0x380] sm:$0xff]
  %v170 = vld [vmem:[%s44 + $0x388] sm:$0xff]
  %v171 = vld [vmem:[%s44 + $0x390] sm:$0xff]
  %v172 = vld [vmem:[%s44 + $0x398] sm:$0xff]
  %v173 = vld [vmem:[%s44 + $0x3a0] sm:$0xff]
  %v174 = vld [vmem:[%s44 + $0x3a8] sm:$0xff]
  %v175 = vld [vmem:[%s44 + $0x3b0] sm:$0xff]
  %v176 = vld [vmem:[%s44 + $0x3b8] sm:$0xff]
  %v177 = vld [vmem:[%s44 + $0x3c0] sm:$0xff]
  %v178 = vld [vmem:[%s44 + $0x3c8] sm:$0xff]
  %v179 = vld [vmem:[%s44 + $0x3d0] sm:$0xff]
  %v180 = vld [vmem:[%s44 + $0x3d8] sm:$0xff]
  %v181 = vld [vmem:[%s44 + $0x3e0] sm:$0xff]
  %v182 = vld [vmem:[%s44 + $0x3e8] sm:$0xff]
  %v183 = vld [vmem:[%s44 + $0x3f0] sm:$0xff]
  %v184 = vld [vmem:[%s44 + $0x3f8] sm:$0xff]
  %v185 = vld [vmem:[%s44 + $0x400] sm:$0xff]
  %v186 = vld [vmem:[%s44 + $0x408] sm:$0xff]
  %v187 = vld [vmem:[%s44 + $0x410] sm:$0xff]
  %v188 = vld [vmem:[%s44 + $0x418] sm:$0xff]
  %v189 = vld [vmem:[%s44 + $0x420] sm:$0xff]
  %v190 = vld [vmem:[%s44 + $0x428] sm:$0xff]
  %v191 = vld [vmem:[%s44 + $0x430] sm:$0xff]
  %v192 = vld [vmem:[%s44 + $0x438] sm:$0xff]
  %v193 = vld [vmem:[%s44 + $0x440] sm:$0xff]
  %v194 = vld [vmem:[%s44 + $0x448] sm:$0xff]
  %v195 = vld [vmem:[%s44 + $0x450] sm:$0xff]
  %v196 = vld [vmem:[%s44 + $0x458] sm:$0xff]
  %v197 = vld [vmem:[%s44 + $0x460] sm:$0xff]
  %v198 = vld [vmem:[%s44 + $0x468] sm:$0xff]
  %v199 = vld [vmem:[%s44 + $0x470] sm:$0xff]
  %v200 = vld [vmem:[%s44 + $0x478] sm:$0xff]
  %v201 = vld [vmem:[%s44 + $0x480] sm:$0xff]
  %v202 = vld [vmem:[%s44 + $0x488] sm:$0xff]
  %v203 = vld [vmem:[%s44 + $0x490] sm:$0xff]
  %v204 = vld [vmem:[%s44 + $0x498] sm:$0xff]
  %v205 = vld [vmem:[%s44 + $0x4a0] sm:$0xff]
  %v206 = vld [vmem:[%s44 + $0x4a8] sm:$0xff]
  %v207 = vld [vmem:[%s44 + $0x4b0] sm:$0xff]
  %v208 = vld [vmem:[%s44 + $0x4b8] sm:$0xff]
  %v209 = vld [vmem:[%s44 + $0x4c0] sm:$0xff]
  %v210 = vld [vmem:[%s44 + $0x4c8] sm:$0xff]
  %v211 = vld [vmem:[%s44 + $0x4d0] sm:$0xff]
  %v212 = vld [vmem:[%s44 + $0x4d8] sm:$0xff]
  %v213 = vld [vmem:[%s44 + $0x4e0] sm:$0xff]
  %v214 = vld [vmem:[%s44 + $0x4e8] sm:$0xff]
  %v215 = vld [vmem:[%s44 + $0x4f0] sm:$0xff]
  %v216 = vld [vmem:[%s44 + $0x4f8] sm:$0xff]
  %v217 = vld [vmem:[%s44 + $0x500] sm:$0xff]
  %v218 = vld [vmem:[%s44 + $0x508] sm:$0xff]
  %v219 = vld [vmem:[%s44 + $0x510] sm:$0xff]
  %v220 = vld [vmem:[%s44 + $0x518] sm:$0xff]
  %v221 = vld [vmem:[%s44 + $0x520] sm:$0xff]
  %v222 = vld [vmem:[%s44 + $0x528] sm:$0xff]
  %v223 = vld [vmem:[%s44 + $0x530] sm:$0xff]
  %v224 = vld [vmem:[%s44 + $0x538] sm:$0xff]
  %v225 = vld [vmem:[%s44 + $0x540] sm:$0xff]
  %v226 = vld [vmem:[%s44 + $0x548] sm:$0xff]
  %v227 = vld [vmem:[%s44 + $0x550] sm:$0xff]
  %v228 = vld [vmem:[%s44 + $0x558] sm:$0xff]
  %v229 = vld [vmem:[%s44 + $0x560] sm:$0xff]
  %v230 = vld [vmem:[%s44 + $0x568] sm:$0xff]
  %v231 = vld [vmem:[%s44 + $0x570] sm:$0xff]
  %v232 = vld [vmem:[%s44 + $0x578] sm:$0xff]
  %v233 = vld [vmem:[%s44 + $0x580] sm:$0xff]
  %v234 = vld [vmem:[%s44 + $0x588] sm:$0xff]
  %v235 = vld [vmem:[%s44 + $0x590] sm:$0xff]
  %v236 = vld [vmem:[%s44 + $0x598] sm:$0xff]
  %v237 = vld [vmem:[%s44 + $0x5a0] sm:$0xff]
  %v238 = vld [vmem:[%s44 + $0x5a8] sm:$0xff]
  %v239 = vld [vmem:[%s44 + $0x5b0] sm:$0xff]
  %v240 = vld [vmem:[%s44 + $0x5b8] sm:$0xff]
  %v241 = vld [vmem:[%s44 + $0x5c0] sm:$0xff]
  %v242 = vld [vmem:[%s44 + $0x5c8] sm:$0xff]
  %v243 = vld [vmem:[%s44 + $0x5d0] sm:$0xff]
  %v244 = vld [vmem:[%s44 + $0x5d8] sm:$0xff]
  %v245 = vld [vmem:[%s44 + $0x5e0] sm:$0xff]
  %v246 = vld [vmem:[%s44 + $0x5e8] sm:$0xff]
  %v247 = vld [vmem:[%s44 + $0x5f0] sm:$0xff]
  %v248 = vld [vmem:[%s44 + $0x5f8] sm:$0xff]
  %v249 = vld [vmem:[%s44 + $0x600] sm:$0xff]
  %v250 = vld [vmem:[%s44 + $0x608] sm:$0xff]
  %v251 = vld [vmem:[%s44 + $0x610] sm:$0xff]
  %v252 = vld [vmem:[%s44 + $0x618] sm:$0xff]
  %v253 = vld [vmem:[%s44 + $0x620] sm:$0xff]
  %v254 = vld [vmem:[%s44 + $0x628] sm:$0xff]
  %v255 = vld [vmem:[%s44 + $0x630] sm:$0xff]
  %v256 = vld [vmem:[%s44 + $0x638] sm:$0xff]
  %v257 = vld [vmem:[%s44 + $0x640] sm:$0xff]
  %v258 = vld [vmem:[%s44 + $0x648] sm:$0xff]
  %v259 = vld [vmem:[%s44 + $0x650] sm:$0xff]
  %v260 = vld [vmem:[%s44 + $0x658] sm:$0xff]
  %v261 = vld [vmem:[%s44 + $0x660] sm:$0xff]
  %v262 = vld [vmem:[%s44 + $0x668] sm:$0xff]
  %v263 = vld [vmem:[%s44 + $0x670] sm:$0xff]
  %v264 = vld [vmem:[%s44 + $0x678] sm:$0xff]
  %v265 = vld [vmem:[%s44 + $0x680] sm:$0xff]
  %v266 = vld [vmem:[%s44 + $0x688] sm:$0xff]
  %v267 = vld [vmem:[%s44 + $0x690] sm:$0xff]
  %v268 = vld [vmem:[%s44 + $0x698] sm:$0xff]
  %v269 = vld [vmem:[%s44 + $0x6a0] sm:$0xff]
  %v270 = vld [vmem:[%s44 + $0x6a8] sm:$0xff]
  %v271 = vld [vmem:[%s44 + $0x6b0] sm:$0xff]
  %v272 = vld [vmem:[%s44 + $0x6b8] sm:$0xff]
  %v273 = vld [vmem:[%s44 + $0x6c0] sm:$0xff]
  %v274 = vld [vmem:[%s44 + $0x6c8] sm:$0xff]
  %v275 = vld [vmem:[%s44 + $0x6d0] sm:$0xff]
  %v276 = vld [vmem:[%s44 + $0x6d8] sm:$0xff]
  %v277 = vld [vmem:[%s44 + $0x6e0] sm:$0xff]
  %v278 = vld [vmem:[%s44 + $0x6e8] sm:$0xff]
  %v279 = vld [vmem:[%s44 + $0x6f0] sm:$0xff]
  %v280 = vld [vmem:[%s44 + $0x6f8] sm:$0xff]
  %v281 = vld [vmem:[%s44 + $0x700] sm:$0xff]
  %v282 = vld [vmem:[%s44 + $0x708] sm:$0xff]
  %v283 = vld [vmem:[%s44 + $0x710] sm:$0xff]
  %v284 = vld [vmem:[%s44 + $0x718] sm:$0xff]
  %v285 = vld [vmem:[%s44 + $0x720] sm:$0xff]
  %v286 = vld [vmem:[%s44 + $0x728] sm:$0xff]
  %v287 = vld [vmem:[%s44 + $0x730] sm:$0xff]
  %v288 = vld [vmem:[%s44 + $0x738] sm:$0xff]
  %v289 = vld [vmem:[%s44 + $0x740] sm:$0xff]
  %v290 = vld [vmem:[%s44 + $0x748] sm:$0xff]
  %v291 = vld [vmem:[%s44 + $0x750] sm:$0xff]
  %v292 = vld [vmem:[%s44 + $0x758] sm:$0xff]
  %v293 = vld [vmem:[%s44 + $0x760] sm:$0xff]
  %v294 = vld [vmem:[%s44 + $0x768] sm:$0xff]
  %v295 = vld [vmem:[%s44 + $0x770] sm:$0xff]
  %v296 = vld [vmem:[%s44 + $0x778] sm:$0xff]
  %v297 = vld [vmem:[%s44 + $0x780] sm:$0xff]
  %v298 = vld [vmem:[%s44 + $0x788] sm:$0xff]
  %v299 = vld [vmem:[%s44 + $0x790] sm:$0xff]
  %v300 = vld [vmem:[%s44 + $0x798] sm:$0xff]
  %v301 = vld [vmem:[%s44 + $0x7a0] sm:$0xff]
  %v302 = vld [vmem:[%s44 + $0x7a8] sm:$0xff]
  %v303 = vld [vmem:[%s44 + $0x7b0] sm:$0xff]
  %v304 = vld [vmem:[%s44 + $0x7b8] sm:$0xff]
  %v305 = vld [vmem:[%s44 + $0x7c0] sm:$0xff]
  %v306 = vld [vmem:[%s44 + $0x7c8] sm:$0xff]
  %v307 = vld [vmem:[%s1] sm:$0xff]
  %v308 = vld [vmem:[%s1 + $0x8] sm:$0xff]
  %v309 = vld [vmem:[%s1 + $0x10] sm:$0xff]
  %v310 = vld [vmem:[%s1 + $0x18] sm:$0xff]
  %v311 = vld [vmem:[%s1 + $0x20] sm:$0xff]
  %v312 = vld [vmem:[%s1 + $0x28] sm:$0xff]
  %v313 = vld [vmem:[%s1 + $0x30] sm:$0xff]
  %v314 = vld [vmem:[%s1 + $0x38] sm:$0xff]
  %v315 = vld [vmem:[%s1 + $0x40] sm:$0xff]
  %v316 = vld [vmem:[%s1 + $0x48] sm:$0xff]
  %v317 = vld [vmem:[%s1 + $0x50] sm:$0xff]
  %v318 = vld [vmem:[%s1 + $0x58] sm:$0xff]
  %v319 = vld [vmem:[%s1 + $0x60] sm:$0xff]
  %v320 = vld [vmem:[%s1 + $0x68] sm:$0xff]
  %v321 = vld [vmem:[%s1 + $0x70] sm:$0xff]
  %v322 = vld [vmem:[%s1 + $0x78] sm:$0xff]
  %v323 = vld [vmem:[%s1 + $0x80] sm:$0xff]
  %v324 = vld [vmem:[%s1 + $0x88] sm:$0xff]
  %v325 = vld [vmem:[%s1 + $0x90] sm:$0xff]
  %v326 = vld [vmem:[%s1 + $0x98] sm:$0xff]
  %v327 = vld [vmem:[%s1 + $0xa0] sm:$0xff]
  %v328 = vld [vmem:[%s1 + $0xa8] sm:$0xff]
  %v329 = vld [vmem:[%s1 + $0xb0] sm:$0xff]
  %v330 = vld [vmem:[%s1 + $0xb8] sm:$0xff]
  %v331 = vld [vmem:[%s1 + $0xc0] sm:$0xff]
  %v332 = vld [vmem:[%s1 + $0xc8] sm:$0xff]
  %v333 = vld [vmem:[%s1 + $0xd0] sm:$0xff]
  %v334 = vld [vmem:[%s1 + $0xd8] sm:$0xff]
  %v335 = vld [vmem:[%s1 + $0xe0] sm:$0xff]
  %v336 = vld [vmem:[%s1 + $0xe8] sm:$0xff]
  %v337 = vld [vmem:[%s1 + $0xf0] sm:$0xff]
  %v338 = vld [vmem:[%s1 + $0xf8] sm:$0xff]
  %v339 = vld [vmem:[%s1 + $0x100] sm:$0xff]
  %v340 = vld [vmem:[%s1 + $0x108] sm:$0xff]
  %v341 = vld [vmem:[%s1 + $0x110] sm:$0xff]
  %v342 = vld [vmem:[%s1 + $0x118] sm:$0xff]
  %v343 = vld [vmem:[%s1 + $0x120] sm:$0xff]
  %v344 = vld [vmem:[%s1 + $0x128] sm:$0xff]
  %v345 = vld [vmem:[%s1 + $0x130] sm:$0xff]
  %v346 = vld [vmem:[%s1 + $0x138] sm:$0xff]
  %v347 = vld [vmem:[%s1 + $0x140] sm:$0xff]
  %v348 = vld [vmem:[%s1 + $0x148] sm:$0xff]
  %v349 = vld [vmem:[%s1 + $0x150] sm:$0xff]
  %v350 = vld [vmem:[%s1 + $0x158] sm:$0xff]
  %v351 = vld [vmem:[%s1 + $0x160] sm:$0xff]
  %v352 = vld [vmem:[%s1 + $0x168] sm:$0xff]
  %v353 = vld [vmem:[%s1 + $0x170] sm:$0xff]
  %v354 = vld [vmem:[%s1 + $0x178] sm:$0xff]
  %v355 = vld [vmem:[%s1 + $0x180] sm:$0xff]
  %v356 = vld [vmem:[%s1 + $0x188] sm:$0xff]
  %v357 = vld [vmem:[%s1 + $0x190] sm:$0xff]
  %v358 = vld [vmem:[%s1 + $0x198] sm:$0xff]
  %v359 = vld [vmem:[%s1 + $0x1a0] sm:$0xff]
  %v360 = vld [vmem:[%s1 + $0x1a8] sm:$0xff]
  %v361 = vld [vmem:[%s1 + $0x1b0] sm:$0xff]
  %v362 = vld [vmem:[%s1 + $0x1b8] sm:$0xff]
  %v363 = vld [vmem:[%s1 + $0x1c0] sm:$0xff]
  %v364 = vld [vmem:[%s1 + $0x1c8] sm:$0xff]
  %v365 = vld [vmem:[%s1 + $0x1d0] sm:$0xff]
  %v366 = vld [vmem:[%s1 + $0x1d8] sm:$0xff]
  %v367 = vld [vmem:[%s1 + $0x1e0] sm:$0xff]
  %v368 = vld [vmem:[%s1 + $0x1e8] sm:$0xff]
  %v369 = vld [vmem:[%s1 + $0x1f0] sm:$0xff]
  %v370 = vld [vmem:[%s1 + $0x1f8] sm:$0xff]
  %v371 = vld [vmem:[%s1 + $0x200] sm:$0xff]
  %v372 = vld [vmem:[%s1 + $0x208] sm:$0xff]
  %v373 = vld [vmem:[%s1 + $0x210] sm:$0xff]
  %v374 = vld [vmem:[%s1 + $0x218] sm:$0xff]
  %v375 = vld [vmem:[%s1 + $0x220] sm:$0xff]
  %v376 = vld [vmem:[%s1 + $0x228] sm:$0xff]
  %v377 = vld [vmem:[%s1 + $0x230] sm:$0xff]
  %v378 = vld [vmem:[%s1 + $0x238] sm:$0xff]
  %v379 = vld [vmem:[%s1 + $0x240] sm:$0xff]
  %v380 = vld [vmem:[%s1 + $0x248] sm:$0xff]
  %v381 = vld [vmem:[%s1 + $0x250] sm:$0xff]
  %v382 = vld [vmem:[%s1 + $0x258] sm:$0xff]
  %v383 = vld [vmem:[%s1 + $0x260] sm:$0xff]
  %v384 = vld [vmem:[%s1 + $0x268] sm:$0xff]
  %v385 = vld [vmem:[%s1 + $0x270] sm:$0xff]
  %v386 = vld [vmem:[%s1 + $0x278] sm:$0xff]
  %v387 = vld [vmem:[%s1 + $0x280] sm:$0xff]
  %v388 = vld [vmem:[%s1 + $0x288] sm:$0xff]
  %v389 = vld [vmem:[%s1 + $0x290] sm:$0xff]
  %v390 = vld [vmem:[%s1 + $0x298] sm:$0xff]
  %v391 = vld [vmem:[%s1 + $0x2a0] sm:$0xff]
  %v392 = vld [vmem:[%s1 + $0x2a8] sm:$0xff]
  %v393 = vld [vmem:[%s1 + $0x2b0] sm:$0xff]
  %v394 = vld [vmem:[%s1 + $0x2b8] sm:$0xff]
  %v395 = vld [vmem:[%s1 + $0x2c0] sm:$0xff]
  %v396 = vld [vmem:[%s1 + $0x2c8] sm:$0xff]
  %v397 = vld [vmem:[%s1 + $0x2d0] sm:$0xff]
  %v398 = vld [vmem:[%s1 + $0x2d8] sm:$0xff]
  %v399 = vld [vmem:[%s1 + $0x2e0] sm:$0xff]
  %v400 = vld [vmem:[%s1 + $0x2e8] sm:$0xff]
  %v401 = vld [vmem:[%s1 + $0x2f0] sm:$0xff]
  %v402 = vld [vmem:[%s1 + $0x2f8] sm:$0xff]
  %v403 = vld [vmem:[%s1 + $0x300] sm:$0xff]
  %v404 = vld [vmem:[%s1 + $0x308] sm:$0xff]
  %v405 = vld [vmem:[%s1 + $0x310] sm:$0xff]
  %v406 = vld [vmem:[%s1 + $0x318] sm:$0xff]
  %v407 = vld [vmem:[%s1 + $0x320] sm:$0xff]
  %v408 = vld [vmem:[%s1 + $0x328] sm:$0xff]
  %v409 = vld [vmem:[%s1 + $0x330] sm:$0xff]
  %v410 = vld [vmem:[%s1 + $0x338] sm:$0xff]
  %v411 = vld [vmem:[%s1 + $0x340] sm:$0xff]
  %v412 = vld [vmem:[%s1 + $0x348] sm:$0xff]
  %v413 = vld [vmem:[%s1 + $0x350] sm:$0xff]
  %v414 = vld [vmem:[%s1 + $0x358] sm:$0xff]
  %v415 = vld [vmem:[%s1 + $0x360] sm:$0xff]
  %v416 = vld [vmem:[%s1 + $0x368] sm:$0xff]
  %v417 = vld [vmem:[%s1 + $0x370] sm:$0xff]
  %v418 = vld [vmem:[%s1 + $0x378] sm:$0xff]
  %v419 = vld [vmem:[%s1 + $0x380] sm:$0xff]
  %v420 = vld [vmem:[%s1 + $0x388] sm:$0xff]
  %v421 = vld [vmem:[%s1 + $0x390] sm:$0xff]
  %v422 = vld [vmem:[%s1 + $0x398] sm:$0xff]
  %v423 = vld [vmem:[%s1 + $0x3a0] sm:$0xff]
  %v424 = vld [vmem:[%s1 + $0x3a8] sm:$0xff]
  %v425 = vld [vmem:[%s1 + $0x3b0] sm:$0xff]
  %v426 = vld [vmem:[%s1 + $0x3b8] sm:$0xff]
  %v427 = vld [vmem:[%s1 + $0x3c0] sm:$0xff]
  %v428 = vld [vmem:[%s1 + $0x3c8] sm:$0xff]
  %v429 = vld [vmem:[%s1 + $0x3d0] sm:$0xff]
  %v430 = vld [vmem:[%s1 + $0x3d8] sm:$0xff]
  %v431 = vld [vmem:[%s1 + $0x3e0] sm:$0xff]
  %v432 = vld [vmem:[%s1 + $0x3e8] sm:$0xff]
  %v433 = vld [vmem:[%s1 + $0x3f0] sm:$0xff]
  %v434 = vld [vmem:[%s1 + $0x3f8] sm:$0xff]
  %v435 = vld [vmem:[%s2] sm:$0xf]
  %v437 = vperm.slane %v435, 0
  %v438 = vperm.slane %v435, 1
  %v439 = vperm.slane %v435, 2
  %v440 = vperm.slane %v435, 3
  %445 = vmatpush.msra.mxu0 %v367
  %446 = vmatpush.msra.mxu0 %v363
  %447 = vmatpush.msra.mxu0 %v359
  %448 = vmatpush.msra.mxu0 %v355
  %449 = vmatpush.msra.mxu0 %v351
  %450 = vmatpush.msra.mxu0 %v347
  %451 = vmatpush.msra.mxu0 %v343
  %452 = vmatpush.msra.mxu0 %v339
  %453 = vmatpush.msra.mxu0 %v335
  %454 = vmatpush.msra.mxu0 %v331
  %455 = vmatpush.msra.mxu0 %v327
  %456 = vmatpush.msra.mxu0 %v323
  %457 = vmatpush.msra.mxu0 %v319
  %458 = vmatpush.msra.mxu0 %v315
  %459 = vmatpush.msra.mxu0 %v311
  %460 = vmatpush.msra.mxu0 %v307
  %461 = vmatmul.f32.gmra.mxu0 %v57
  %v462 = vpop.f32.mrf.mxu0
  %v463 = vadd.f32 %v437, %v462
  %464 = vmatmul.f32.gmra.mxu0 %v59
  %v465 = vpop.f32.mrf.mxu0
  %v466 = vadd.f32 %v437, %v465
  %467 = vmatmul.f32.gmra.mxu0 %v61
  %v468 = vpop.f32.mrf.mxu0
  %v469 = vadd.f32 %v437, %v468
  %470 = vmatmul.f32.gmra.mxu0 %v63
  %v471 = vpop.f32.mrf.mxu0
  %v472 = vadd.f32 %v437, %v471
  %473 = vmatmul.f32.gmra.mxu0 %v65
  %v474 = vpop.f32.mrf.mxu0
  %v475 = vadd.f32 %v437, %v474
  %476 = vmatmul.f32.gmra.mxu0 %v67
  %v477 = vpop.f32.mrf.mxu0
  %v478 = vadd.f32 %v437, %v477
  %479 = vmatmul.f32.gmra.mxu0 %v69
  %v480 = vpop.f32.mrf.mxu0
  %v481 = vadd.f32 %v437, %v480
  %482 = vmatmul.f32.gmra.mxu0 %v71
  %v483 = vpop.f32.mrf.mxu0
  %v484 = vadd.f32 %v437, %v483
  %485 = vmatmul.f32.gmra.mxu0 %v73
  %v486 = vpop.f32.mrf.mxu0
  %v487 = vadd.f32 %v437, %v486
  %488 = vmatmul.f32.gmra.mxu0 %v75
  %v489 = vpop.f32.mrf.mxu0
  %v490 = vadd.f32 %v437, %v489
  %491 = vmatmul.f32.gmra.mxu0 %v77
  %v492 = vpop.f32.mrf.mxu0
  %v493 = vadd.f32 %v437, %v492
  %494 = vmatmul.f32.gmra.mxu0 %v79
  %v495 = vpop.f32.mrf.mxu0
  %v496 = vadd.f32 %v437, %v495
  %497 = vmatmul.f32.gmra.mxu0 %v81
  %v498 = vpop.f32.mrf.mxu0
  %v499 = vadd.f32 %v437, %v498
  %500 = vmatmul.f32.gmra.mxu0 %v83
  %v501 = vpop.f32.mrf.mxu0
  %v502 = vadd.f32 %v437, %v501
  %503 = vmatmul.f32.gmra.mxu0 %v85
  %v504 = vpop.f32.mrf.mxu0
  %v505 = vadd.f32 %v437, %v504
  %506 = vmatmul.f32.gmra.mxu0 %v87
  %v507 = vpop.f32.mrf.mxu0
  %v508 = vadd.f32 %v437, %v507
  %509 = vmatmul.f32.gmra.mxu0 %v89
  %v510 = vpop.f32.mrf.mxu0
  %v511 = vadd.f32 %v437, %v510
  %512 = vmatmul.f32.gmra.mxu0 %v91
  %v513 = vpop.f32.mrf.mxu0
  %v514 = vadd.f32 %v437, %v513
  %515 = vmatmul.f32.gmra.mxu0 %v93
  %v516 = vpop.f32.mrf.mxu0
  %v517 = vadd.f32 %v437, %v516
  %518 = vmatmul.f32.gmra.mxu0 %v95
  %v519 = vpop.f32.mrf.mxu0
  %v520 = vadd.f32 %v437, %v519
  %521 = vmatmul.f32.gmra.mxu0 %v97
  %v522 = vpop.f32.mrf.mxu0
  %v523 = vadd.f32 %v437, %v522
  %524 = vmatmul.f32.gmra.mxu0 %v99
  %v525 = vpop.f32.mrf.mxu0
  %v526 = vadd.f32 %v437, %v525
  %527 = vmatmul.f32.gmra.mxu0 %v101
  %v528 = vpop.f32.mrf.mxu0
  %v529 = vadd.f32 %v437, %v528
  %530 = vmatmul.f32.gmra.mxu0 %v103
  %v531 = vpop.f32.mrf.mxu0
  %v532 = vadd.f32 %v437, %v531
  %533 = vmatmul.f32.gmra.mxu0 %v105
  %v534 = vpop.f32.mrf.mxu0
  %v535 = vadd.f32 %v437, %v534
  %536 = vmatmul.f32.gmra.mxu0 %v107
  %v537 = vpop.f32.mrf.mxu0
  %v538 = vadd.f32 %v437, %v537
  %539 = vmatmul.f32.gmra.mxu0 %v109
  %v540 = vpop.f32.mrf.mxu0
  %v541 = vadd.f32 %v437, %v540
  %542 = vmatmul.f32.gmra.mxu0 %v111
  %v543 = vpop.f32.mrf.mxu0
  %v544 = vadd.f32 %v437, %v543
  %545 = vmatmul.f32.gmra.mxu0 %v113
  %v546 = vpop.f32.mrf.mxu0
  %v547 = vadd.f32 %v437, %v546
  %548 = vmatmul.f32.gmra.mxu0 %v115
  %v549 = vpop.f32.mrf.mxu0
  %v550 = vadd.f32 %v437, %v549
  %551 = vmatmul.f32.gmra.mxu0 %v117
  %v552 = vpop.f32.mrf.mxu0
  %v553 = vadd.f32 %v437, %v552
  %554 = vmatmul.f32.gmra.mxu0 %v119
  %v555 = vpop.f32.mrf.mxu0
  %v556 = vadd.f32 %v437, %v555
  %557 = vmatmul.f32.gmra.mxu0 %v121
  %v558 = vpop.f32.mrf.mxu0
  %v559 = vadd.f32 %v437, %v558
  %560 = vmatmul.f32.gmra.mxu0 %v123
  %v561 = vpop.f32.mrf.mxu0
  %v562 = vadd.f32 %v437, %v561
  %563 = vmatmul.f32.gmra.mxu0 %v125
  %v564 = vpop.f32.mrf.mxu0
  %v565 = vadd.f32 %v437, %v564
  %566 = vmatmul.f32.gmra.mxu0 %v127
  %v567 = vpop.f32.mrf.mxu0
  %v568 = vadd.f32 %v437, %v567
  %569 = vmatmul.f32.gmra.mxu0 %v129
  %v570 = vpop.f32.mrf.mxu0
  %v571 = vadd.f32 %v437, %v570
  %572 = vmatmul.f32.gmra.mxu0 %v131
  %v573 = vpop.f32.mrf.mxu0
  %v574 = vadd.f32 %v437, %v573
  %575 = vmatmul.f32.gmra.mxu0 %v133
  %v576 = vpop.f32.mrf.mxu0
  %v577 = vadd.f32 %v437, %v576
  %578 = vmatmul.f32.gmra.mxu0 %v135
  %v579 = vpop.f32.mrf.mxu0
  %v580 = vadd.f32 %v437, %v579
  %581 = vmatmul.f32.gmra.mxu0 %v137
  %v582 = vpop.f32.mrf.mxu0
  %v583 = vadd.f32 %v437, %v582
  %584 = vmatmul.f32.gmra.mxu0 %v139
  %v585 = vpop.f32.mrf.mxu0
  %v586 = vadd.f32 %v437, %v585
  %587 = vmatmul.f32.gmra.mxu0 %v141
  %v588 = vpop.f32.mrf.mxu0
  %v589 = vadd.f32 %v437, %v588
  %590 = vmatmul.f32.gmra.mxu0 %v143
  %v591 = vpop.f32.mrf.mxu0
  %v592 = vadd.f32 %v437, %v591
  %593 = vmatmul.f32.gmra.mxu0 %v145
  %v594 = vpop.f32.mrf.mxu0
  %v595 = vadd.f32 %v437, %v594
  %596 = vmatmul.f32.gmra.mxu0 %v147
  %v597 = vpop.f32.mrf.mxu0
  %v598 = vadd.f32 %v437, %v597
  %599 = vmatmul.f32.gmra.mxu0 %v149
  %v600 = vpop.f32.mrf.mxu0
  %v601 = vadd.f32 %v437, %v600
  %602 = vmatmul.f32.gmra.mxu0 %v151
  %v603 = vpop.f32.mrf.mxu0
  %v604 = vadd.f32 %v437, %v603
  %605 = vmatmul.f32.gmra.mxu0 %v153
  %v606 = vpop.f32.mrf.mxu0
  %v607 = vadd.f32 %v437, %v606
  %608 = vmatmul.f32.gmra.mxu0 %v155
  %v609 = vpop.f32.mrf.mxu0
  %v610 = vadd.f32 %v437, %v609
  %611 = vmatmul.f32.gmra.mxu0 %v157
  %v612 = vpop.f32.mrf.mxu0
  %v613 = vadd.f32 %v437, %v612
  %614 = vmatmul.f32.gmra.mxu0 %v159
  %v615 = vpop.f32.mrf.mxu0
  %v616 = vadd.f32 %v437, %v615
  %617 = vmatmul.f32.gmra.mxu0 %v161
  %v618 = vpop.f32.mrf.mxu0
  %v619 = vadd.f32 %v437, %v618
  %620 = vmatmul.f32.gmra.mxu0 %v163
  %v621 = vpop.f32.mrf.mxu0
  %v622 = vadd.f32 %v437, %v621
  %623 = vmatmul.f32.gmra.mxu0 %v165
  %v624 = vpop.f32.mrf.mxu0
  %v625 = vadd.f32 %v437, %v624
  %626 = vmatmul.f32.gmra.mxu0 %v167
  %v627 = vpop.f32.mrf.mxu0
  %v628 = vadd.f32 %v437, %v627
  %629 = vmatmul.f32.gmra.mxu0 %v169
  %v630 = vpop.f32.mrf.mxu0
  %v631 = vadd.f32 %v437, %v630
  %632 = vmatmul.f32.gmra.mxu0 %v171
  %v633 = vpop.f32.mrf.mxu0
  %v634 = vadd.f32 %v437, %v633
  %635 = vmatmul.f32.gmra.mxu0 %v173
  %v636 = vpop.f32.mrf.mxu0
  %v637 = vadd.f32 %v437, %v636
  %638 = vmatmul.f32.gmra.mxu0 %v175
  %v639 = vpop.f32.mrf.mxu0
  %v640 = vadd.f32 %v437, %v639
  %641 = vmatmul.f32.gmra.mxu0 %v177
  %v642 = vpop.f32.mrf.mxu0
  %v643 = vadd.f32 %v437, %v642
  %644 = vmatmul.f32.gmra.mxu0 %v179
  %v645 = vpop.f32.mrf.mxu0
  %v646 = vadd.f32 %v437, %v645
  %647 = vmatmul.f32.gmra.mxu0 %v181
  %v648 = vpop.f32.mrf.mxu0
  %v649 = vadd.f32 %v437, %v648
  %650 = vmatmul.f32.gmra.mxu0 %v183
  %v651 = vpop.f32.mrf.mxu0
  %v652 = vadd.f32 %v437, %v651
  %653 = vmatmul.f32.gmra.mxu0 %v185
  %v654 = vpop.f32.mrf.mxu0
  %v655 = vadd.f32 %v437, %v654
  %656 = vmatmul.f32.gmra.mxu0 %v187
  %v657 = vpop.f32.mrf.mxu0
  %v658 = vadd.f32 %v437, %v657
  %659 = vmatmul.f32.gmra.mxu0 %v189
  %v660 = vpop.f32.mrf.mxu0
  %v661 = vadd.f32 %v437, %v660
  %662 = vmatmul.f32.gmra.mxu0 %v191
  %v663 = vpop.f32.mrf.mxu0
  %v664 = vadd.f32 %v437, %v663
  %665 = vmatmul.f32.gmra.mxu0 %v193
  %v666 = vpop.f32.mrf.mxu0
  %v667 = vadd.f32 %v437, %v666
  %668 = vmatmul.f32.gmra.mxu0 %v195
  %v669 = vpop.f32.mrf.mxu0
  %v670 = vadd.f32 %v437, %v669
  %671 = vmatmul.f32.gmra.mxu0 %v197
  %v672 = vpop.f32.mrf.mxu0
  %v673 = vadd.f32 %v437, %v672
  %674 = vmatmul.f32.gmra.mxu0 %v199
  %v675 = vpop.f32.mrf.mxu0
  %v676 = vadd.f32 %v437, %v675
  %677 = vmatmul.f32.gmra.mxu0 %v201
  %v678 = vpop.f32.mrf.mxu0
  %v679 = vadd.f32 %v437, %v678
  %680 = vmatmul.f32.gmra.mxu0 %v203
  %v681 = vpop.f32.mrf.mxu0
  %v682 = vadd.f32 %v437, %v681
  %683 = vmatmul.f32.gmra.mxu0 %v205
  %v684 = vpop.f32.mrf.mxu0
  %v685 = vadd.f32 %v437, %v684
  %686 = vmatmul.f32.gmra.mxu0 %v207
  %v687 = vpop.f32.mrf.mxu0
  %v688 = vadd.f32 %v437, %v687
  %689 = vmatmul.f32.gmra.mxu0 %v209
  %v690 = vpop.f32.mrf.mxu0
  %v691 = vadd.f32 %v437, %v690
  %692 = vmatmul.f32.gmra.mxu0 %v211
  %v693 = vpop.f32.mrf.mxu0
  %v694 = vadd.f32 %v437, %v693
  %695 = vmatmul.f32.gmra.mxu0 %v213
  %v696 = vpop.f32.mrf.mxu0
  %v697 = vadd.f32 %v437, %v696
  %698 = vmatmul.f32.gmra.mxu0 %v215
  %v699 = vpop.f32.mrf.mxu0
  %v700 = vadd.f32 %v437, %v699
  %701 = vmatmul.f32.gmra.mxu0 %v217
  %v702 = vpop.f32.mrf.mxu0
  %v703 = vadd.f32 %v437, %v702
  %704 = vmatmul.f32.gmra.mxu0 %v219
  %v705 = vpop.f32.mrf.mxu0
  %v706 = vadd.f32 %v437, %v705
  %707 = vmatmul.f32.gmra.mxu0 %v221
  %v708 = vpop.f32.mrf.mxu0
  %v709 = vadd.f32 %v437, %v708
  %710 = vmatmul.f32.gmra.mxu0 %v223
  %v711 = vpop.f32.mrf.mxu0
  %v712 = vadd.f32 %v437, %v711
  %713 = vmatmul.f32.gmra.mxu0 %v225
  %v714 = vpop.f32.mrf.mxu0
  %v715 = vadd.f32 %v437, %v714
  %716 = vmatmul.f32.gmra.mxu0 %v227
  %v717 = vpop.f32.mrf.mxu0
  %v718 = vadd.f32 %v437, %v717
  %719 = vmatmul.f32.gmra.mxu0 %v229
  %v720 = vpop.f32.mrf.mxu0
  %v721 = vadd.f32 %v437, %v720
  %722 = vmatmul.f32.gmra.mxu0 %v231
  %v723 = vpop.f32.mrf.mxu0
  %v724 = vadd.f32 %v437, %v723
  %725 = vmatmul.f32.gmra.mxu0 %v233
  %v726 = vpop.f32.mrf.mxu0
  %v727 = vadd.f32 %v437, %v726
  %728 = vmatmul.f32.gmra.mxu0 %v235
  %v729 = vpop.f32.mrf.mxu0
  %v730 = vadd.f32 %v437, %v729
  %731 = vmatmul.f32.gmra.mxu0 %v237
  %v732 = vpop.f32.mrf.mxu0
  %v733 = vadd.f32 %v437, %v732
  %734 = vmatmul.f32.gmra.mxu0 %v239
  %v735 = vpop.f32.mrf.mxu0
  %v736 = vadd.f32 %v437, %v735
  %737 = vmatmul.f32.gmra.mxu0 %v241
  %v738 = vpop.f32.mrf.mxu0
  %v739 = vadd.f32 %v437, %v738
  %740 = vmatmul.f32.gmra.mxu0 %v243
  %v741 = vpop.f32.mrf.mxu0
  %v742 = vadd.f32 %v437, %v741
  %743 = vmatmul.f32.gmra.mxu0 %v245
  %v744 = vpop.f32.mrf.mxu0
  %v745 = vadd.f32 %v437, %v744
  %746 = vmatmul.f32.gmra.mxu0 %v247
  %v747 = vpop.f32.mrf.mxu0
  %v748 = vadd.f32 %v437, %v747
  %749 = vmatmul.f32.gmra.mxu0 %v249
  %v750 = vpop.f32.mrf.mxu0
  %v751 = vadd.f32 %v437, %v750
  %752 = vmatmul.f32.gmra.mxu0 %v251
  %v753 = vpop.f32.mrf.mxu0
  %v754 = vadd.f32 %v437, %v753
  %755 = vmatmul.f32.gmra.mxu0 %v253
  %v756 = vpop.f32.mrf.mxu0
  %v757 = vadd.f32 %v437, %v756
  %758 = vmatmul.f32.gmra.mxu0 %v255
  %v759 = vpop.f32.mrf.mxu0
  %v760 = vadd.f32 %v437, %v759
  %761 = vmatmul.f32.gmra.mxu0 %v257
  %v762 = vpop.f32.mrf.mxu0
  %v763 = vadd.f32 %v437, %v762
  %764 = vmatmul.f32.gmra.mxu0 %v259
  %v765 = vpop.f32.mrf.mxu0
  %v766 = vadd.f32 %v437, %v765
  %767 = vmatmul.f32.gmra.mxu0 %v261
  %v768 = vpop.f32.mrf.mxu0
  %v769 = vadd.f32 %v437, %v768
  %770 = vmatmul.f32.gmra.mxu0 %v263
  %v771 = vpop.f32.mrf.mxu0
  %v772 = vadd.f32 %v437, %v771
  %773 = vmatmul.f32.gmra.mxu0 %v265
  %v774 = vpop.f32.mrf.mxu0
  %v775 = vadd.f32 %v437, %v774
  %776 = vmatmul.f32.gmra.mxu0 %v267
  %v777 = vpop.f32.mrf.mxu0
  %v778 = vadd.f32 %v437, %v777
  %779 = vmatmul.f32.gmra.mxu0 %v269
  %v780 = vpop.f32.mrf.mxu0
  %v781 = vadd.f32 %v437, %v780
  %782 = vmatmul.f32.gmra.mxu0 %v271
  %v783 = vpop.f32.mrf.mxu0
  %v784 = vadd.f32 %v437, %v783
  %785 = vmatmul.f32.gmra.mxu0 %v273
  %v786 = vpop.f32.mrf.mxu0
  %v787 = vadd.f32 %v437, %v786
  %788 = vmatmul.f32.gmra.mxu0 %v275
  %v789 = vpop.f32.mrf.mxu0
  %v790 = vadd.f32 %v437, %v789
  %791 = vmatmul.f32.gmra.mxu0 %v277
  %v792 = vpop.f32.mrf.mxu0
  %v793 = vadd.f32 %v437, %v792
  %794 = vmatmul.f32.gmra.mxu0 %v279
  %v795 = vpop.f32.mrf.mxu0
  %v796 = vadd.f32 %v437, %v795
  %797 = vmatmul.f32.gmra.mxu0 %v281
  %v798 = vpop.f32.mrf.mxu0
  %v799 = vadd.f32 %v437, %v798
  %800 = vmatmul.f32.gmra.mxu0 %v283
  %v801 = vpop.f32.mrf.mxu0
  %v802 = vadd.f32 %v437, %v801
  %803 = vmatmul.f32.gmra.mxu0 %v285
  %v804 = vpop.f32.mrf.mxu0
  %v805 = vadd.f32 %v437, %v804
  %806 = vmatmul.f32.gmra.mxu0 %v287
  %v807 = vpop.f32.mrf.mxu0
  %v808 = vadd.f32 %v437, %v807
  %809 = vmatmul.f32.gmra.mxu0 %v289
  %v810 = vpop.f32.mrf.mxu0
  %v811 = vadd.f32 %v437, %v810
  %812 = vmatmul.f32.gmra.mxu0 %v291
  %v813 = vpop.f32.mrf.mxu0
  %v814 = vadd.f32 %v437, %v813
  %815 = vmatmul.f32.gmra.mxu0 %v293
  %v816 = vpop.f32.mrf.mxu0
  %v817 = vadd.f32 %v437, %v816
  %818 = vmatmul.f32.gmra.mxu0 %v295
  %v819 = vpop.f32.mrf.mxu0
  %v820 = vadd.f32 %v437, %v819
  %821 = vmatmul.f32.gmra.mxu0 %v297
  %v822 = vpop.f32.mrf.mxu0
  %v823 = vadd.f32 %v437, %v822
  %824 = vmatmul.f32.gmra.mxu0 %v299
  %v825 = vpop.f32.mrf.mxu0
  %v826 = vadd.f32 %v437, %v825
  %827 = vmatmul.f32.gmra.mxu0 %v301
  %v828 = vpop.f32.mrf.mxu0
  %v829 = vadd.f32 %v437, %v828
  %830 = vmatmul.f32.gmra.mxu0 %v303
  %v831 = vpop.f32.mrf.mxu0
  %v832 = vadd.f32 %v437, %v831
  %833 = vmatmul.f32.gmra.mxu0 %v305
  %v834 = vpop.f32.mrf.mxu0
  %v835 = vadd.f32 %v437, %v834
  %836 = vdwg.mxu0
  %837 = vmatpush.msra.mxu0 %v431
  %838 = vmatpush.msra.mxu0 %v427
  %839 = vmatpush.msra.mxu0 %v423
  %840 = vmatpush.msra.mxu0 %v419
  %841 = vmatpush.msra.mxu0 %v415
  %842 = vmatpush.msra.mxu0 %v411
  %843 = vmatpush.msra.mxu0 %v407
  %844 = vmatpush.msra.mxu0 %v403
  %845 = vmatpush.msra.mxu0 %v399
  %846 = vmatpush.msra.mxu0 %v395
  %847 = vmatpush.msra.mxu0 %v391
  %848 = vmatpush.msra.mxu0 %v387
  %849 = vmatpush.msra.mxu0 %v383
  %850 = vmatpush.msra.mxu0 %v379
  %851 = vmatpush.msra.mxu0 %v375
  %852 = vmatpush.msra.mxu0 %v371
  %853 = vmatmul.f32.gmra.mxu0 %v58
  %v854 = vpop.f32.mrf.mxu0
  %v855 = vadd.f32 %v463, %v854
  %856 = vmatmul.f32.gmra.mxu0 %v60
  %v857 = vpop.f32.mrf.mxu0
  %v858 = vadd.f32 %v466, %v857
  %859 = vmatmul.f32.gmra.mxu0 %v62
  %v860 = vpop.f32.mrf.mxu0
  %v861 = vadd.f32 %v469, %v860
  %862 = vmatmul.f32.gmra.mxu0 %v64
  %v863 = vpop.f32.mrf.mxu0
  %v864 = vadd.f32 %v472, %v863
  %865 = vmatmul.f32.gmra.mxu0 %v66
  %v866 = vpop.f32.mrf.mxu0
  %v867 = vadd.f32 %v475, %v866
  %868 = vmatmul.f32.gmra.mxu0 %v68
  %v869 = vpop.f32.mrf.mxu0
  %v870 = vadd.f32 %v478, %v869
  %871 = vmatmul.f32.gmra.mxu0 %v70
  %v872 = vpop.f32.mrf.mxu0
  %v873 = vadd.f32 %v481, %v872
  %874 = vmatmul.f32.gmra.mxu0 %v72
  %v875 = vpop.f32.mrf.mxu0
  %v876 = vadd.f32 %v484, %v875
  %877 = vmatmul.f32.gmra.mxu0 %v74
  %v878 = vpop.f32.mrf.mxu0
  %v879 = vadd.f32 %v487, %v878
  %880 = vmatmul.f32.gmra.mxu0 %v76
  %v881 = vpop.f32.mrf.mxu0
  %v882 = vadd.f32 %v490, %v881
  %883 = vmatmul.f32.gmra.mxu0 %v78
  %v884 = vpop.f32.mrf.mxu0
  %v885 = vadd.f32 %v493, %v884
  %886 = vmatmul.f32.gmra.mxu0 %v80
  %v887 = vpop.f32.mrf.mxu0
  %v888 = vadd.f32 %v496, %v887
  %889 = vmatmul.f32.gmra.mxu0 %v82
  %v890 = vpop.f32.mrf.mxu0
  %v891 = vadd.f32 %v499, %v890
  %892 = vmatmul.f32.gmra.mxu0 %v84
  %v893 = vpop.f32.mrf.mxu0
  %v894 = vadd.f32 %v502, %v893
  %895 = vmatmul.f32.gmra.mxu0 %v86
  %v896 = vpop.f32.mrf.mxu0
  %v897 = vadd.f32 %v505, %v896
  %898 = vmatmul.f32.gmra.mxu0 %v88
  %v899 = vpop.f32.mrf.mxu0
  %v900 = vadd.f32 %v508, %v899
  %901 = vmatmul.f32.gmra.mxu0 %v90
  %v902 = vpop.f32.mrf.mxu0
  %v903 = vadd.f32 %v511, %v902
  %904 = vmatmul.f32.gmra.mxu0 %v92
  %v905 = vpop.f32.mrf.mxu0
  %v906 = vadd.f32 %v514, %v905
  %907 = vmatmul.f32.gmra.mxu0 %v94
  %v908 = vpop.f32.mrf.mxu0
  %v909 = vadd.f32 %v517, %v908
  %910 = vmatmul.f32.gmra.mxu0 %v96
  %v911 = vpop.f32.mrf.mxu0
  %v912 = vadd.f32 %v520, %v911
  %913 = vmatmul.f32.gmra.mxu0 %v98
  %v914 = vpop.f32.mrf.mxu0
  %v915 = vadd.f32 %v523, %v914
  %916 = vmatmul.f32.gmra.mxu0 %v100
  %v917 = vpop.f32.mrf.mxu0
  %v918 = vadd.f32 %v526, %v917
  %919 = vmatmul.f32.gmra.mxu0 %v102
  %v920 = vpop.f32.mrf.mxu0
  %v921 = vadd.f32 %v529, %v920
  %922 = vmatmul.f32.gmra.mxu0 %v104
  %v923 = vpop.f32.mrf.mxu0
  %v924 = vadd.f32 %v532, %v923
  %925 = vmatmul.f32.gmra.mxu0 %v106
  %v926 = vpop.f32.mrf.mxu0
  %v927 = vadd.f32 %v535, %v926
  %928 = vmatmul.f32.gmra.mxu0 %v108
  %v929 = vpop.f32.mrf.mxu0
  %v930 = vadd.f32 %v538, %v929
  %931 = vmatmul.f32.gmra.mxu0 %v110
  %v932 = vpop.f32.mrf.mxu0
  %v933 = vadd.f32 %v541, %v932
  %934 = vmatmul.f32.gmra.mxu0 %v112
  %v935 = vpop.f32.mrf.mxu0
  %v936 = vadd.f32 %v544, %v935
  %937 = vmatmul.f32.gmra.mxu0 %v114
  %v938 = vpop.f32.mrf.mxu0
  %v939 = vadd.f32 %v547, %v938
  %940 = vmatmul.f32.gmra.mxu0 %v116
  %v941 = vpop.f32.mrf.mxu0
  %v942 = vadd.f32 %v550, %v941
  %943 = vmatmul.f32.gmra.mxu0 %v118
  %v944 = vpop.f32.mrf.mxu0
  %v945 = vadd.f32 %v553, %v944
  %946 = vmatmul.f32.gmra.mxu0 %v120
  %v947 = vpop.f32.mrf.mxu0
  %v948 = vadd.f32 %v556, %v947
  %949 = vmatmul.f32.gmra.mxu0 %v122
  %v950 = vpop.f32.mrf.mxu0
  %v951 = vadd.f32 %v559, %v950
  %952 = vmatmul.f32.gmra.mxu0 %v124
  %v953 = vpop.f32.mrf.mxu0
  %v954 = vadd.f32 %v562, %v953
  %955 = vmatmul.f32.gmra.mxu0 %v126
  %v956 = vpop.f32.mrf.mxu0
  %v957 = vadd.f32 %v565, %v956
  %958 = vmatmul.f32.gmra.mxu0 %v128
  %v959 = vpop.f32.mrf.mxu0
  %v960 = vadd.f32 %v568, %v959
  %961 = vmatmul.f32.gmra.mxu0 %v130
  %v962 = vpop.f32.mrf.mxu0
  %v963 = vadd.f32 %v571, %v962
  %964 = vmatmul.f32.gmra.mxu0 %v132
  %v965 = vpop.f32.mrf.mxu0
  %v966 = vadd.f32 %v574, %v965
  %967 = vmatmul.f32.gmra.mxu0 %v134
  %v968 = vpop.f32.mrf.mxu0
  %v969 = vadd.f32 %v577, %v968
  %970 = vmatmul.f32.gmra.mxu0 %v136
  %v971 = vpop.f32.mrf.mxu0
  %v972 = vadd.f32 %v580, %v971
  %973 = vmatmul.f32.gmra.mxu0 %v138
  %v974 = vpop.f32.mrf.mxu0
  %v975 = vadd.f32 %v583, %v974
  %976 = vmatmul.f32.gmra.mxu0 %v140
  %v977 = vpop.f32.mrf.mxu0
  %v978 = vadd.f32 %v586, %v977
  %979 = vmatmul.f32.gmra.mxu0 %v142
  %v980 = vpop.f32.mrf.mxu0
  %v981 = vadd.f32 %v589, %v980
  %982 = vmatmul.f32.gmra.mxu0 %v144
  %v983 = vpop.f32.mrf.mxu0
  %v984 = vadd.f32 %v592, %v983
  %985 = vmatmul.f32.gmra.mxu0 %v146
  %v986 = vpop.f32.mrf.mxu0
  %v987 = vadd.f32 %v595, %v986
  %988 = vmatmul.f32.gmra.mxu0 %v148
  %v989 = vpop.f32.mrf.mxu0
  %v990 = vadd.f32 %v598, %v989
  %991 = vmatmul.f32.gmra.mxu0 %v150
  %v992 = vpop.f32.mrf.mxu0
  %v993 = vadd.f32 %v601, %v992
  %994 = vmatmul.f32.gmra.mxu0 %v152
  %v995 = vpop.f32.mrf.mxu0
  %v996 = vadd.f32 %v604, %v995
  %997 = vmatmul.f32.gmra.mxu0 %v154
  %v998 = vpop.f32.mrf.mxu0
  %v999 = vadd.f32 %v607, %v998
  %1000 = vmatmul.f32.gmra.mxu0 %v156
  %v1001 = vpop.f32.mrf.mxu0
  %v1002 = vadd.f32 %v610, %v1001
  %1003 = vmatmul.f32.gmra.mxu0 %v158
  %v1004 = vpop.f32.mrf.mxu0
  %v1005 = vadd.f32 %v613, %v1004
  %1006 = vmatmul.f32.gmra.mxu0 %v160
  %v1007 = vpop.f32.mrf.mxu0
  %v1008 = vadd.f32 %v616, %v1007
  %1009 = vmatmul.f32.gmra.mxu0 %v162
  %v1010 = vpop.f32.mrf.mxu0
  %v1011 = vadd.f32 %v619, %v1010
  %1012 = vmatmul.f32.gmra.mxu0 %v164
  %v1013 = vpop.f32.mrf.mxu0
  %v1014 = vadd.f32 %v622, %v1013
  %1015 = vmatmul.f32.gmra.mxu0 %v166
  %v1016 = vpop.f32.mrf.mxu0
  %v1017 = vadd.f32 %v625, %v1016
  %1018 = vmatmul.f32.gmra.mxu0 %v168
  %v1019 = vpop.f32.mrf.mxu0
  %v1020 = vadd.f32 %v628, %v1019
  %1021 = vmatmul.f32.gmra.mxu0 %v170
  %v1022 = vpop.f32.mrf.mxu0
  %v1023 = vadd.f32 %v631, %v1022
  %1024 = vmatmul.f32.gmra.mxu0 %v172
  %v1025 = vpop.f32.mrf.mxu0
  %v1026 = vadd.f32 %v634, %v1025
  %1027 = vmatmul.f32.gmra.mxu0 %v174
  %v1028 = vpop.f32.mrf.mxu0
  %v1029 = vadd.f32 %v637, %v1028
  %1030 = vmatmul.f32.gmra.mxu0 %v176
  %v1031 = vpop.f32.mrf.mxu0
  %v1032 = vadd.f32 %v640, %v1031
  %1033 = vmatmul.f32.gmra.mxu0 %v178
  %v1034 = vpop.f32.mrf.mxu0
  %v1035 = vadd.f32 %v643, %v1034
  %1036 = vmatmul.f32.gmra.mxu0 %v180
  %v1037 = vpop.f32.mrf.mxu0
  %v1038 = vadd.f32 %v646, %v1037
  %1039 = vmatmul.f32.gmra.mxu0 %v182
  %v1040 = vpop.f32.mrf.mxu0
  %v1041 = vadd.f32 %v649, %v1040
  %1042 = vmatmul.f32.gmra.mxu0 %v184
  %v1043 = vpop.f32.mrf.mxu0
  %v1044 = vadd.f32 %v652, %v1043
  %1045 = vmatmul.f32.gmra.mxu0 %v186
  %v1046 = vpop.f32.mrf.mxu0
  %v1047 = vadd.f32 %v655, %v1046
  %1048 = vmatmul.f32.gmra.mxu0 %v188
  %v1049 = vpop.f32.mrf.mxu0
  %v1050 = vadd.f32 %v658, %v1049
  %1051 = vmatmul.f32.gmra.mxu0 %v190
  %v1052 = vpop.f32.mrf.mxu0
  %v1053 = vadd.f32 %v661, %v1052
  %1054 = vmatmul.f32.gmra.mxu0 %v192
  %v1055 = vpop.f32.mrf.mxu0
  %v1056 = vadd.f32 %v664, %v1055
  %1057 = vmatmul.f32.gmra.mxu0 %v194
  %v1058 = vpop.f32.mrf.mxu0
  %v1059 = vadd.f32 %v667, %v1058
  %1060 = vmatmul.f32.gmra.mxu0 %v196
  %v1061 = vpop.f32.mrf.mxu0
  %v1062 = vadd.f32 %v670, %v1061
  %1063 = vmatmul.f32.gmra.mxu0 %v198
  %v1064 = vpop.f32.mrf.mxu0
  %v1065 = vadd.f32 %v673, %v1064
  %1066 = vmatmul.f32.gmra.mxu0 %v200
  %v1067 = vpop.f32.mrf.mxu0
  %v1068 = vadd.f32 %v676, %v1067
  %1069 = vmatmul.f32.gmra.mxu0 %v202
  %v1070 = vpop.f32.mrf.mxu0
  %v1071 = vadd.f32 %v679, %v1070
  %1072 = vmatmul.f32.gmra.mxu0 %v204
  %v1073 = vpop.f32.mrf.mxu0
  %v1074 = vadd.f32 %v682, %v1073
  %1075 = vmatmul.f32.gmra.mxu0 %v206
  %v1076 = vpop.f32.mrf.mxu0
  %v1077 = vadd.f32 %v685, %v1076
  %1078 = vmatmul.f32.gmra.mxu0 %v208
  %v1079 = vpop.f32.mrf.mxu0
  %v1080 = vadd.f32 %v688, %v1079
  %1081 = vmatmul.f32.gmra.mxu0 %v210
  %v1082 = vpop.f32.mrf.mxu0
  %v1083 = vadd.f32 %v691, %v1082
  %1084 = vmatmul.f32.gmra.mxu0 %v212
  %v1085 = vpop.f32.mrf.mxu0
  %v1086 = vadd.f32 %v694, %v1085
  %1087 = vmatmul.f32.gmra.mxu0 %v214
  %v1088 = vpop.f32.mrf.mxu0
  %v1089 = vadd.f32 %v697, %v1088
  %1090 = vmatmul.f32.gmra.mxu0 %v216
  %v1091 = vpop.f32.mrf.mxu0
  %v1092 = vadd.f32 %v700, %v1091
  %1093 = vmatmul.f32.gmra.mxu0 %v218
  %v1094 = vpop.f32.mrf.mxu0
  %v1095 = vadd.f32 %v703, %v1094
  %1096 = vmatmul.f32.gmra.mxu0 %v220
  %v1097 = vpop.f32.mrf.mxu0
  %v1098 = vadd.f32 %v706, %v1097
  %1099 = vmatmul.f32.gmra.mxu0 %v222
  %v1100 = vpop.f32.mrf.mxu0
  %v1101 = vadd.f32 %v709, %v1100
  %1102 = vmatmul.f32.gmra.mxu0 %v224
  %v1103 = vpop.f32.mrf.mxu0
  %v1104 = vadd.f32 %v712, %v1103
  %1105 = vmatmul.f32.gmra.mxu0 %v226
  %v1106 = vpop.f32.mrf.mxu0
  %v1107 = vadd.f32 %v715, %v1106
  %1108 = vmatmul.f32.gmra.mxu0 %v228
  %v1109 = vpop.f32.mrf.mxu0
  %v1110 = vadd.f32 %v718, %v1109
  %1111 = vmatmul.f32.gmra.mxu0 %v230
  %v1112 = vpop.f32.mrf.mxu0
  %v1113 = vadd.f32 %v721, %v1112
  %1114 = vmatmul.f32.gmra.mxu0 %v232
  %v1115 = vpop.f32.mrf.mxu0
  %v1116 = vadd.f32 %v724, %v1115
  %1117 = vmatmul.f32.gmra.mxu0 %v234
  %v1118 = vpop.f32.mrf.mxu0
  %v1119 = vadd.f32 %v727, %v1118
  %1120 = vmatmul.f32.gmra.mxu0 %v236
  %v1121 = vpop.f32.mrf.mxu0
  %v1122 = vadd.f32 %v730, %v1121
  %1123 = vmatmul.f32.gmra.mxu0 %v238
  %v1124 = vpop.f32.mrf.mxu0
  %v1125 = vadd.f32 %v733, %v1124
  %1126 = vmatmul.f32.gmra.mxu0 %v240
  %v1127 = vpop.f32.mrf.mxu0
  %v1128 = vadd.f32 %v736, %v1127
  %1129 = vmatmul.f32.gmra.mxu0 %v242
  %v1130 = vpop.f32.mrf.mxu0
  %v1131 = vadd.f32 %v739, %v1130
  %1132 = vmatmul.f32.gmra.mxu0 %v244
  %v1133 = vpop.f32.mrf.mxu0
  %v1134 = vadd.f32 %v742, %v1133
  %1135 = vmatmul.f32.gmra.mxu0 %v246
  %v1136 = vpop.f32.mrf.mxu0
  %v1137 = vadd.f32 %v745, %v1136
  %1138 = vmatmul.f32.gmra.mxu0 %v248
  %v1139 = vpop.f32.mrf.mxu0
  %v1140 = vadd.f32 %v748, %v1139
  %1141 = vmatmul.f32.gmra.mxu0 %v250
  %v1142 = vpop.f32.mrf.mxu0
  %v1143 = vadd.f32 %v751, %v1142
  %1144 = vmatmul.f32.gmra.mxu0 %v252
  %v1145 = vpop.f32.mrf.mxu0
  %v1146 = vadd.f32 %v754, %v1145
  %1147 = vmatmul.f32.gmra.mxu0 %v254
  %v1148 = vpop.f32.mrf.mxu0
  %v1149 = vadd.f32 %v757, %v1148
  %1150 = vmatmul.f32.gmra.mxu0 %v256
  %v1151 = vpop.f32.mrf.mxu0
  %v1152 = vadd.f32 %v760, %v1151
  %1153 = vmatmul.f32.gmra.mxu0 %v258
  %v1154 = vpop.f32.mrf.mxu0
  %v1155 = vadd.f32 %v763, %v1154
  %1156 = vmatmul.f32.gmra.mxu0 %v260
  %v1157 = vpop.f32.mrf.mxu0
  %v1158 = vadd.f32 %v766, %v1157
  %1159 = vmatmul.f32.gmra.mxu0 %v262
  %v1160 = vpop.f32.mrf.mxu0
  %v1161 = vadd.f32 %v769, %v1160
  %1162 = vmatmul.f32.gmra.mxu0 %v264
  %v1163 = vpop.f32.mrf.mxu0
  %v1164 = vadd.f32 %v772, %v1163
  %1165 = vmatmul.f32.gmra.mxu0 %v266
  %v1166 = vpop.f32.mrf.mxu0
  %v1167 = vadd.f32 %v775, %v1166
  %1168 = vmatmul.f32.gmra.mxu0 %v268
  %v1169 = vpop.f32.mrf.mxu0
  %v1170 = vadd.f32 %v778, %v1169
  %1171 = vmatmul.f32.gmra.mxu0 %v270
  %v1172 = vpop.f32.mrf.mxu0
  %v1173 = vadd.f32 %v781, %v1172
  %1174 = vmatmul.f32.gmra.mxu0 %v272
  %v1175 = vpop.f32.mrf.mxu0
  %v1176 = vadd.f32 %v784, %v1175
  %1177 = vmatmul.f32.gmra.mxu0 %v274
  %v1178 = vpop.f32.mrf.mxu0
  %v1179 = vadd.f32 %v787, %v1178
  %1180 = vmatmul.f32.gmra.mxu0 %v276
  %v1181 = vpop.f32.mrf.mxu0
  %v1182 = vadd.f32 %v790, %v1181
  %1183 = vmatmul.f32.gmra.mxu0 %v278
  %v1184 = vpop.f32.mrf.mxu0
  %v1185 = vadd.f32 %v793, %v1184
  %1186 = vmatmul.f32.gmra.mxu0 %v280
  %v1187 = vpop.f32.mrf.mxu0
  %v1188 = vadd.f32 %v796, %v1187
  %1189 = vmatmul.f32.gmra.mxu0 %v282
  %v1190 = vpop.f32.mrf.mxu0
  %v1191 = vadd.f32 %v799, %v1190
  %1192 = vmatmul.f32.gmra.mxu0 %v284
  %v1193 = vpop.f32.mrf.mxu0
  %v1194 = vadd.f32 %v802, %v1193
  %1195 = vmatmul.f32.gmra.mxu0 %v286
  %v1196 = vpop.f32.mrf.mxu0
  %v1197 = vadd.f32 %v805, %v1196
  %1198 = vmatmul.f32.gmra.mxu0 %v288
  %v1199 = vpop.f32.mrf.mxu0
  %v1200 = vadd.f32 %v808, %v1199
  %1201 = vmatmul.f32.gmra.mxu0 %v290
  %v1202 = vpop.f32.mrf.mxu0
  %v1203 = vadd.f32 %v811, %v1202
  %1204 = vmatmul.f32.gmra.mxu0 %v292
  %v1205 = vpop.f32.mrf.mxu0
  %v1206 = vadd.f32 %v814, %v1205
  %1207 = vmatmul.f32.gmra.mxu0 %v294
  %v1208 = vpop.f32.mrf.mxu0
  %v1209 = vadd.f32 %v817, %v1208
  %1210 = vmatmul.f32.gmra.mxu0 %v296
  %v1211 = vpop.f32.mrf.mxu0
  %v1212 = vadd.f32 %v820, %v1211
  %1213 = vmatmul.f32.gmra.mxu0 %v298
  %v1214 = vpop.f32.mrf.mxu0
  %v1215 = vadd.f32 %v823, %v1214
  %1216 = vmatmul.f32.gmra.mxu0 %v300
  %v1217 = vpop.f32.mrf.mxu0
  %v1218 = vadd.f32 %v826, %v1217
  %1219 = vmatmul.f32.gmra.mxu0 %v302
  %v1220 = vpop.f32.mrf.mxu0
  %v1221 = vadd.f32 %v829, %v1220
  %1222 = vmatmul.f32.gmra.mxu0 %v304
  %v1223 = vpop.f32.mrf.mxu0
  %v1224 = vadd.f32 %v832, %v1223
  %1225 = vmatmul.f32.gmra.mxu0 %v306
  %v1226 = vpop.f32.mrf.mxu0
  %v1227 = vadd.f32 %v835, %v1226
  %1228 = vdwg.mxu0
  %1229 = vmatpush.msra.mxu0 %v368
  %1230 = vmatpush.msra.mxu0 %v364
  %1231 = vmatpush.msra.mxu0 %v360
  %1232 = vmatpush.msra.mxu0 %v356
  %1233 = vmatpush.msra.mxu0 %v352
  %1234 = vmatpush.msra.mxu0 %v348
  %1235 = vmatpush.msra.mxu0 %v344
  %1236 = vmatpush.msra.mxu0 %v340
  %1237 = vmatpush.msra.mxu0 %v336
  %1238 = vmatpush.msra.mxu0 %v332
  %1239 = vmatpush.msra.mxu0 %v328
  %1240 = vmatpush.msra.mxu0 %v324
  %1241 = vmatpush.msra.mxu0 %v320
  %1242 = vmatpush.msra.mxu0 %v316
  %1243 = vmatpush.msra.mxu0 %v312
  %1244 = vmatpush.msra.mxu0 %v308
  %1245 = vmatmul.f32.gmra.mxu0 %v57
  %v1246 = vpop.f32.mrf.mxu0
  %v1247 = vadd.f32 %v438, %v1246
  %1248 = vmatmul.f32.gmra.mxu0 %v59
  %v1249 = vpop.f32.mrf.mxu0
  %v1250 = vadd.f32 %v438, %v1249
  %1251 = vmatmul.f32.gmra.mxu0 %v61
  %v1252 = vpop.f32.mrf.mxu0
  %v1253 = vadd.f32 %v438, %v1252
  %1254 = vmatmul.f32.gmra.mxu0 %v63
  %v1255 = vpop.f32.mrf.mxu0
  %v1256 = vadd.f32 %v438, %v1255
  %1257 = vmatmul.f32.gmra.mxu0 %v65
  %v1258 = vpop.f32.mrf.mxu0
  %v1259 = vadd.f32 %v438, %v1258
  %1260 = vmatmul.f32.gmra.mxu0 %v67
  %v1261 = vpop.f32.mrf.mxu0
  %v1262 = vadd.f32 %v438, %v1261
  %1263 = vmatmul.f32.gmra.mxu0 %v69
  %v1264 = vpop.f32.mrf.mxu0
  %v1265 = vadd.f32 %v438, %v1264
  %1266 = vmatmul.f32.gmra.mxu0 %v71
  %v1267 = vpop.f32.mrf.mxu0
  %v1268 = vadd.f32 %v438, %v1267
  %1269 = vmatmul.f32.gmra.mxu0 %v73
  %v1270 = vpop.f32.mrf.mxu0
  %v1271 = vadd.f32 %v438, %v1270
  %1272 = vmatmul.f32.gmra.mxu0 %v75
  %v1273 = vpop.f32.mrf.mxu0
  %v1274 = vadd.f32 %v438, %v1273
  %1275 = vmatmul.f32.gmra.mxu0 %v77
  %v1276 = vpop.f32.mrf.mxu0
  %v1277 = vadd.f32 %v438, %v1276
  %1278 = vmatmul.f32.gmra.mxu0 %v79
  %v1279 = vpop.f32.mrf.mxu0
  %v1280 = vadd.f32 %v438, %v1279
  %1281 = vmatmul.f32.gmra.mxu0 %v81
  %v1282 = vpop.f32.mrf.mxu0
  %v1283 = vadd.f32 %v438, %v1282
  %1284 = vmatmul.f32.gmra.mxu0 %v83
  %v1285 = vpop.f32.mrf.mxu0
  %v1286 = vadd.f32 %v438, %v1285
  %1287 = vmatmul.f32.gmra.mxu0 %v85
  %v1288 = vpop.f32.mrf.mxu0
  %v1289 = vadd.f32 %v438, %v1288
  %1290 = vmatmul.f32.gmra.mxu0 %v87
  %v1291 = vpop.f32.mrf.mxu0
  %v1292 = vadd.f32 %v438, %v1291
  %1293 = vmatmul.f32.gmra.mxu0 %v89
  %v1294 = vpop.f32.mrf.mxu0
  %v1295 = vadd.f32 %v438, %v1294
  %1296 = vmatmul.f32.gmra.mxu0 %v91
  %v1297 = vpop.f32.mrf.mxu0
  %v1298 = vadd.f32 %v438, %v1297
  %1299 = vmatmul.f32.gmra.mxu0 %v93
  %v1300 = vpop.f32.mrf.mxu0
  %v1301 = vadd.f32 %v438, %v1300
  %1302 = vmatmul.f32.gmra.mxu0 %v95
  %v1303 = vpop.f32.mrf.mxu0
  %v1304 = vadd.f32 %v438, %v1303
  %1305 = vmatmul.f32.gmra.mxu0 %v97
  %v1306 = vpop.f32.mrf.mxu0
  %v1307 = vadd.f32 %v438, %v1306
  %1308 = vmatmul.f32.gmra.mxu0 %v99
  %v1309 = vpop.f32.mrf.mxu0
  %v1310 = vadd.f32 %v438, %v1309
  %1311 = vmatmul.f32.gmra.mxu0 %v101
  %v1312 = vpop.f32.mrf.mxu0
  %v1313 = vadd.f32 %v438, %v1312
  %1314 = vmatmul.f32.gmra.mxu0 %v103
  %v1315 = vpop.f32.mrf.mxu0
  %v1316 = vadd.f32 %v438, %v1315
  %1317 = vmatmul.f32.gmra.mxu0 %v105
  %v1318 = vpop.f32.mrf.mxu0
  %v1319 = vadd.f32 %v438, %v1318
  %1320 = vmatmul.f32.gmra.mxu0 %v107
  %v1321 = vpop.f32.mrf.mxu0
  %v1322 = vadd.f32 %v438, %v1321
  %1323 = vmatmul.f32.gmra.mxu0 %v109
  %v1324 = vpop.f32.mrf.mxu0
  %v1325 = vadd.f32 %v438, %v1324
  %1326 = vmatmul.f32.gmra.mxu0 %v111
  %v1327 = vpop.f32.mrf.mxu0
  %v1328 = vadd.f32 %v438, %v1327
  %1329 = vmatmul.f32.gmra.mxu0 %v113
  %v1330 = vpop.f32.mrf.mxu0
  %v1331 = vadd.f32 %v438, %v1330
  %1332 = vmatmul.f32.gmra.mxu0 %v115
  %v1333 = vpop.f32.mrf.mxu0
  %v1334 = vadd.f32 %v438, %v1333
  %1335 = vmatmul.f32.gmra.mxu0 %v117
  %v1336 = vpop.f32.mrf.mxu0
  %v1337 = vadd.f32 %v438, %v1336
  %1338 = vmatmul.f32.gmra.mxu0 %v119
  %v1339 = vpop.f32.mrf.mxu0
  %v1340 = vadd.f32 %v438, %v1339
  %1341 = vmatmul.f32.gmra.mxu0 %v121
  %v1342 = vpop.f32.mrf.mxu0
  %v1343 = vadd.f32 %v438, %v1342
  %1344 = vmatmul.f32.gmra.mxu0 %v123
  %v1345 = vpop.f32.mrf.mxu0
  %v1346 = vadd.f32 %v438, %v1345
  %1347 = vmatmul.f32.gmra.mxu0 %v125
  %v1348 = vpop.f32.mrf.mxu0
  %v1349 = vadd.f32 %v438, %v1348
  %1350 = vmatmul.f32.gmra.mxu0 %v127
  %v1351 = vpop.f32.mrf.mxu0
  %v1352 = vadd.f32 %v438, %v1351
  %1353 = vmatmul.f32.gmra.mxu0 %v129
  %v1354 = vpop.f32.mrf.mxu0
  %v1355 = vadd.f32 %v438, %v1354
  %1356 = vmatmul.f32.gmra.mxu0 %v131
  %v1357 = vpop.f32.mrf.mxu0
  %v1358 = vadd.f32 %v438, %v1357
  %1359 = vmatmul.f32.gmra.mxu0 %v133
  %v1360 = vpop.f32.mrf.mxu0
  %v1361 = vadd.f32 %v438, %v1360
  %1362 = vmatmul.f32.gmra.mxu0 %v135
  %v1363 = vpop.f32.mrf.mxu0
  %v1364 = vadd.f32 %v438, %v1363
  %1365 = vmatmul.f32.gmra.mxu0 %v137
  %v1366 = vpop.f32.mrf.mxu0
  %v1367 = vadd.f32 %v438, %v1366
  %1368 = vmatmul.f32.gmra.mxu0 %v139
  %v1369 = vpop.f32.mrf.mxu0
  %v1370 = vadd.f32 %v438, %v1369
  %1371 = vmatmul.f32.gmra.mxu0 %v141
  %v1372 = vpop.f32.mrf.mxu0
  %v1373 = vadd.f32 %v438, %v1372
  %1374 = vmatmul.f32.gmra.mxu0 %v143
  %v1375 = vpop.f32.mrf.mxu0
  %v1376 = vadd.f32 %v438, %v1375
  %1377 = vmatmul.f32.gmra.mxu0 %v145
  %v1378 = vpop.f32.mrf.mxu0
  %v1379 = vadd.f32 %v438, %v1378
  %1380 = vmatmul.f32.gmra.mxu0 %v147
  %v1381 = vpop.f32.mrf.mxu0
  %v1382 = vadd.f32 %v438, %v1381
  %1383 = vmatmul.f32.gmra.mxu0 %v149
  %v1384 = vpop.f32.mrf.mxu0
  %v1385 = vadd.f32 %v438, %v1384
  %1386 = vmatmul.f32.gmra.mxu0 %v151
  %v1387 = vpop.f32.mrf.mxu0
  %v1388 = vadd.f32 %v438, %v1387
  %1389 = vmatmul.f32.gmra.mxu0 %v153
  %v1390 = vpop.f32.mrf.mxu0
  %v1391 = vadd.f32 %v438, %v1390
  %1392 = vmatmul.f32.gmra.mxu0 %v155
  %v1393 = vpop.f32.mrf.mxu0
  %v1394 = vadd.f32 %v438, %v1393
  %1395 = vmatmul.f32.gmra.mxu0 %v157
  %v1396 = vpop.f32.mrf.mxu0
  %v1397 = vadd.f32 %v438, %v1396
  %1398 = vmatmul.f32.gmra.mxu0 %v159
  %v1399 = vpop.f32.mrf.mxu0
  %v1400 = vadd.f32 %v438, %v1399
  %1401 = vmatmul.f32.gmra.mxu0 %v161
  %v1402 = vpop.f32.mrf.mxu0
  %v1403 = vadd.f32 %v438, %v1402
  %1404 = vmatmul.f32.gmra.mxu0 %v163
  %v1405 = vpop.f32.mrf.mxu0
  %v1406 = vadd.f32 %v438, %v1405
  %1407 = vmatmul.f32.gmra.mxu0 %v165
  %v1408 = vpop.f32.mrf.mxu0
  %v1409 = vadd.f32 %v438, %v1408
  %1410 = vmatmul.f32.gmra.mxu0 %v167
  %v1411 = vpop.f32.mrf.mxu0
  %v1412 = vadd.f32 %v438, %v1411
  %1413 = vmatmul.f32.gmra.mxu0 %v169
  %v1414 = vpop.f32.mrf.mxu0
  %v1415 = vadd.f32 %v438, %v1414
  %1416 = vmatmul.f32.gmra.mxu0 %v171
  %v1417 = vpop.f32.mrf.mxu0
  %v1418 = vadd.f32 %v438, %v1417
  %1419 = vmatmul.f32.gmra.mxu0 %v173
  %v1420 = vpop.f32.mrf.mxu0
  %v1421 = vadd.f32 %v438, %v1420
  %1422 = vmatmul.f32.gmra.mxu0 %v175
  %v1423 = vpop.f32.mrf.mxu0
  %v1424 = vadd.f32 %v438, %v1423
  %1425 = vmatmul.f32.gmra.mxu0 %v177
  %v1426 = vpop.f32.mrf.mxu0
  %v1427 = vadd.f32 %v438, %v1426
  %1428 = vmatmul.f32.gmra.mxu0 %v179
  %v1429 = vpop.f32.mrf.mxu0
  %v1430 = vadd.f32 %v438, %v1429
  %1431 = vmatmul.f32.gmra.mxu0 %v181
  %v1432 = vpop.f32.mrf.mxu0
  %v1433 = vadd.f32 %v438, %v1432
  %1434 = vmatmul.f32.gmra.mxu0 %v183
  %v1435 = vpop.f32.mrf.mxu0
  %v1436 = vadd.f32 %v438, %v1435
  %1437 = vmatmul.f32.gmra.mxu0 %v185
  %v1438 = vpop.f32.mrf.mxu0
  %v1439 = vadd.f32 %v438, %v1438
  %1440 = vmatmul.f32.gmra.mxu0 %v187
  %v1441 = vpop.f32.mrf.mxu0
  %v1442 = vadd.f32 %v438, %v1441
  %1443 = vmatmul.f32.gmra.mxu0 %v189
  %v1444 = vpop.f32.mrf.mxu0
  %v1445 = vadd.f32 %v438, %v1444
  %1446 = vmatmul.f32.gmra.mxu0 %v191
  %v1447 = vpop.f32.mrf.mxu0
  %v1448 = vadd.f32 %v438, %v1447
  %1449 = vmatmul.f32.gmra.mxu0 %v193
  %v1450 = vpop.f32.mrf.mxu0
  %v1451 = vadd.f32 %v438, %v1450
  %1452 = vmatmul.f32.gmra.mxu0 %v195
  %v1453 = vpop.f32.mrf.mxu0
  %v1454 = vadd.f32 %v438, %v1453
  %1455 = vmatmul.f32.gmra.mxu0 %v197
  %v1456 = vpop.f32.mrf.mxu0
  %v1457 = vadd.f32 %v438, %v1456
  %1458 = vmatmul.f32.gmra.mxu0 %v199
  %v1459 = vpop.f32.mrf.mxu0
  %v1460 = vadd.f32 %v438, %v1459
  %1461 = vmatmul.f32.gmra.mxu0 %v201
  %v1462 = vpop.f32.mrf.mxu0
  %v1463 = vadd.f32 %v438, %v1462
  %1464 = vmatmul.f32.gmra.mxu0 %v203
  %v1465 = vpop.f32.mrf.mxu0
  %v1466 = vadd.f32 %v438, %v1465
  %1467 = vmatmul.f32.gmra.mxu0 %v205
  %v1468 = vpop.f32.mrf.mxu0
  %v1469 = vadd.f32 %v438, %v1468
  %1470 = vmatmul.f32.gmra.mxu0 %v207
  %v1471 = vpop.f32.mrf.mxu0
  %v1472 = vadd.f32 %v438, %v1471
  %1473 = vmatmul.f32.gmra.mxu0 %v209
  %v1474 = vpop.f32.mrf.mxu0
  %v1475 = vadd.f32 %v438, %v1474
  %1476 = vmatmul.f32.gmra.mxu0 %v211
  %v1477 = vpop.f32.mrf.mxu0
  %v1478 = vadd.f32 %v438, %v1477
  %1479 = vmatmul.f32.gmra.mxu0 %v213
  %v1480 = vpop.f32.mrf.mxu0
  %v1481 = vadd.f32 %v438, %v1480
  %1482 = vmatmul.f32.gmra.mxu0 %v215
  %v1483 = vpop.f32.mrf.mxu0
  %v1484 = vadd.f32 %v438, %v1483
  %1485 = vmatmul.f32.gmra.mxu0 %v217
  %v1486 = vpop.f32.mrf.mxu0
  %v1487 = vadd.f32 %v438, %v1486
  %1488 = vmatmul.f32.gmra.mxu0 %v219
  %v1489 = vpop.f32.mrf.mxu0
  %v1490 = vadd.f32 %v438, %v1489
  %1491 = vmatmul.f32.gmra.mxu0 %v221
  %v1492 = vpop.f32.mrf.mxu0
  %v1493 = vadd.f32 %v438, %v1492
  %1494 = vmatmul.f32.gmra.mxu0 %v223
  %v1495 = vpop.f32.mrf.mxu0
  %v1496 = vadd.f32 %v438, %v1495
  %1497 = vmatmul.f32.gmra.mxu0 %v225
  %v1498 = vpop.f32.mrf.mxu0
  %v1499 = vadd.f32 %v438, %v1498
  %1500 = vmatmul.f32.gmra.mxu0 %v227
  %v1501 = vpop.f32.mrf.mxu0
  %v1502 = vadd.f32 %v438, %v1501
  %1503 = vmatmul.f32.gmra.mxu0 %v229
  %v1504 = vpop.f32.mrf.mxu0
  %v1505 = vadd.f32 %v438, %v1504
  %1506 = vmatmul.f32.gmra.mxu0 %v231
  %v1507 = vpop.f32.mrf.mxu0
  %v1508 = vadd.f32 %v438, %v1507
  %1509 = vmatmul.f32.gmra.mxu0 %v233
  %v1510 = vpop.f32.mrf.mxu0
  %v1511 = vadd.f32 %v438, %v1510
  %1512 = vmatmul.f32.gmra.mxu0 %v235
  %v1513 = vpop.f32.mrf.mxu0
  %v1514 = vadd.f32 %v438, %v1513
  %1515 = vmatmul.f32.gmra.mxu0 %v237
  %v1516 = vpop.f32.mrf.mxu0
  %v1517 = vadd.f32 %v438, %v1516
  %1518 = vmatmul.f32.gmra.mxu0 %v239
  %v1519 = vpop.f32.mrf.mxu0
  %v1520 = vadd.f32 %v438, %v1519
  %1521 = vmatmul.f32.gmra.mxu0 %v241
  %v1522 = vpop.f32.mrf.mxu0
  %v1523 = vadd.f32 %v438, %v1522
  %1524 = vmatmul.f32.gmra.mxu0 %v243
  %v1525 = vpop.f32.mrf.mxu0
  %v1526 = vadd.f32 %v438, %v1525
  %1527 = vmatmul.f32.gmra.mxu0 %v245
  %v1528 = vpop.f32.mrf.mxu0
  %v1529 = vadd.f32 %v438, %v1528
  %1530 = vmatmul.f32.gmra.mxu0 %v247
  %v1531 = vpop.f32.mrf.mxu0
  %v1532 = vadd.f32 %v438, %v1531
  %1533 = vmatmul.f32.gmra.mxu0 %v249
  %v1534 = vpop.f32.mrf.mxu0
  %v1535 = vadd.f32 %v438, %v1534
  %1536 = vmatmul.f32.gmra.mxu0 %v251
  %v1537 = vpop.f32.mrf.mxu0
  %v1538 = vadd.f32 %v438, %v1537
  %1539 = vmatmul.f32.gmra.mxu0 %v253
  %v1540 = vpop.f32.mrf.mxu0
  %v1541 = vadd.f32 %v438, %v1540
  %1542 = vmatmul.f32.gmra.mxu0 %v255
  %v1543 = vpop.f32.mrf.mxu0
  %v1544 = vadd.f32 %v438, %v1543
  %1545 = vmatmul.f32.gmra.mxu0 %v257
  %v1546 = vpop.f32.mrf.mxu0
  %v1547 = vadd.f32 %v438, %v1546
  %1548 = vmatmul.f32.gmra.mxu0 %v259
  %v1549 = vpop.f32.mrf.mxu0
  %v1550 = vadd.f32 %v438, %v1549
  %1551 = vmatmul.f32.gmra.mxu0 %v261
  %v1552 = vpop.f32.mrf.mxu0
  %v1553 = vadd.f32 %v438, %v1552
  %1554 = vmatmul.f32.gmra.mxu0 %v263
  %v1555 = vpop.f32.mrf.mxu0
  %v1556 = vadd.f32 %v438, %v1555
  %1557 = vmatmul.f32.gmra.mxu0 %v265
  %v1558 = vpop.f32.mrf.mxu0
  %v1559 = vadd.f32 %v438, %v1558
  %1560 = vmatmul.f32.gmra.mxu0 %v267
  %v1561 = vpop.f32.mrf.mxu0
  %v1562 = vadd.f32 %v438, %v1561
  %1563 = vmatmul.f32.gmra.mxu0 %v269
  %v1564 = vpop.f32.mrf.mxu0
  %v1565 = vadd.f32 %v438, %v1564
  %1566 = vmatmul.f32.gmra.mxu0 %v271
  %v1567 = vpop.f32.mrf.mxu0
  %v1568 = vadd.f32 %v438, %v1567
  %1569 = vmatmul.f32.gmra.mxu0 %v273
  %v1570 = vpop.f32.mrf.mxu0
  %v1571 = vadd.f32 %v438, %v1570
  %1572 = vmatmul.f32.gmra.mxu0 %v275
  %v1573 = vpop.f32.mrf.mxu0
  %v1574 = vadd.f32 %v438, %v1573
  %1575 = vmatmul.f32.gmra.mxu0 %v277
  %v1576 = vpop.f32.mrf.mxu0
  %v1577 = vadd.f32 %v438, %v1576
  %1578 = vmatmul.f32.gmra.mxu0 %v279
  %v1579 = vpop.f32.mrf.mxu0
  %v1580 = vadd.f32 %v438, %v1579
  %1581 = vmatmul.f32.gmra.mxu0 %v281
  %v1582 = vpop.f32.mrf.mxu0
  %v1583 = vadd.f32 %v438, %v1582
  %1584 = vmatmul.f32.gmra.mxu0 %v283
  %v1585 = vpop.f32.mrf.mxu0
  %v1586 = vadd.f32 %v438, %v1585
  %1587 = vmatmul.f32.gmra.mxu0 %v285
  %v1588 = vpop.f32.mrf.mxu0
  %v1589 = vadd.f32 %v438, %v1588
  %1590 = vmatmul.f32.gmra.mxu0 %v287
  %v1591 = vpop.f32.mrf.mxu0
  %v1592 = vadd.f32 %v438, %v1591
  %1593 = vmatmul.f32.gmra.mxu0 %v289
  %v1594 = vpop.f32.mrf.mxu0
  %v1595 = vadd.f32 %v438, %v1594
  %1596 = vmatmul.f32.gmra.mxu0 %v291
  %v1597 = vpop.f32.mrf.mxu0
  %v1598 = vadd.f32 %v438, %v1597
  %1599 = vmatmul.f32.gmra.mxu0 %v293
  %v1600 = vpop.f32.mrf.mxu0
  %v1601 = vadd.f32 %v438, %v1600
  %1602 = vmatmul.f32.gmra.mxu0 %v295
  %v1603 = vpop.f32.mrf.mxu0
  %v1604 = vadd.f32 %v438, %v1603
  %1605 = vmatmul.f32.gmra.mxu0 %v297
  %v1606 = vpop.f32.mrf.mxu0
  %v1607 = vadd.f32 %v438, %v1606
  %1608 = vmatmul.f32.gmra.mxu0 %v299
  %v1609 = vpop.f32.mrf.mxu0
  %v1610 = vadd.f32 %v438, %v1609
  %1611 = vmatmul.f32.gmra.mxu0 %v301
  %v1612 = vpop.f32.mrf.mxu0
  %v1613 = vadd.f32 %v438, %v1612
  %1614 = vmatmul.f32.gmra.mxu0 %v303
  %v1615 = vpop.f32.mrf.mxu0
  %v1616 = vadd.f32 %v438, %v1615
  %1617 = vmatmul.f32.gmra.mxu0 %v305
  %v1618 = vpop.f32.mrf.mxu0
  %v1619 = vadd.f32 %v438, %v1618
  %1620 = vdwg.mxu0
  %1621 = vmatpush.msra.mxu0 %v432
  %1622 = vmatpush.msra.mxu0 %v428
  %1623 = vmatpush.msra.mxu0 %v424
  %1624 = vmatpush.msra.mxu0 %v420
  %1625 = vmatpush.msra.mxu0 %v416
  %1626 = vmatpush.msra.mxu0 %v412
  %1627 = vmatpush.msra.mxu0 %v408
  %1628 = vmatpush.msra.mxu0 %v404
  %1629 = vmatpush.msra.mxu0 %v400
  %1630 = vmatpush.msra.mxu0 %v396
  %1631 = vmatpush.msra.mxu0 %v392
  %1632 = vmatpush.msra.mxu0 %v388
  %1633 = vmatpush.msra.mxu0 %v384
  %1634 = vmatpush.msra.mxu0 %v380
  %1635 = vmatpush.msra.mxu0 %v376
  %1636 = vmatpush.msra.mxu0 %v372
  %1637 = vmatmul.f32.gmra.mxu0 %v58
  %v1638 = vpop.f32.mrf.mxu0
  %v1639 = vadd.f32 %v1247, %v1638
  %1640 = vmatmul.f32.gmra.mxu0 %v60
  %v1641 = vpop.f32.mrf.mxu0
  %v1642 = vadd.f32 %v1250, %v1641
  %1643 = vmatmul.f32.gmra.mxu0 %v62
  %v1644 = vpop.f32.mrf.mxu0
  %v1645 = vadd.f32 %v1253, %v1644
  %1646 = vmatmul.f32.gmra.mxu0 %v64
  %v1647 = vpop.f32.mrf.mxu0
  %v1648 = vadd.f32 %v1256, %v1647
  %1649 = vmatmul.f32.gmra.mxu0 %v66
  %v1650 = vpop.f32.mrf.mxu0
  %v1651 = vadd.f32 %v1259, %v1650
  %1652 = vmatmul.f32.gmra.mxu0 %v68
  %v1653 = vpop.f32.mrf.mxu0
  %v1654 = vadd.f32 %v1262, %v1653
  %1655 = vmatmul.f32.gmra.mxu0 %v70
  %v1656 = vpop.f32.mrf.mxu0
  %v1657 = vadd.f32 %v1265, %v1656
  %1658 = vmatmul.f32.gmra.mxu0 %v72
  %v1659 = vpop.f32.mrf.mxu0
  %v1660 = vadd.f32 %v1268, %v1659
  %1661 = vmatmul.f32.gmra.mxu0 %v74
  %v1662 = vpop.f32.mrf.mxu0
  %v1663 = vadd.f32 %v1271, %v1662
  %1664 = vmatmul.f32.gmra.mxu0 %v76
  %v1665 = vpop.f32.mrf.mxu0
  %v1666 = vadd.f32 %v1274, %v1665
  %1667 = vmatmul.f32.gmra.mxu0 %v78
  %v1668 = vpop.f32.mrf.mxu0
  %v1669 = vadd.f32 %v1277, %v1668
  %1670 = vmatmul.f32.gmra.mxu0 %v80
  %v1671 = vpop.f32.mrf.mxu0
  %v1672 = vadd.f32 %v1280, %v1671
  %1673 = vmatmul.f32.gmra.mxu0 %v82
  %v1674 = vpop.f32.mrf.mxu0
  %v1675 = vadd.f32 %v1283, %v1674
  %1676 = vmatmul.f32.gmra.mxu0 %v84
  %v1677 = vpop.f32.mrf.mxu0
  %v1678 = vadd.f32 %v1286, %v1677
  %1679 = vmatmul.f32.gmra.mxu0 %v86
  %v1680 = vpop.f32.mrf.mxu0
  %v1681 = vadd.f32 %v1289, %v1680
  %1682 = vmatmul.f32.gmra.mxu0 %v88
  %v1683 = vpop.f32.mrf.mxu0
  %v1684 = vadd.f32 %v1292, %v1683
  %1685 = vmatmul.f32.gmra.mxu0 %v90
  %v1686 = vpop.f32.mrf.mxu0
  %v1687 = vadd.f32 %v1295, %v1686
  %1688 = vmatmul.f32.gmra.mxu0 %v92
  %v1689 = vpop.f32.mrf.mxu0
  %v1690 = vadd.f32 %v1298, %v1689
  %1691 = vmatmul.f32.gmra.mxu0 %v94
  %v1692 = vpop.f32.mrf.mxu0
  %v1693 = vadd.f32 %v1301, %v1692
  %1694 = vmatmul.f32.gmra.mxu0 %v96
  %v1695 = vpop.f32.mrf.mxu0
  %v1696 = vadd.f32 %v1304, %v1695
  %1697 = vmatmul.f32.gmra.mxu0 %v98
  %v1698 = vpop.f32.mrf.mxu0
  %v1699 = vadd.f32 %v1307, %v1698
  %1700 = vmatmul.f32.gmra.mxu0 %v100
  %v1701 = vpop.f32.mrf.mxu0
  %v1702 = vadd.f32 %v1310, %v1701
  %1703 = vmatmul.f32.gmra.mxu0 %v102
  %v1704 = vpop.f32.mrf.mxu0
  %v1705 = vadd.f32 %v1313, %v1704
  %1706 = vmatmul.f32.gmra.mxu0 %v104
  %v1707 = vpop.f32.mrf.mxu0
  %v1708 = vadd.f32 %v1316, %v1707
  %1709 = vmatmul.f32.gmra.mxu0 %v106
  %v1710 = vpop.f32.mrf.mxu0
  %v1711 = vadd.f32 %v1319, %v1710
  %1712 = vmatmul.f32.gmra.mxu0 %v108
  %v1713 = vpop.f32.mrf.mxu0
  %v1714 = vadd.f32 %v1322, %v1713
  %1715 = vmatmul.f32.gmra.mxu0 %v110
  %v1716 = vpop.f32.mrf.mxu0
  %v1717 = vadd.f32 %v1325, %v1716
  %1718 = vmatmul.f32.gmra.mxu0 %v112
  %v1719 = vpop.f32.mrf.mxu0
  %v1720 = vadd.f32 %v1328, %v1719
  %1721 = vmatmul.f32.gmra.mxu0 %v114
  %v1722 = vpop.f32.mrf.mxu0
  %v1723 = vadd.f32 %v1331, %v1722
  %1724 = vmatmul.f32.gmra.mxu0 %v116
  %v1725 = vpop.f32.mrf.mxu0
  %v1726 = vadd.f32 %v1334, %v1725
  %1727 = vmatmul.f32.gmra.mxu0 %v118
  %v1728 = vpop.f32.mrf.mxu0
  %v1729 = vadd.f32 %v1337, %v1728
  %1730 = vmatmul.f32.gmra.mxu0 %v120
  %v1731 = vpop.f32.mrf.mxu0
  %v1732 = vadd.f32 %v1340, %v1731
  %1733 = vmatmul.f32.gmra.mxu0 %v122
  %v1734 = vpop.f32.mrf.mxu0
  %v1735 = vadd.f32 %v1343, %v1734
  %1736 = vmatmul.f32.gmra.mxu0 %v124
  %v1737 = vpop.f32.mrf.mxu0
  %v1738 = vadd.f32 %v1346, %v1737
  %1739 = vmatmul.f32.gmra.mxu0 %v126
  %v1740 = vpop.f32.mrf.mxu0
  %v1741 = vadd.f32 %v1349, %v1740
  %1742 = vmatmul.f32.gmra.mxu0 %v128
  %v1743 = vpop.f32.mrf.mxu0
  %v1744 = vadd.f32 %v1352, %v1743
  %1745 = vmatmul.f32.gmra.mxu0 %v130
  %v1746 = vpop.f32.mrf.mxu0
  %v1747 = vadd.f32 %v1355, %v1746
  %1748 = vmatmul.f32.gmra.mxu0 %v132
  %v1749 = vpop.f32.mrf.mxu0
  %v1750 = vadd.f32 %v1358, %v1749
  %1751 = vmatmul.f32.gmra.mxu0 %v134
  %v1752 = vpop.f32.mrf.mxu0
  %v1753 = vadd.f32 %v1361, %v1752
  %1754 = vmatmul.f32.gmra.mxu0 %v136
  %v1755 = vpop.f32.mrf.mxu0
  %v1756 = vadd.f32 %v1364, %v1755
  %1757 = vmatmul.f32.gmra.mxu0 %v138
  %v1758 = vpop.f32.mrf.mxu0
  %v1759 = vadd.f32 %v1367, %v1758
  %1760 = vmatmul.f32.gmra.mxu0 %v140
  %v1761 = vpop.f32.mrf.mxu0
  %v1762 = vadd.f32 %v1370, %v1761
  %1763 = vmatmul.f32.gmra.mxu0 %v142
  %v1764 = vpop.f32.mrf.mxu0
  %v1765 = vadd.f32 %v1373, %v1764
  %1766 = vmatmul.f32.gmra.mxu0 %v144
  %v1767 = vpop.f32.mrf.mxu0
  %v1768 = vadd.f32 %v1376, %v1767
  %1769 = vmatmul.f32.gmra.mxu0 %v146
  %v1770 = vpop.f32.mrf.mxu0
  %v1771 = vadd.f32 %v1379, %v1770
  %1772 = vmatmul.f32.gmra.mxu0 %v148
  %v1773 = vpop.f32.mrf.mxu0
  %v1774 = vadd.f32 %v1382, %v1773
  %1775 = vmatmul.f32.gmra.mxu0 %v150
  %v1776 = vpop.f32.mrf.mxu0
  %v1777 = vadd.f32 %v1385, %v1776
  %1778 = vmatmul.f32.gmra.mxu0 %v152
  %v1779 = vpop.f32.mrf.mxu0
  %v1780 = vadd.f32 %v1388, %v1779
  %1781 = vmatmul.f32.gmra.mxu0 %v154
  %v1782 = vpop.f32.mrf.mxu0
  %v1783 = vadd.f32 %v1391, %v1782
  %1784 = vmatmul.f32.gmra.mxu0 %v156
  %v1785 = vpop.f32.mrf.mxu0
  %v1786 = vadd.f32 %v1394, %v1785
  %1787 = vmatmul.f32.gmra.mxu0 %v158
  %v1788 = vpop.f32.mrf.mxu0
  %v1789 = vadd.f32 %v1397, %v1788
  %1790 = vmatmul.f32.gmra.mxu0 %v160
  %v1791 = vpop.f32.mrf.mxu0
  %v1792 = vadd.f32 %v1400, %v1791
  %1793 = vmatmul.f32.gmra.mxu0 %v162
  %v1794 = vpop.f32.mrf.mxu0
  %v1795 = vadd.f32 %v1403, %v1794
  %1796 = vmatmul.f32.gmra.mxu0 %v164
  %v1797 = vpop.f32.mrf.mxu0
  %v1798 = vadd.f32 %v1406, %v1797
  %1799 = vmatmul.f32.gmra.mxu0 %v166
  %v1800 = vpop.f32.mrf.mxu0
  %v1801 = vadd.f32 %v1409, %v1800
  %1802 = vmatmul.f32.gmra.mxu0 %v168
  %v1803 = vpop.f32.mrf.mxu0
  %v1804 = vadd.f32 %v1412, %v1803
  %1805 = vmatmul.f32.gmra.mxu0 %v170
  %v1806 = vpop.f32.mrf.mxu0
  %v1807 = vadd.f32 %v1415, %v1806
  %1808 = vmatmul.f32.gmra.mxu0 %v172
  %v1809 = vpop.f32.mrf.mxu0
  %v1810 = vadd.f32 %v1418, %v1809
  %1811 = vmatmul.f32.gmra.mxu0 %v174
  %v1812 = vpop.f32.mrf.mxu0
  %v1813 = vadd.f32 %v1421, %v1812
  %1814 = vmatmul.f32.gmra.mxu0 %v176
  %v1815 = vpop.f32.mrf.mxu0
  %v1816 = vadd.f32 %v1424, %v1815
  %1817 = vmatmul.f32.gmra.mxu0 %v178
  %v1818 = vpop.f32.mrf.mxu0
  %v1819 = vadd.f32 %v1427, %v1818
  %1820 = vmatmul.f32.gmra.mxu0 %v180
  %v1821 = vpop.f32.mrf.mxu0
  %v1822 = vadd.f32 %v1430, %v1821
  %1823 = vmatmul.f32.gmra.mxu0 %v182
  %v1824 = vpop.f32.mrf.mxu0
  %v1825 = vadd.f32 %v1433, %v1824
  %1826 = vmatmul.f32.gmra.mxu0 %v184
  %v1827 = vpop.f32.mrf.mxu0
  %v1828 = vadd.f32 %v1436, %v1827
  %1829 = vmatmul.f32.gmra.mxu0 %v186
  %v1830 = vpop.f32.mrf.mxu0
  %v1831 = vadd.f32 %v1439, %v1830
  %1832 = vmatmul.f32.gmra.mxu0 %v188
  %v1833 = vpop.f32.mrf.mxu0
  %v1834 = vadd.f32 %v1442, %v1833
  %1835 = vmatmul.f32.gmra.mxu0 %v190
  %v1836 = vpop.f32.mrf.mxu0
  %v1837 = vadd.f32 %v1445, %v1836
  %1838 = vmatmul.f32.gmra.mxu0 %v192
  %v1839 = vpop.f32.mrf.mxu0
  %v1840 = vadd.f32 %v1448, %v1839
  %1841 = vmatmul.f32.gmra.mxu0 %v194
  %v1842 = vpop.f32.mrf.mxu0
  %v1843 = vadd.f32 %v1451, %v1842
  %1844 = vmatmul.f32.gmra.mxu0 %v196
  %v1845 = vpop.f32.mrf.mxu0
  %v1846 = vadd.f32 %v1454, %v1845
  %1847 = vmatmul.f32.gmra.mxu0 %v198
  %v1848 = vpop.f32.mrf.mxu0
  %v1849 = vadd.f32 %v1457, %v1848
  %1850 = vmatmul.f32.gmra.mxu0 %v200
  %v1851 = vpop.f32.mrf.mxu0
  %v1852 = vadd.f32 %v1460, %v1851
  %1853 = vmatmul.f32.gmra.mxu0 %v202
  %v1854 = vpop.f32.mrf.mxu0
  %v1855 = vadd.f32 %v1463, %v1854
  %1856 = vmatmul.f32.gmra.mxu0 %v204
  %v1857 = vpop.f32.mrf.mxu0
  %v1858 = vadd.f32 %v1466, %v1857
  %1859 = vmatmul.f32.gmra.mxu0 %v206
  %v1860 = vpop.f32.mrf.mxu0
  %v1861 = vadd.f32 %v1469, %v1860
  %1862 = vmatmul.f32.gmra.mxu0 %v208
  %v1863 = vpop.f32.mrf.mxu0
  %v1864 = vadd.f32 %v1472, %v1863
  %1865 = vmatmul.f32.gmra.mxu0 %v210
  %v1866 = vpop.f32.mrf.mxu0
  %v1867 = vadd.f32 %v1475, %v1866
  %1868 = vmatmul.f32.gmra.mxu0 %v212
  %v1869 = vpop.f32.mrf.mxu0
  %v1870 = vadd.f32 %v1478, %v1869
  %1871 = vmatmul.f32.gmra.mxu0 %v214
  %v1872 = vpop.f32.mrf.mxu0
  %v1873 = vadd.f32 %v1481, %v1872
  %1874 = vmatmul.f32.gmra.mxu0 %v216
  %v1875 = vpop.f32.mrf.mxu0
  %v1876 = vadd.f32 %v1484, %v1875
  %1877 = vmatmul.f32.gmra.mxu0 %v218
  %v1878 = vpop.f32.mrf.mxu0
  %v1879 = vadd.f32 %v1487, %v1878
  %1880 = vmatmul.f32.gmra.mxu0 %v220
  %v1881 = vpop.f32.mrf.mxu0
  %v1882 = vadd.f32 %v1490, %v1881
  %1883 = vmatmul.f32.gmra.mxu0 %v222
  %v1884 = vpop.f32.mrf.mxu0
  %v1885 = vadd.f32 %v1493, %v1884
  %1886 = vmatmul.f32.gmra.mxu0 %v224
  %v1887 = vpop.f32.mrf.mxu0
  %v1888 = vadd.f32 %v1496, %v1887
  %1889 = vmatmul.f32.gmra.mxu0 %v226
  %v1890 = vpop.f32.mrf.mxu0
  %v1891 = vadd.f32 %v1499, %v1890
  %1892 = vmatmul.f32.gmra.mxu0 %v228
  %v1893 = vpop.f32.mrf.mxu0
  %v1894 = vadd.f32 %v1502, %v1893
  %1895 = vmatmul.f32.gmra.mxu0 %v230
  %v1896 = vpop.f32.mrf.mxu0
  %v1897 = vadd.f32 %v1505, %v1896
  %1898 = vmatmul.f32.gmra.mxu0 %v232
  %v1899 = vpop.f32.mrf.mxu0
  %v1900 = vadd.f32 %v1508, %v1899
  %1901 = vmatmul.f32.gmra.mxu0 %v234
  %v1902 = vpop.f32.mrf.mxu0
  %v1903 = vadd.f32 %v1511, %v1902
  %1904 = vmatmul.f32.gmra.mxu0 %v236
  %v1905 = vpop.f32.mrf.mxu0
  %v1906 = vadd.f32 %v1514, %v1905
  %1907 = vmatmul.f32.gmra.mxu0 %v238
  %v1908 = vpop.f32.mrf.mxu0
  %v1909 = vadd.f32 %v1517, %v1908
  %1910 = vmatmul.f32.gmra.mxu0 %v240
  %v1911 = vpop.f32.mrf.mxu0
  %v1912 = vadd.f32 %v1520, %v1911
  %1913 = vmatmul.f32.gmra.mxu0 %v242
  %v1914 = vpop.f32.mrf.mxu0
  %v1915 = vadd.f32 %v1523, %v1914
  %1916 = vmatmul.f32.gmra.mxu0 %v244
  %v1917 = vpop.f32.mrf.mxu0
  %v1918 = vadd.f32 %v1526, %v1917
  %1919 = vmatmul.f32.gmra.mxu0 %v246
  %v1920 = vpop.f32.mrf.mxu0
  %v1921 = vadd.f32 %v1529, %v1920
  %1922 = vmatmul.f32.gmra.mxu0 %v248
  %v1923 = vpop.f32.mrf.mxu0
  %v1924 = vadd.f32 %v1532, %v1923
  %1925 = vmatmul.f32.gmra.mxu0 %v250
  %v1926 = vpop.f32.mrf.mxu0
  %v1927 = vadd.f32 %v1535, %v1926
  %1928 = vmatmul.f32.gmra.mxu0 %v252
  %v1929 = vpop.f32.mrf.mxu0
  %v1930 = vadd.f32 %v1538, %v1929
  %1931 = vmatmul.f32.gmra.mxu0 %v254
  %v1932 = vpop.f32.mrf.mxu0
  %v1933 = vadd.f32 %v1541, %v1932
  %1934 = vmatmul.f32.gmra.mxu0 %v256
  %v1935 = vpop.f32.mrf.mxu0
  %v1936 = vadd.f32 %v1544, %v1935
  %1937 = vmatmul.f32.gmra.mxu0 %v258
  %v1938 = vpop.f32.mrf.mxu0
  %v1939 = vadd.f32 %v1547, %v1938
  %1940 = vmatmul.f32.gmra.mxu0 %v260
  %v1941 = vpop.f32.mrf.mxu0
  %v1942 = vadd.f32 %v1550, %v1941
  %1943 = vmatmul.f32.gmra.mxu0 %v262
  %v1944 = vpop.f32.mrf.mxu0
  %v1945 = vadd.f32 %v1553, %v1944
  %1946 = vmatmul.f32.gmra.mxu0 %v264
  %v1947 = vpop.f32.mrf.mxu0
  %v1948 = vadd.f32 %v1556, %v1947
  %1949 = vmatmul.f32.gmra.mxu0 %v266
  %v1950 = vpop.f32.mrf.mxu0
  %v1951 = vadd.f32 %v1559, %v1950
  %1952 = vmatmul.f32.gmra.mxu0 %v268
  %v1953 = vpop.f32.mrf.mxu0
  %v1954 = vadd.f32 %v1562, %v1953
  %1955 = vmatmul.f32.gmra.mxu0 %v270
  %v1956 = vpop.f32.mrf.mxu0
  %v1957 = vadd.f32 %v1565, %v1956
  %1958 = vmatmul.f32.gmra.mxu0 %v272
  %v1959 = vpop.f32.mrf.mxu0
  %v1960 = vadd.f32 %v1568, %v1959
  %1961 = vmatmul.f32.gmra.mxu0 %v274
  %v1962 = vpop.f32.mrf.mxu0
  %v1963 = vadd.f32 %v1571, %v1962
  %1964 = vmatmul.f32.gmra.mxu0 %v276
  %v1965 = vpop.f32.mrf.mxu0
  %v1966 = vadd.f32 %v1574, %v1965
  %1967 = vmatmul.f32.gmra.mxu0 %v278
  %v1968 = vpop.f32.mrf.mxu0
  %v1969 = vadd.f32 %v1577, %v1968
  %1970 = vmatmul.f32.gmra.mxu0 %v280
  %v1971 = vpop.f32.mrf.mxu0
  %v1972 = vadd.f32 %v1580, %v1971
  %1973 = vmatmul.f32.gmra.mxu0 %v282
  %v1974 = vpop.f32.mrf.mxu0
  %v1975 = vadd.f32 %v1583, %v1974
  %1976 = vmatmul.f32.gmra.mxu0 %v284
  %v1977 = vpop.f32.mrf.mxu0
  %v1978 = vadd.f32 %v1586, %v1977
  %1979 = vmatmul.f32.gmra.mxu0 %v286
  %v1980 = vpop.f32.mrf.mxu0
  %v1981 = vadd.f32 %v1589, %v1980
  %1982 = vmatmul.f32.gmra.mxu0 %v288
  %v1983 = vpop.f32.mrf.mxu0
  %v1984 = vadd.f32 %v1592, %v1983
  %1985 = vmatmul.f32.gmra.mxu0 %v290
  %v1986 = vpop.f32.mrf.mxu0
  %v1987 = vadd.f32 %v1595, %v1986
  %1988 = vmatmul.f32.gmra.mxu0 %v292
  %v1989 = vpop.f32.mrf.mxu0
  %v1990 = vadd.f32 %v1598, %v1989
  %1991 = vmatmul.f32.gmra.mxu0 %v294
  %v1992 = vpop.f32.mrf.mxu0
  %v1993 = vadd.f32 %v1601, %v1992
  %1994 = vmatmul.f32.gmra.mxu0 %v296
  %v1995 = vpop.f32.mrf.mxu0
  %v1996 = vadd.f32 %v1604, %v1995
  %1997 = vmatmul.f32.gmra.mxu0 %v298
  %v1998 = vpop.f32.mrf.mxu0
  %v1999 = vadd.f32 %v1607, %v1998
  %2000 = vmatmul.f32.gmra.mxu0 %v300
  %v2001 = vpop.f32.mrf.mxu0
  %v2002 = vadd.f32 %v1610, %v2001
  %2003 = vmatmul.f32.gmra.mxu0 %v302
  %v2004 = vpop.f32.mrf.mxu0
  %v2005 = vadd.f32 %v1613, %v2004
  %2006 = vmatmul.f32.gmra.mxu0 %v304
  %v2007 = vpop.f32.mrf.mxu0
  %v2008 = vadd.f32 %v1616, %v2007
  %2009 = vmatmul.f32.gmra.mxu0 %v306
  %v2010 = vpop.f32.mrf.mxu0
  %v2011 = vadd.f32 %v1619, %v2010
  %2012 = vdwg.mxu0
  %2013 = vmatpush.msra.mxu0 %v369
  %2014 = vmatpush.msra.mxu0 %v365
  %2015 = vmatpush.msra.mxu0 %v361
  %2016 = vmatpush.msra.mxu0 %v357
  %2017 = vmatpush.msra.mxu0 %v353
  %2018 = vmatpush.msra.mxu0 %v349
  %2019 = vmatpush.msra.mxu0 %v345
  %2020 = vmatpush.msra.mxu0 %v341
  %2021 = vmatpush.msra.mxu0 %v337
  %2022 = vmatpush.msra.mxu0 %v333
  %2023 = vmatpush.msra.mxu0 %v329
  %2024 = vmatpush.msra.mxu0 %v325
  %2025 = vmatpush.msra.mxu0 %v321
  %2026 = vmatpush.msra.mxu0 %v317
  %2027 = vmatpush.msra.mxu0 %v313
  %2028 = vmatpush.msra.mxu0 %v309
  %2029 = vmatmul.f32.gmra.mxu0 %v57
  %v2030 = vpop.f32.mrf.mxu0
  %v2031 = vadd.f32 %v439, %v2030
  %2032 = vmatmul.f32.gmra.mxu0 %v59
  %v2033 = vpop.f32.mrf.mxu0
  %v2034 = vadd.f32 %v439, %v2033
  %2035 = vmatmul.f32.gmra.mxu0 %v61
  %v2036 = vpop.f32.mrf.mxu0
  %v2037 = vadd.f32 %v439, %v2036
  %2038 = vmatmul.f32.gmra.mxu0 %v63
  %v2039 = vpop.f32.mrf.mxu0
  %v2040 = vadd.f32 %v439, %v2039
  %2041 = vmatmul.f32.gmra.mxu0 %v65
  %v2042 = vpop.f32.mrf.mxu0
  %v2043 = vadd.f32 %v439, %v2042
  %2044 = vmatmul.f32.gmra.mxu0 %v67
  %v2045 = vpop.f32.mrf.mxu0
  %v2046 = vadd.f32 %v439, %v2045
  %2047 = vmatmul.f32.gmra.mxu0 %v69
  %v2048 = vpop.f32.mrf.mxu0
  %v2049 = vadd.f32 %v439, %v2048
  %2050 = vmatmul.f32.gmra.mxu0 %v71
  %v2051 = vpop.f32.mrf.mxu0
  %v2052 = vadd.f32 %v439, %v2051
  %2053 = vmatmul.f32.gmra.mxu0 %v73
  %v2054 = vpop.f32.mrf.mxu0
  %v2055 = vadd.f32 %v439, %v2054
  %2056 = vmatmul.f32.gmra.mxu0 %v75
  %v2057 = vpop.f32.mrf.mxu0
  %v2058 = vadd.f32 %v439, %v2057
  %2059 = vmatmul.f32.gmra.mxu0 %v77
  %v2060 = vpop.f32.mrf.mxu0
  %v2061 = vadd.f32 %v439, %v2060
  %2062 = vmatmul.f32.gmra.mxu0 %v79
  %v2063 = vpop.f32.mrf.mxu0
  %v2064 = vadd.f32 %v439, %v2063
  %2065 = vmatmul.f32.gmra.mxu0 %v81
  %v2066 = vpop.f32.mrf.mxu0
  %v2067 = vadd.f32 %v439, %v2066
  %2068 = vmatmul.f32.gmra.mxu0 %v83
  %v2069 = vpop.f32.mrf.mxu0
  %v2070 = vadd.f32 %v439, %v2069
  %2071 = vmatmul.f32.gmra.mxu0 %v85
  %v2072 = vpop.f32.mrf.mxu0
  %v2073 = vadd.f32 %v439, %v2072
  %2074 = vmatmul.f32.gmra.mxu0 %v87
  %v2075 = vpop.f32.mrf.mxu0
  %v2076 = vadd.f32 %v439, %v2075
  %2077 = vmatmul.f32.gmra.mxu0 %v89
  %v2078 = vpop.f32.mrf.mxu0
  %v2079 = vadd.f32 %v439, %v2078
  %2080 = vmatmul.f32.gmra.mxu0 %v91
  %v2081 = vpop.f32.mrf.mxu0
  %v2082 = vadd.f32 %v439, %v2081
  %2083 = vmatmul.f32.gmra.mxu0 %v93
  %v2084 = vpop.f32.mrf.mxu0
  %v2085 = vadd.f32 %v439, %v2084
  %2086 = vmatmul.f32.gmra.mxu0 %v95
  %v2087 = vpop.f32.mrf.mxu0
  %v2088 = vadd.f32 %v439, %v2087
  %2089 = vmatmul.f32.gmra.mxu0 %v97
  %v2090 = vpop.f32.mrf.mxu0
  %v2091 = vadd.f32 %v439, %v2090
  %2092 = vmatmul.f32.gmra.mxu0 %v99
  %v2093 = vpop.f32.mrf.mxu0
  %v2094 = vadd.f32 %v439, %v2093
  %2095 = vmatmul.f32.gmra.mxu0 %v101
  %v2096 = vpop.f32.mrf.mxu0
  %v2097 = vadd.f32 %v439, %v2096
  %2098 = vmatmul.f32.gmra.mxu0 %v103
  %v2099 = vpop.f32.mrf.mxu0
  %v2100 = vadd.f32 %v439, %v2099
  %2101 = vmatmul.f32.gmra.mxu0 %v105
  %v2102 = vpop.f32.mrf.mxu0
  %v2103 = vadd.f32 %v439, %v2102
  %2104 = vmatmul.f32.gmra.mxu0 %v107
  %v2105 = vpop.f32.mrf.mxu0
  %v2106 = vadd.f32 %v439, %v2105
  %2107 = vmatmul.f32.gmra.mxu0 %v109
  %v2108 = vpop.f32.mrf.mxu0
  %v2109 = vadd.f32 %v439, %v2108
  %2110 = vmatmul.f32.gmra.mxu0 %v111
  %v2111 = vpop.f32.mrf.mxu0
  %v2112 = vadd.f32 %v439, %v2111
  %2113 = vmatmul.f32.gmra.mxu0 %v113
  %v2114 = vpop.f32.mrf.mxu0
  %v2115 = vadd.f32 %v439, %v2114
  %2116 = vmatmul.f32.gmra.mxu0 %v115
  %v2117 = vpop.f32.mrf.mxu0
  %v2118 = vadd.f32 %v439, %v2117
  %2119 = vmatmul.f32.gmra.mxu0 %v117
  %v2120 = vpop.f32.mrf.mxu0
  %v2121 = vadd.f32 %v439, %v2120
  %2122 = vmatmul.f32.gmra.mxu0 %v119
  %v2123 = vpop.f32.mrf.mxu0
  %v2124 = vadd.f32 %v439, %v2123
  %2125 = vmatmul.f32.gmra.mxu0 %v121
  %v2126 = vpop.f32.mrf.mxu0
  %v2127 = vadd.f32 %v439, %v2126
  %2128 = vmatmul.f32.gmra.mxu0 %v123
  %v2129 = vpop.f32.mrf.mxu0
  %v2130 = vadd.f32 %v439, %v2129
  %2131 = vmatmul.f32.gmra.mxu0 %v125
  %v2132 = vpop.f32.mrf.mxu0
  %v2133 = vadd.f32 %v439, %v2132
  %2134 = vmatmul.f32.gmra.mxu0 %v127
  %v2135 = vpop.f32.mrf.mxu0
  %v2136 = vadd.f32 %v439, %v2135
  %2137 = vmatmul.f32.gmra.mxu0 %v129
  %v2138 = vpop.f32.mrf.mxu0
  %v2139 = vadd.f32 %v439, %v2138
  %2140 = vmatmul.f32.gmra.mxu0 %v131
  %v2141 = vpop.f32.mrf.mxu0
  %v2142 = vadd.f32 %v439, %v2141
  %2143 = vmatmul.f32.gmra.mxu0 %v133
  %v2144 = vpop.f32.mrf.mxu0
  %v2145 = vadd.f32 %v439, %v2144
  %2146 = vmatmul.f32.gmra.mxu0 %v135
  %v2147 = vpop.f32.mrf.mxu0
  %v2148 = vadd.f32 %v439, %v2147
  %2149 = vmatmul.f32.gmra.mxu0 %v137
  %v2150 = vpop.f32.mrf.mxu0
  %v2151 = vadd.f32 %v439, %v2150
  %2152 = vmatmul.f32.gmra.mxu0 %v139
  %v2153 = vpop.f32.mrf.mxu0
  %v2154 = vadd.f32 %v439, %v2153
  %2155 = vmatmul.f32.gmra.mxu0 %v141
  %v2156 = vpop.f32.mrf.mxu0
  %v2157 = vadd.f32 %v439, %v2156
  %2158 = vmatmul.f32.gmra.mxu0 %v143
  %v2159 = vpop.f32.mrf.mxu0
  %v2160 = vadd.f32 %v439, %v2159
  %2161 = vmatmul.f32.gmra.mxu0 %v145
  %v2162 = vpop.f32.mrf.mxu0
  %v2163 = vadd.f32 %v439, %v2162
  %2164 = vmatmul.f32.gmra.mxu0 %v147
  %v2165 = vpop.f32.mrf.mxu0
  %v2166 = vadd.f32 %v439, %v2165
  %2167 = vmatmul.f32.gmra.mxu0 %v149
  %v2168 = vpop.f32.mrf.mxu0
  %v2169 = vadd.f32 %v439, %v2168
  %2170 = vmatmul.f32.gmra.mxu0 %v151
  %v2171 = vpop.f32.mrf.mxu0
  %v2172 = vadd.f32 %v439, %v2171
  %2173 = vmatmul.f32.gmra.mxu0 %v153
  %v2174 = vpop.f32.mrf.mxu0
  %v2175 = vadd.f32 %v439, %v2174
  %2176 = vmatmul.f32.gmra.mxu0 %v155
  %v2177 = vpop.f32.mrf.mxu0
  %v2178 = vadd.f32 %v439, %v2177
  %2179 = vmatmul.f32.gmra.mxu0 %v157
  %v2180 = vpop.f32.mrf.mxu0
  %v2181 = vadd.f32 %v439, %v2180
  %2182 = vmatmul.f32.gmra.mxu0 %v159
  %v2183 = vpop.f32.mrf.mxu0
  %v2184 = vadd.f32 %v439, %v2183
  %2185 = vmatmul.f32.gmra.mxu0 %v161
  %v2186 = vpop.f32.mrf.mxu0
  %v2187 = vadd.f32 %v439, %v2186
  %2188 = vmatmul.f32.gmra.mxu0 %v163
  %v2189 = vpop.f32.mrf.mxu0
  %v2190 = vadd.f32 %v439, %v2189
  %2191 = vmatmul.f32.gmra.mxu0 %v165
  %v2192 = vpop.f32.mrf.mxu0
  %v2193 = vadd.f32 %v439, %v2192
  %2194 = vmatmul.f32.gmra.mxu0 %v167
  %v2195 = vpop.f32.mrf.mxu0
  %v2196 = vadd.f32 %v439, %v2195
  %2197 = vmatmul.f32.gmra.mxu0 %v169
  %v2198 = vpop.f32.mrf.mxu0
  %v2199 = vadd.f32 %v439, %v2198
  %2200 = vmatmul.f32.gmra.mxu0 %v171
  %v2201 = vpop.f32.mrf.mxu0
  %v2202 = vadd.f32 %v439, %v2201
  %2203 = vmatmul.f32.gmra.mxu0 %v173
  %v2204 = vpop.f32.mrf.mxu0
  %v2205 = vadd.f32 %v439, %v2204
  %2206 = vmatmul.f32.gmra.mxu0 %v175
  %v2207 = vpop.f32.mrf.mxu0
  %v2208 = vadd.f32 %v439, %v2207
  %2209 = vmatmul.f32.gmra.mxu0 %v177
  %v2210 = vpop.f32.mrf.mxu0
  %v2211 = vadd.f32 %v439, %v2210
  %2212 = vmatmul.f32.gmra.mxu0 %v179
  %v2213 = vpop.f32.mrf.mxu0
  %v2214 = vadd.f32 %v439, %v2213
  %2215 = vmatmul.f32.gmra.mxu0 %v181
  %v2216 = vpop.f32.mrf.mxu0
  %v2217 = vadd.f32 %v439, %v2216
  %2218 = vmatmul.f32.gmra.mxu0 %v183
  %v2219 = vpop.f32.mrf.mxu0
  %v2220 = vadd.f32 %v439, %v2219
  %2221 = vmatmul.f32.gmra.mxu0 %v185
  %v2222 = vpop.f32.mrf.mxu0
  %v2223 = vadd.f32 %v439, %v2222
  %2224 = vmatmul.f32.gmra.mxu0 %v187
  %v2225 = vpop.f32.mrf.mxu0
  %v2226 = vadd.f32 %v439, %v2225
  %2227 = vmatmul.f32.gmra.mxu0 %v189
  %v2228 = vpop.f32.mrf.mxu0
  %v2229 = vadd.f32 %v439, %v2228
  %2230 = vmatmul.f32.gmra.mxu0 %v191
  %v2231 = vpop.f32.mrf.mxu0
  %v2232 = vadd.f32 %v439, %v2231
  %2233 = vmatmul.f32.gmra.mxu0 %v193
  %v2234 = vpop.f32.mrf.mxu0
  %v2235 = vadd.f32 %v439, %v2234
  %2236 = vmatmul.f32.gmra.mxu0 %v195
  %v2237 = vpop.f32.mrf.mxu0
  %v2238 = vadd.f32 %v439, %v2237
  %2239 = vmatmul.f32.gmra.mxu0 %v197
  %v2240 = vpop.f32.mrf.mxu0
  %v2241 = vadd.f32 %v439, %v2240
  %2242 = vmatmul.f32.gmra.mxu0 %v199
  %v2243 = vpop.f32.mrf.mxu0
  %v2244 = vadd.f32 %v439, %v2243
  %2245 = vmatmul.f32.gmra.mxu0 %v201
  %v2246 = vpop.f32.mrf.mxu0
  %v2247 = vadd.f32 %v439, %v2246
  %2248 = vmatmul.f32.gmra.mxu0 %v203
  %v2249 = vpop.f32.mrf.mxu0
  %v2250 = vadd.f32 %v439, %v2249
  %2251 = vmatmul.f32.gmra.mxu0 %v205
  %v2252 = vpop.f32.mrf.mxu0
  %v2253 = vadd.f32 %v439, %v2252
  %2254 = vmatmul.f32.gmra.mxu0 %v207
  %v2255 = vpop.f32.mrf.mxu0
  %v2256 = vadd.f32 %v439, %v2255
  %2257 = vmatmul.f32.gmra.mxu0 %v209
  %v2258 = vpop.f32.mrf.mxu0
  %v2259 = vadd.f32 %v439, %v2258
  %2260 = vmatmul.f32.gmra.mxu0 %v211
  %v2261 = vpop.f32.mrf.mxu0
  %v2262 = vadd.f32 %v439, %v2261
  %2263 = vmatmul.f32.gmra.mxu0 %v213
  %v2264 = vpop.f32.mrf.mxu0
  %v2265 = vadd.f32 %v439, %v2264
  %2266 = vmatmul.f32.gmra.mxu0 %v215
  %v2267 = vpop.f32.mrf.mxu0
  %v2268 = vadd.f32 %v439, %v2267
  %2269 = vmatmul.f32.gmra.mxu0 %v217
  %v2270 = vpop.f32.mrf.mxu0
  %v2271 = vadd.f32 %v439, %v2270
  %2272 = vmatmul.f32.gmra.mxu0 %v219
  %v2273 = vpop.f32.mrf.mxu0
  %v2274 = vadd.f32 %v439, %v2273
  %2275 = vmatmul.f32.gmra.mxu0 %v221
  %v2276 = vpop.f32.mrf.mxu0
  %v2277 = vadd.f32 %v439, %v2276
  %2278 = vmatmul.f32.gmra.mxu0 %v223
  %v2279 = vpop.f32.mrf.mxu0
  %v2280 = vadd.f32 %v439, %v2279
  %2281 = vmatmul.f32.gmra.mxu0 %v225
  %v2282 = vpop.f32.mrf.mxu0
  %v2283 = vadd.f32 %v439, %v2282
  %2284 = vmatmul.f32.gmra.mxu0 %v227
  %v2285 = vpop.f32.mrf.mxu0
  %v2286 = vadd.f32 %v439, %v2285
  %2287 = vmatmul.f32.gmra.mxu0 %v229
  %v2288 = vpop.f32.mrf.mxu0
  %v2289 = vadd.f32 %v439, %v2288
  %2290 = vmatmul.f32.gmra.mxu0 %v231
  %v2291 = vpop.f32.mrf.mxu0
  %v2292 = vadd.f32 %v439, %v2291
  %2293 = vmatmul.f32.gmra.mxu0 %v233
  %v2294 = vpop.f32.mrf.mxu0
  %v2295 = vadd.f32 %v439, %v2294
  %2296 = vmatmul.f32.gmra.mxu0 %v235
  %v2297 = vpop.f32.mrf.mxu0
  %v2298 = vadd.f32 %v439, %v2297
  %2299 = vmatmul.f32.gmra.mxu0 %v237
  %v2300 = vpop.f32.mrf.mxu0
  %v2301 = vadd.f32 %v439, %v2300
  %2302 = vmatmul.f32.gmra.mxu0 %v239
  %v2303 = vpop.f32.mrf.mxu0
  %v2304 = vadd.f32 %v439, %v2303
  %2305 = vmatmul.f32.gmra.mxu0 %v241
  %v2306 = vpop.f32.mrf.mxu0
  %v2307 = vadd.f32 %v439, %v2306
  %2308 = vmatmul.f32.gmra.mxu0 %v243
  %v2309 = vpop.f32.mrf.mxu0
  %v2310 = vadd.f32 %v439, %v2309
  %2311 = vmatmul.f32.gmra.mxu0 %v245
  %v2312 = vpop.f32.mrf.mxu0
  %v2313 = vadd.f32 %v439, %v2312
  %2314 = vmatmul.f32.gmra.mxu0 %v247
  %v2315 = vpop.f32.mrf.mxu0
  %v2316 = vadd.f32 %v439, %v2315
  %2317 = vmatmul.f32.gmra.mxu0 %v249
  %v2318 = vpop.f32.mrf.mxu0
  %v2319 = vadd.f32 %v439, %v2318
  %2320 = vmatmul.f32.gmra.mxu0 %v251
  %v2321 = vpop.f32.mrf.mxu0
  %v2322 = vadd.f32 %v439, %v2321
  %2323 = vmatmul.f32.gmra.mxu0 %v253
  %v2324 = vpop.f32.mrf.mxu0
  %v2325 = vadd.f32 %v439, %v2324
  %2326 = vmatmul.f32.gmra.mxu0 %v255
  %v2327 = vpop.f32.mrf.mxu0
  %v2328 = vadd.f32 %v439, %v2327
  %2329 = vmatmul.f32.gmra.mxu0 %v257
  %v2330 = vpop.f32.mrf.mxu0
  %v2331 = vadd.f32 %v439, %v2330
  %2332 = vmatmul.f32.gmra.mxu0 %v259
  %v2333 = vpop.f32.mrf.mxu0
  %v2334 = vadd.f32 %v439, %v2333
  %2335 = vmatmul.f32.gmra.mxu0 %v261
  %v2336 = vpop.f32.mrf.mxu0
  %v2337 = vadd.f32 %v439, %v2336
  %2338 = vmatmul.f32.gmra.mxu0 %v263
  %v2339 = vpop.f32.mrf.mxu0
  %v2340 = vadd.f32 %v439, %v2339
  %2341 = vmatmul.f32.gmra.mxu0 %v265
  %v2342 = vpop.f32.mrf.mxu0
  %v2343 = vadd.f32 %v439, %v2342
  %2344 = vmatmul.f32.gmra.mxu0 %v267
  %v2345 = vpop.f32.mrf.mxu0
  %v2346 = vadd.f32 %v439, %v2345
  %2347 = vmatmul.f32.gmra.mxu0 %v269
  %v2348 = vpop.f32.mrf.mxu0
  %v2349 = vadd.f32 %v439, %v2348
  %2350 = vmatmul.f32.gmra.mxu0 %v271
  %v2351 = vpop.f32.mrf.mxu0
  %v2352 = vadd.f32 %v439, %v2351
  %2353 = vmatmul.f32.gmra.mxu0 %v273
  %v2354 = vpop.f32.mrf.mxu0
  %v2355 = vadd.f32 %v439, %v2354
  %2356 = vmatmul.f32.gmra.mxu0 %v275
  %v2357 = vpop.f32.mrf.mxu0
  %v2358 = vadd.f32 %v439, %v2357
  %2359 = vmatmul.f32.gmra.mxu0 %v277
  %v2360 = vpop.f32.mrf.mxu0
  %v2361 = vadd.f32 %v439, %v2360
  %2362 = vmatmul.f32.gmra.mxu0 %v279
  %v2363 = vpop.f32.mrf.mxu0
  %v2364 = vadd.f32 %v439, %v2363
  %2365 = vmatmul.f32.gmra.mxu0 %v281
  %v2366 = vpop.f32.mrf.mxu0
  %v2367 = vadd.f32 %v439, %v2366
  %2368 = vmatmul.f32.gmra.mxu0 %v283
  %v2369 = vpop.f32.mrf.mxu0
  %v2370 = vadd.f32 %v439, %v2369
  %2371 = vmatmul.f32.gmra.mxu0 %v285
  %v2372 = vpop.f32.mrf.mxu0
  %v2373 = vadd.f32 %v439, %v2372
  %2374 = vmatmul.f32.gmra.mxu0 %v287
  %v2375 = vpop.f32.mrf.mxu0
  %v2376 = vadd.f32 %v439, %v2375
  %2377 = vmatmul.f32.gmra.mxu0 %v289
  %v2378 = vpop.f32.mrf.mxu0
  %v2379 = vadd.f32 %v439, %v2378
  %2380 = vmatmul.f32.gmra.mxu0 %v291
  %v2381 = vpop.f32.mrf.mxu0
  %v2382 = vadd.f32 %v439, %v2381
  %2383 = vmatmul.f32.gmra.mxu0 %v293
  %v2384 = vpop.f32.mrf.mxu0
  %v2385 = vadd.f32 %v439, %v2384
  %2386 = vmatmul.f32.gmra.mxu0 %v295
  %v2387 = vpop.f32.mrf.mxu0
  %v2388 = vadd.f32 %v439, %v2387
  %2389 = vmatmul.f32.gmra.mxu0 %v297
  %v2390 = vpop.f32.mrf.mxu0
  %v2391 = vadd.f32 %v439, %v2390
  %2392 = vmatmul.f32.gmra.mxu0 %v299
  %v2393 = vpop.f32.mrf.mxu0
  %v2394 = vadd.f32 %v439, %v2393
  %2395 = vmatmul.f32.gmra.mxu0 %v301
  %v2396 = vpop.f32.mrf.mxu0
  %v2397 = vadd.f32 %v439, %v2396
  %2398 = vmatmul.f32.gmra.mxu0 %v303
  %v2399 = vpop.f32.mrf.mxu0
  %v2400 = vadd.f32 %v439, %v2399
  %2401 = vmatmul.f32.gmra.mxu0 %v305
  %v2402 = vpop.f32.mrf.mxu0
  %v2403 = vadd.f32 %v439, %v2402
  %2404 = vdwg.mxu0
  %2405 = vmatpush.msra.mxu0 %v433
  %2406 = vmatpush.msra.mxu0 %v429
  %2407 = vmatpush.msra.mxu0 %v425
  %2408 = vmatpush.msra.mxu0 %v421
  %2409 = vmatpush.msra.mxu0 %v417
  %2410 = vmatpush.msra.mxu0 %v413
  %2411 = vmatpush.msra.mxu0 %v409
  %2412 = vmatpush.msra.mxu0 %v405
  %2413 = vmatpush.msra.mxu0 %v401
  %2414 = vmatpush.msra.mxu0 %v397
  %2415 = vmatpush.msra.mxu0 %v393
  %2416 = vmatpush.msra.mxu0 %v389
  %2417 = vmatpush.msra.mxu0 %v385
  %2418 = vmatpush.msra.mxu0 %v381
  %2419 = vmatpush.msra.mxu0 %v377
  %2420 = vmatpush.msra.mxu0 %v373
  %2421 = vmatmul.f32.gmra.mxu0 %v58
  %v2422 = vpop.f32.mrf.mxu0
  %v2423 = vadd.f32 %v2031, %v2422
  %2424 = vmatmul.f32.gmra.mxu0 %v60
  %v2425 = vpop.f32.mrf.mxu0
  %v2426 = vadd.f32 %v2034, %v2425
  %2427 = vmatmul.f32.gmra.mxu0 %v62
  %v2428 = vpop.f32.mrf.mxu0
  %v2429 = vadd.f32 %v2037, %v2428
  %2430 = vmatmul.f32.gmra.mxu0 %v64
  %v2431 = vpop.f32.mrf.mxu0
  %v2432 = vadd.f32 %v2040, %v2431
  %2433 = vmatmul.f32.gmra.mxu0 %v66
  %v2434 = vpop.f32.mrf.mxu0
  %v2435 = vadd.f32 %v2043, %v2434
  %2436 = vmatmul.f32.gmra.mxu0 %v68
  %v2437 = vpop.f32.mrf.mxu0
  %v2438 = vadd.f32 %v2046, %v2437
  %2439 = vmatmul.f32.gmra.mxu0 %v70
  %v2440 = vpop.f32.mrf.mxu0
  %v2441 = vadd.f32 %v2049, %v2440
  %2442 = vmatmul.f32.gmra.mxu0 %v72
  %v2443 = vpop.f32.mrf.mxu0
  %v2444 = vadd.f32 %v2052, %v2443
  %2445 = vmatmul.f32.gmra.mxu0 %v74
  %v2446 = vpop.f32.mrf.mxu0
  %v2447 = vadd.f32 %v2055, %v2446
  %2448 = vmatmul.f32.gmra.mxu0 %v76
  %v2449 = vpop.f32.mrf.mxu0
  %v2450 = vadd.f32 %v2058, %v2449
  %2451 = vmatmul.f32.gmra.mxu0 %v78
  %v2452 = vpop.f32.mrf.mxu0
  %v2453 = vadd.f32 %v2061, %v2452
  %2454 = vmatmul.f32.gmra.mxu0 %v80
  %v2455 = vpop.f32.mrf.mxu0
  %v2456 = vadd.f32 %v2064, %v2455
  %2457 = vmatmul.f32.gmra.mxu0 %v82
  %v2458 = vpop.f32.mrf.mxu0
  %v2459 = vadd.f32 %v2067, %v2458
  %2460 = vmatmul.f32.gmra.mxu0 %v84
  %v2461 = vpop.f32.mrf.mxu0
  %v2462 = vadd.f32 %v2070, %v2461
  %2463 = vmatmul.f32.gmra.mxu0 %v86
  %v2464 = vpop.f32.mrf.mxu0
  %v2465 = vadd.f32 %v2073, %v2464
  %2466 = vmatmul.f32.gmra.mxu0 %v88
  %v2467 = vpop.f32.mrf.mxu0
  %v2468 = vadd.f32 %v2076, %v2467
  %2469 = vmatmul.f32.gmra.mxu0 %v90
  %v2470 = vpop.f32.mrf.mxu0
  %v2471 = vadd.f32 %v2079, %v2470
  %2472 = vmatmul.f32.gmra.mxu0 %v92
  %v2473 = vpop.f32.mrf.mxu0
  %v2474 = vadd.f32 %v2082, %v2473
  %2475 = vmatmul.f32.gmra.mxu0 %v94
  %v2476 = vpop.f32.mrf.mxu0
  %v2477 = vadd.f32 %v2085, %v2476
  %2478 = vmatmul.f32.gmra.mxu0 %v96
  %v2479 = vpop.f32.mrf.mxu0
  %v2480 = vadd.f32 %v2088, %v2479
  %2481 = vmatmul.f32.gmra.mxu0 %v98
  %v2482 = vpop.f32.mrf.mxu0
  %v2483 = vadd.f32 %v2091, %v2482
  %2484 = vmatmul.f32.gmra.mxu0 %v100
  %v2485 = vpop.f32.mrf.mxu0
  %v2486 = vadd.f32 %v2094, %v2485
  %2487 = vmatmul.f32.gmra.mxu0 %v102
  %v2488 = vpop.f32.mrf.mxu0
  %v2489 = vadd.f32 %v2097, %v2488
  %2490 = vmatmul.f32.gmra.mxu0 %v104
  %v2491 = vpop.f32.mrf.mxu0
  %v2492 = vadd.f32 %v2100, %v2491
  %2493 = vmatmul.f32.gmra.mxu0 %v106
  %v2494 = vpop.f32.mrf.mxu0
  %v2495 = vadd.f32 %v2103, %v2494
  %2496 = vmatmul.f32.gmra.mxu0 %v108
  %v2497 = vpop.f32.mrf.mxu0
  %v2498 = vadd.f32 %v2106, %v2497
  %2499 = vmatmul.f32.gmra.mxu0 %v110
  %v2500 = vpop.f32.mrf.mxu0
  %v2501 = vadd.f32 %v2109, %v2500
  %2502 = vmatmul.f32.gmra.mxu0 %v112
  %v2503 = vpop.f32.mrf.mxu0
  %v2504 = vadd.f32 %v2112, %v2503
  %2505 = vmatmul.f32.gmra.mxu0 %v114
  %v2506 = vpop.f32.mrf.mxu0
  %v2507 = vadd.f32 %v2115, %v2506
  %2508 = vmatmul.f32.gmra.mxu0 %v116
  %v2509 = vpop.f32.mrf.mxu0
  %v2510 = vadd.f32 %v2118, %v2509
  %2511 = vmatmul.f32.gmra.mxu0 %v118
  %v2512 = vpop.f32.mrf.mxu0
  %v2513 = vadd.f32 %v2121, %v2512
  %2514 = vmatmul.f32.gmra.mxu0 %v120
  %v2515 = vpop.f32.mrf.mxu0
  %v2516 = vadd.f32 %v2124, %v2515
  %2517 = vmatmul.f32.gmra.mxu0 %v122
  %v2518 = vpop.f32.mrf.mxu0
  %v2519 = vadd.f32 %v2127, %v2518
  %2520 = vmatmul.f32.gmra.mxu0 %v124
  %v2521 = vpop.f32.mrf.mxu0
  %v2522 = vadd.f32 %v2130, %v2521
  %2523 = vmatmul.f32.gmra.mxu0 %v126
  %v2524 = vpop.f32.mrf.mxu0
  %v2525 = vadd.f32 %v2133, %v2524
  %2526 = vmatmul.f32.gmra.mxu0 %v128
  %v2527 = vpop.f32.mrf.mxu0
  %v2528 = vadd.f32 %v2136, %v2527
  %2529 = vmatmul.f32.gmra.mxu0 %v130
  %v2530 = vpop.f32.mrf.mxu0
  %v2531 = vadd.f32 %v2139, %v2530
  %2532 = vmatmul.f32.gmra.mxu0 %v132
  %v2533 = vpop.f32.mrf.mxu0
  %v2534 = vadd.f32 %v2142, %v2533
  %2535 = vmatmul.f32.gmra.mxu0 %v134
  %v2536 = vpop.f32.mrf.mxu0
  %v2537 = vadd.f32 %v2145, %v2536
  %2538 = vmatmul.f32.gmra.mxu0 %v136
  %v2539 = vpop.f32.mrf.mxu0
  %v2540 = vadd.f32 %v2148, %v2539
  %2541 = vmatmul.f32.gmra.mxu0 %v138
  %v2542 = vpop.f32.mrf.mxu0
  %v2543 = vadd.f32 %v2151, %v2542
  %2544 = vmatmul.f32.gmra.mxu0 %v140
  %v2545 = vpop.f32.mrf.mxu0
  %v2546 = vadd.f32 %v2154, %v2545
  %2547 = vmatmul.f32.gmra.mxu0 %v142
  %v2548 = vpop.f32.mrf.mxu0
  %v2549 = vadd.f32 %v2157, %v2548
  %2550 = vmatmul.f32.gmra.mxu0 %v144
  %v2551 = vpop.f32.mrf.mxu0
  %v2552 = vadd.f32 %v2160, %v2551
  %2553 = vmatmul.f32.gmra.mxu0 %v146
  %v2554 = vpop.f32.mrf.mxu0
  %v2555 = vadd.f32 %v2163, %v2554
  %2556 = vmatmul.f32.gmra.mxu0 %v148
  %v2557 = vpop.f32.mrf.mxu0
  %v2558 = vadd.f32 %v2166, %v2557
  %2559 = vmatmul.f32.gmra.mxu0 %v150
  %v2560 = vpop.f32.mrf.mxu0
  %v2561 = vadd.f32 %v2169, %v2560
  %2562 = vmatmul.f32.gmra.mxu0 %v152
  %v2563 = vpop.f32.mrf.mxu0
  %v2564 = vadd.f32 %v2172, %v2563
  %2565 = vmatmul.f32.gmra.mxu0 %v154
  %v2566 = vpop.f32.mrf.mxu0
  %v2567 = vadd.f32 %v2175, %v2566
  %2568 = vmatmul.f32.gmra.mxu0 %v156
  %v2569 = vpop.f32.mrf.mxu0
  %v2570 = vadd.f32 %v2178, %v2569
  %2571 = vmatmul.f32.gmra.mxu0 %v158
  %v2572 = vpop.f32.mrf.mxu0
  %v2573 = vadd.f32 %v2181, %v2572
  %2574 = vmatmul.f32.gmra.mxu0 %v160
  %v2575 = vpop.f32.mrf.mxu0
  %v2576 = vadd.f32 %v2184, %v2575
  %2577 = vmatmul.f32.gmra.mxu0 %v162
  %v2578 = vpop.f32.mrf.mxu0
  %v2579 = vadd.f32 %v2187, %v2578
  %2580 = vmatmul.f32.gmra.mxu0 %v164
  %v2581 = vpop.f32.mrf.mxu0
  %v2582 = vadd.f32 %v2190, %v2581
  %2583 = vmatmul.f32.gmra.mxu0 %v166
  %v2584 = vpop.f32.mrf.mxu0
  %v2585 = vadd.f32 %v2193, %v2584
  %2586 = vmatmul.f32.gmra.mxu0 %v168
  %v2587 = vpop.f32.mrf.mxu0
  %v2588 = vadd.f32 %v2196, %v2587
  %2589 = vmatmul.f32.gmra.mxu0 %v170
  %v2590 = vpop.f32.mrf.mxu0
  %v2591 = vadd.f32 %v2199, %v2590
  %2592 = vmatmul.f32.gmra.mxu0 %v172
  %v2593 = vpop.f32.mrf.mxu0
  %v2594 = vadd.f32 %v2202, %v2593
  %2595 = vmatmul.f32.gmra.mxu0 %v174
  %v2596 = vpop.f32.mrf.mxu0
  %v2597 = vadd.f32 %v2205, %v2596
  %2598 = vmatmul.f32.gmra.mxu0 %v176
  %v2599 = vpop.f32.mrf.mxu0
  %v2600 = vadd.f32 %v2208, %v2599
  %2601 = vmatmul.f32.gmra.mxu0 %v178
  %v2602 = vpop.f32.mrf.mxu0
  %v2603 = vadd.f32 %v2211, %v2602
  %2604 = vmatmul.f32.gmra.mxu0 %v180
  %v2605 = vpop.f32.mrf.mxu0
  %v2606 = vadd.f32 %v2214, %v2605
  %2607 = vmatmul.f32.gmra.mxu0 %v182
  %v2608 = vpop.f32.mrf.mxu0
  %v2609 = vadd.f32 %v2217, %v2608
  %2610 = vmatmul.f32.gmra.mxu0 %v184
  %v2611 = vpop.f32.mrf.mxu0
  %v2612 = vadd.f32 %v2220, %v2611
  %2613 = vmatmul.f32.gmra.mxu0 %v186
  %v2614 = vpop.f32.mrf.mxu0
  %v2615 = vadd.f32 %v2223, %v2614
  %2616 = vmatmul.f32.gmra.mxu0 %v188
  %v2617 = vpop.f32.mrf.mxu0
  %v2618 = vadd.f32 %v2226, %v2617
  %2619 = vmatmul.f32.gmra.mxu0 %v190
  %v2620 = vpop.f32.mrf.mxu0
  %v2621 = vadd.f32 %v2229, %v2620
  %2622 = vmatmul.f32.gmra.mxu0 %v192
  %v2623 = vpop.f32.mrf.mxu0
  %v2624 = vadd.f32 %v2232, %v2623
  %2625 = vmatmul.f32.gmra.mxu0 %v194
  %v2626 = vpop.f32.mrf.mxu0
  %v2627 = vadd.f32 %v2235, %v2626
  %2628 = vmatmul.f32.gmra.mxu0 %v196
  %v2629 = vpop.f32.mrf.mxu0
  %v2630 = vadd.f32 %v2238, %v2629
  %2631 = vmatmul.f32.gmra.mxu0 %v198
  %v2632 = vpop.f32.mrf.mxu0
  %v2633 = vadd.f32 %v2241, %v2632
  %2634 = vmatmul.f32.gmra.mxu0 %v200
  %v2635 = vpop.f32.mrf.mxu0
  %v2636 = vadd.f32 %v2244, %v2635
  %2637 = vmatmul.f32.gmra.mxu0 %v202
  %v2638 = vpop.f32.mrf.mxu0
  %v2639 = vadd.f32 %v2247, %v2638
  %2640 = vmatmul.f32.gmra.mxu0 %v204
  %v2641 = vpop.f32.mrf.mxu0
  %v2642 = vadd.f32 %v2250, %v2641
  %2643 = vmatmul.f32.gmra.mxu0 %v206
  %v2644 = vpop.f32.mrf.mxu0
  %v2645 = vadd.f32 %v2253, %v2644
  %2646 = vmatmul.f32.gmra.mxu0 %v208
  %v2647 = vpop.f32.mrf.mxu0
  %v2648 = vadd.f32 %v2256, %v2647
  %2649 = vmatmul.f32.gmra.mxu0 %v210
  %v2650 = vpop.f32.mrf.mxu0
  %v2651 = vadd.f32 %v2259, %v2650
  %2652 = vmatmul.f32.gmra.mxu0 %v212
  %v2653 = vpop.f32.mrf.mxu0
  %v2654 = vadd.f32 %v2262, %v2653
  %2655 = vmatmul.f32.gmra.mxu0 %v214
  %v2656 = vpop.f32.mrf.mxu0
  %v2657 = vadd.f32 %v2265, %v2656
  %2658 = vmatmul.f32.gmra.mxu0 %v216
  %v2659 = vpop.f32.mrf.mxu0
  %v2660 = vadd.f32 %v2268, %v2659
  %2661 = vmatmul.f32.gmra.mxu0 %v218
  %v2662 = vpop.f32.mrf.mxu0
  %v2663 = vadd.f32 %v2271, %v2662
  %2664 = vmatmul.f32.gmra.mxu0 %v220
  %v2665 = vpop.f32.mrf.mxu0
  %v2666 = vadd.f32 %v2274, %v2665
  %2667 = vmatmul.f32.gmra.mxu0 %v222
  %v2668 = vpop.f32.mrf.mxu0
  %v2669 = vadd.f32 %v2277, %v2668
  %2670 = vmatmul.f32.gmra.mxu0 %v224
  %v2671 = vpop.f32.mrf.mxu0
  %v2672 = vadd.f32 %v2280, %v2671
  %2673 = vmatmul.f32.gmra.mxu0 %v226
  %v2674 = vpop.f32.mrf.mxu0
  %v2675 = vadd.f32 %v2283, %v2674
  %2676 = vmatmul.f32.gmra.mxu0 %v228
  %v2677 = vpop.f32.mrf.mxu0
  %v2678 = vadd.f32 %v2286, %v2677
  %2679 = vmatmul.f32.gmra.mxu0 %v230
  %v2680 = vpop.f32.mrf.mxu0
  %v2681 = vadd.f32 %v2289, %v2680
  %2682 = vmatmul.f32.gmra.mxu0 %v232
  %v2683 = vpop.f32.mrf.mxu0
  %v2684 = vadd.f32 %v2292, %v2683
  %2685 = vmatmul.f32.gmra.mxu0 %v234
  %v2686 = vpop.f32.mrf.mxu0
  %v2687 = vadd.f32 %v2295, %v2686
  %2688 = vmatmul.f32.gmra.mxu0 %v236
  %v2689 = vpop.f32.mrf.mxu0
  %v2690 = vadd.f32 %v2298, %v2689
  %2691 = vmatmul.f32.gmra.mxu0 %v238
  %v2692 = vpop.f32.mrf.mxu0
  %v2693 = vadd.f32 %v2301, %v2692
  %2694 = vmatmul.f32.gmra.mxu0 %v240
  %v2695 = vpop.f32.mrf.mxu0
  %v2696 = vadd.f32 %v2304, %v2695
  %2697 = vmatmul.f32.gmra.mxu0 %v242
  %v2698 = vpop.f32.mrf.mxu0
  %v2699 = vadd.f32 %v2307, %v2698
  %2700 = vmatmul.f32.gmra.mxu0 %v244
  %v2701 = vpop.f32.mrf.mxu0
  %v2702 = vadd.f32 %v2310, %v2701
  %2703 = vmatmul.f32.gmra.mxu0 %v246
  %v2704 = vpop.f32.mrf.mxu0
  %v2705 = vadd.f32 %v2313, %v2704
  %2706 = vmatmul.f32.gmra.mxu0 %v248
  %v2707 = vpop.f32.mrf.mxu0
  %v2708 = vadd.f32 %v2316, %v2707
  %2709 = vmatmul.f32.gmra.mxu0 %v250
  %v2710 = vpop.f32.mrf.mxu0
  %v2711 = vadd.f32 %v2319, %v2710
  %2712 = vmatmul.f32.gmra.mxu0 %v252
  %v2713 = vpop.f32.mrf.mxu0
  %v2714 = vadd.f32 %v2322, %v2713
  %2715 = vmatmul.f32.gmra.mxu0 %v254
  %v2716 = vpop.f32.mrf.mxu0
  %v2717 = vadd.f32 %v2325, %v2716
  %2718 = vmatmul.f32.gmra.mxu0 %v256
  %v2719 = vpop.f32.mrf.mxu0
  %v2720 = vadd.f32 %v2328, %v2719
  %2721 = vmatmul.f32.gmra.mxu0 %v258
  %v2722 = vpop.f32.mrf.mxu0
  %v2723 = vadd.f32 %v2331, %v2722
  %2724 = vmatmul.f32.gmra.mxu0 %v260
  %v2725 = vpop.f32.mrf.mxu0
  %v2726 = vadd.f32 %v2334, %v2725
  %2727 = vmatmul.f32.gmra.mxu0 %v262
  %v2728 = vpop.f32.mrf.mxu0
  %v2729 = vadd.f32 %v2337, %v2728
  %2730 = vmatmul.f32.gmra.mxu0 %v264
  %v2731 = vpop.f32.mrf.mxu0
  %v2732 = vadd.f32 %v2340, %v2731
  %2733 = vmatmul.f32.gmra.mxu0 %v266
  %v2734 = vpop.f32.mrf.mxu0
  %v2735 = vadd.f32 %v2343, %v2734
  %2736 = vmatmul.f32.gmra.mxu0 %v268
  %v2737 = vpop.f32.mrf.mxu0
  %v2738 = vadd.f32 %v2346, %v2737
  %2739 = vmatmul.f32.gmra.mxu0 %v270
  %v2740 = vpop.f32.mrf.mxu0
  %v2741 = vadd.f32 %v2349, %v2740
  %2742 = vmatmul.f32.gmra.mxu0 %v272
  %v2743 = vpop.f32.mrf.mxu0
  %v2744 = vadd.f32 %v2352, %v2743
  %2745 = vmatmul.f32.gmra.mxu0 %v274
  %v2746 = vpop.f32.mrf.mxu0
  %v2747 = vadd.f32 %v2355, %v2746
  %2748 = vmatmul.f32.gmra.mxu0 %v276
  %v2749 = vpop.f32.mrf.mxu0
  %v2750 = vadd.f32 %v2358, %v2749
  %2751 = vmatmul.f32.gmra.mxu0 %v278
  %v2752 = vpop.f32.mrf.mxu0
  %v2753 = vadd.f32 %v2361, %v2752
  %2754 = vmatmul.f32.gmra.mxu0 %v280
  %v2755 = vpop.f32.mrf.mxu0
  %v2756 = vadd.f32 %v2364, %v2755
  %2757 = vmatmul.f32.gmra.mxu0 %v282
  %v2758 = vpop.f32.mrf.mxu0
  %v2759 = vadd.f32 %v2367, %v2758
  %2760 = vmatmul.f32.gmra.mxu0 %v284
  %v2761 = vpop.f32.mrf.mxu0
  %v2762 = vadd.f32 %v2370, %v2761
  %2763 = vmatmul.f32.gmra.mxu0 %v286
  %v2764 = vpop.f32.mrf.mxu0
  %v2765 = vadd.f32 %v2373, %v2764
  %2766 = vmatmul.f32.gmra.mxu0 %v288
  %v2767 = vpop.f32.mrf.mxu0
  %v2768 = vadd.f32 %v2376, %v2767
  %2769 = vmatmul.f32.gmra.mxu0 %v290
  %v2770 = vpop.f32.mrf.mxu0
  %v2771 = vadd.f32 %v2379, %v2770
  %2772 = vmatmul.f32.gmra.mxu0 %v292
  %v2773 = vpop.f32.mrf.mxu0
  %v2774 = vadd.f32 %v2382, %v2773
  %2775 = vmatmul.f32.gmra.mxu0 %v294
  %v2776 = vpop.f32.mrf.mxu0
  %v2777 = vadd.f32 %v2385, %v2776
  %2778 = vmatmul.f32.gmra.mxu0 %v296
  %v2779 = vpop.f32.mrf.mxu0
  %v2780 = vadd.f32 %v2388, %v2779
  %2781 = vmatmul.f32.gmra.mxu0 %v298
  %v2782 = vpop.f32.mrf.mxu0
  %v2783 = vadd.f32 %v2391, %v2782
  %2784 = vmatmul.f32.gmra.mxu0 %v300
  %v2785 = vpop.f32.mrf.mxu0
  %v2786 = vadd.f32 %v2394, %v2785
  %2787 = vmatmul.f32.gmra.mxu0 %v302
  %v2788 = vpop.f32.mrf.mxu0
  %v2789 = vadd.f32 %v2397, %v2788
  %2790 = vmatmul.f32.gmra.mxu0 %v304
  %v2791 = vpop.f32.mrf.mxu0
  %v2792 = vadd.f32 %v2400, %v2791
  %2793 = vmatmul.f32.gmra.mxu0 %v306
  %v2794 = vpop.f32.mrf.mxu0
  %v2795 = vadd.f32 %v2403, %v2794
  %2796 = vdwg.mxu0
  %2797 = vmatpush.msra.mxu0 %v370
  %2798 = vmatpush.msra.mxu0 %v366
  %2799 = vmatpush.msra.mxu0 %v362
  %2800 = vmatpush.msra.mxu0 %v358
  %2801 = vmatpush.msra.mxu0 %v354
  %2802 = vmatpush.msra.mxu0 %v350
  %2803 = vmatpush.msra.mxu0 %v346
  %2804 = vmatpush.msra.mxu0 %v342
  %2805 = vmatpush.msra.mxu0 %v338
  %2806 = vmatpush.msra.mxu0 %v334
  %2807 = vmatpush.msra.mxu0 %v330
  %2808 = vmatpush.msra.mxu0 %v326
  %2809 = vmatpush.msra.mxu0 %v322
  %2810 = vmatpush.msra.mxu0 %v318
  %2811 = vmatpush.msra.mxu0 %v314
  %2812 = vmatpush.msra.mxu0 %v310
  %2813 = vmatmul.f32.gmra.mxu0 %v57
  %v2814 = vpop.f32.mrf.mxu0
  %v2815 = vadd.f32 %v440, %v2814
  %2816 = vmatmul.f32.gmra.mxu0 %v59
  %v2817 = vpop.f32.mrf.mxu0
  %v2818 = vadd.f32 %v440, %v2817
  %2819 = vmatmul.f32.gmra.mxu0 %v61
  %v2820 = vpop.f32.mrf.mxu0
  %v2821 = vadd.f32 %v440, %v2820
  %2822 = vmatmul.f32.gmra.mxu0 %v63
  %v2823 = vpop.f32.mrf.mxu0
  %v2824 = vadd.f32 %v440, %v2823
  %2825 = vmatmul.f32.gmra.mxu0 %v65
  %v2826 = vpop.f32.mrf.mxu0
  %v2827 = vadd.f32 %v440, %v2826
  %2828 = vmatmul.f32.gmra.mxu0 %v67
  %v2829 = vpop.f32.mrf.mxu0
  %v2830 = vadd.f32 %v440, %v2829
  %2831 = vmatmul.f32.gmra.mxu0 %v69
  %v2832 = vpop.f32.mrf.mxu0
  %v2833 = vadd.f32 %v440, %v2832
  %2834 = vmatmul.f32.gmra.mxu0 %v71
  %v2835 = vpop.f32.mrf.mxu0
  %v2836 = vadd.f32 %v440, %v2835
  %2837 = vmatmul.f32.gmra.mxu0 %v73
  %v2838 = vpop.f32.mrf.mxu0
  %v2839 = vadd.f32 %v440, %v2838
  %2840 = vmatmul.f32.gmra.mxu0 %v75
  %v2841 = vpop.f32.mrf.mxu0
  %v2842 = vadd.f32 %v440, %v2841
  %2843 = vmatmul.f32.gmra.mxu0 %v77
  %v2844 = vpop.f32.mrf.mxu0
  %v2845 = vadd.f32 %v440, %v2844
  %2846 = vmatmul.f32.gmra.mxu0 %v79
  %v2847 = vpop.f32.mrf.mxu0
  %v2848 = vadd.f32 %v440, %v2847
  %2849 = vmatmul.f32.gmra.mxu0 %v81
  %v2850 = vpop.f32.mrf.mxu0
  %v2851 = vadd.f32 %v440, %v2850
  %2852 = vmatmul.f32.gmra.mxu0 %v83
  %v2853 = vpop.f32.mrf.mxu0
  %v2854 = vadd.f32 %v440, %v2853
  %2855 = vmatmul.f32.gmra.mxu0 %v85
  %v2856 = vpop.f32.mrf.mxu0
  %v2857 = vadd.f32 %v440, %v2856
  %2858 = vmatmul.f32.gmra.mxu0 %v87
  %v2859 = vpop.f32.mrf.mxu0
  %v2860 = vadd.f32 %v440, %v2859
  %2861 = vmatmul.f32.gmra.mxu0 %v89
  %v2862 = vpop.f32.mrf.mxu0
  %v2863 = vadd.f32 %v440, %v2862
  %2864 = vmatmul.f32.gmra.mxu0 %v91
  %v2865 = vpop.f32.mrf.mxu0
  %v2866 = vadd.f32 %v440, %v2865
  %2867 = vmatmul.f32.gmra.mxu0 %v93
  %v2868 = vpop.f32.mrf.mxu0
  %v2869 = vadd.f32 %v440, %v2868
  %2870 = vmatmul.f32.gmra.mxu0 %v95
  %v2871 = vpop.f32.mrf.mxu0
  %v2872 = vadd.f32 %v440, %v2871
  %2873 = vmatmul.f32.gmra.mxu0 %v97
  %v2874 = vpop.f32.mrf.mxu0
  %v2875 = vadd.f32 %v440, %v2874
  %2876 = vmatmul.f32.gmra.mxu0 %v99
  %v2877 = vpop.f32.mrf.mxu0
  %v2878 = vadd.f32 %v440, %v2877
  %2879 = vmatmul.f32.gmra.mxu0 %v101
  %v2880 = vpop.f32.mrf.mxu0
  %v2881 = vadd.f32 %v440, %v2880
  %2882 = vmatmul.f32.gmra.mxu0 %v103
  %v2883 = vpop.f32.mrf.mxu0
  %v2884 = vadd.f32 %v440, %v2883
  %2885 = vmatmul.f32.gmra.mxu0 %v105
  %v2886 = vpop.f32.mrf.mxu0
  %v2887 = vadd.f32 %v440, %v2886
  %2888 = vmatmul.f32.gmra.mxu0 %v107
  %v2889 = vpop.f32.mrf.mxu0
  %v2890 = vadd.f32 %v440, %v2889
  %2891 = vmatmul.f32.gmra.mxu0 %v109
  %v2892 = vpop.f32.mrf.mxu0
  %v2893 = vadd.f32 %v440, %v2892
  %2894 = vmatmul.f32.gmra.mxu0 %v111
  %v2895 = vpop.f32.mrf.mxu0
  %v2896 = vadd.f32 %v440, %v2895
  %2897 = vmatmul.f32.gmra.mxu0 %v113
  %v2898 = vpop.f32.mrf.mxu0
  %v2899 = vadd.f32 %v440, %v2898
  %2900 = vmatmul.f32.gmra.mxu0 %v115
  %v2901 = vpop.f32.mrf.mxu0
  %v2902 = vadd.f32 %v440, %v2901
  %2903 = vmatmul.f32.gmra.mxu0 %v117
  %v2904 = vpop.f32.mrf.mxu0
  %v2905 = vadd.f32 %v440, %v2904
  %2906 = vmatmul.f32.gmra.mxu0 %v119
  %v2907 = vpop.f32.mrf.mxu0
  %v2908 = vadd.f32 %v440, %v2907
  %2909 = vmatmul.f32.gmra.mxu0 %v121
  %v2910 = vpop.f32.mrf.mxu0
  %v2911 = vadd.f32 %v440, %v2910
  %2912 = vmatmul.f32.gmra.mxu0 %v123
  %v2913 = vpop.f32.mrf.mxu0
  %v2914 = vadd.f32 %v440, %v2913
  %2915 = vmatmul.f32.gmra.mxu0 %v125
  %v2916 = vpop.f32.mrf.mxu0
  %v2917 = vadd.f32 %v440, %v2916
  %2918 = vmatmul.f32.gmra.mxu0 %v127
  %v2919 = vpop.f32.mrf.mxu0
  %v2920 = vadd.f32 %v440, %v2919
  %2921 = vmatmul.f32.gmra.mxu0 %v129
  %v2922 = vpop.f32.mrf.mxu0
  %v2923 = vadd.f32 %v440, %v2922
  %2924 = vmatmul.f32.gmra.mxu0 %v131
  %v2925 = vpop.f32.mrf.mxu0
  %v2926 = vadd.f32 %v440, %v2925
  %2927 = vmatmul.f32.gmra.mxu0 %v133
  %v2928 = vpop.f32.mrf.mxu0
  %v2929 = vadd.f32 %v440, %v2928
  %2930 = vmatmul.f32.gmra.mxu0 %v135
  %v2931 = vpop.f32.mrf.mxu0
  %v2932 = vadd.f32 %v440, %v2931
  %2933 = vmatmul.f32.gmra.mxu0 %v137
  %v2934 = vpop.f32.mrf.mxu0
  %v2935 = vadd.f32 %v440, %v2934
  %2936 = vmatmul.f32.gmra.mxu0 %v139
  %v2937 = vpop.f32.mrf.mxu0
  %v2938 = vadd.f32 %v440, %v2937
  %2939 = vmatmul.f32.gmra.mxu0 %v141
  %v2940 = vpop.f32.mrf.mxu0
  %v2941 = vadd.f32 %v440, %v2940
  %2942 = vmatmul.f32.gmra.mxu0 %v143
  %v2943 = vpop.f32.mrf.mxu0
  %v2944 = vadd.f32 %v440, %v2943
  %2945 = vmatmul.f32.gmra.mxu0 %v145
  %v2946 = vpop.f32.mrf.mxu0
  %v2947 = vadd.f32 %v440, %v2946
  %2948 = vmatmul.f32.gmra.mxu0 %v147
  %v2949 = vpop.f32.mrf.mxu0
  %v2950 = vadd.f32 %v440, %v2949
  %2951 = vmatmul.f32.gmra.mxu0 %v149
  %v2952 = vpop.f32.mrf.mxu0
  %v2953 = vadd.f32 %v440, %v2952
  %2954 = vmatmul.f32.gmra.mxu0 %v151
  %v2955 = vpop.f32.mrf.mxu0
  %v2956 = vadd.f32 %v440, %v2955
  %2957 = vmatmul.f32.gmra.mxu0 %v153
  %v2958 = vpop.f32.mrf.mxu0
  %v2959 = vadd.f32 %v440, %v2958
  %2960 = vmatmul.f32.gmra.mxu0 %v155
  %v2961 = vpop.f32.mrf.mxu0
  %v2962 = vadd.f32 %v440, %v2961
  %2963 = vmatmul.f32.gmra.mxu0 %v157
  %v2964 = vpop.f32.mrf.mxu0
  %v2965 = vadd.f32 %v440, %v2964
  %2966 = vmatmul.f32.gmra.mxu0 %v159
  %v2967 = vpop.f32.mrf.mxu0
  %v2968 = vadd.f32 %v440, %v2967
  %2969 = vmatmul.f32.gmra.mxu0 %v161
  %v2970 = vpop.f32.mrf.mxu0
  %v2971 = vadd.f32 %v440, %v2970
  %2972 = vmatmul.f32.gmra.mxu0 %v163
  %v2973 = vpop.f32.mrf.mxu0
  %v2974 = vadd.f32 %v440, %v2973
  %2975 = vmatmul.f32.gmra.mxu0 %v165
  %v2976 = vpop.f32.mrf.mxu0
  %v2977 = vadd.f32 %v440, %v2976
  %2978 = vmatmul.f32.gmra.mxu0 %v167
  %v2979 = vpop.f32.mrf.mxu0
  %v2980 = vadd.f32 %v440, %v2979
  %2981 = vmatmul.f32.gmra.mxu0 %v169
  %v2982 = vpop.f32.mrf.mxu0
  %v2983 = vadd.f32 %v440, %v2982
  %2984 = vmatmul.f32.gmra.mxu0 %v171
  %v2985 = vpop.f32.mrf.mxu0
  %v2986 = vadd.f32 %v440, %v2985
  %2987 = vmatmul.f32.gmra.mxu0 %v173
  %v2988 = vpop.f32.mrf.mxu0
  %v2989 = vadd.f32 %v440, %v2988
  %2990 = vmatmul.f32.gmra.mxu0 %v175
  %v2991 = vpop.f32.mrf.mxu0
  %v2992 = vadd.f32 %v440, %v2991
  %2993 = vmatmul.f32.gmra.mxu0 %v177
  %v2994 = vpop.f32.mrf.mxu0
  %v2995 = vadd.f32 %v440, %v2994
  %2996 = vmatmul.f32.gmra.mxu0 %v179
  %v2997 = vpop.f32.mrf.mxu0
  %v2998 = vadd.f32 %v440, %v2997
  %2999 = vmatmul.f32.gmra.mxu0 %v181
  %v3000 = vpop.f32.mrf.mxu0
  %v3001 = vadd.f32 %v440, %v3000
  %3002 = vmatmul.f32.gmra.mxu0 %v183
  %v3003 = vpop.f32.mrf.mxu0
  %v3004 = vadd.f32 %v440, %v3003
  %3005 = vmatmul.f32.gmra.mxu0 %v185
  %v3006 = vpop.f32.mrf.mxu0
  %v3007 = vadd.f32 %v440, %v3006
  %3008 = vmatmul.f32.gmra.mxu0 %v187
  %v3009 = vpop.f32.mrf.mxu0
  %v3010 = vadd.f32 %v440, %v3009
  %3011 = vmatmul.f32.gmra.mxu0 %v189
  %v3012 = vpop.f32.mrf.mxu0
  %v3013 = vadd.f32 %v440, %v3012
  %3014 = vmatmul.f32.gmra.mxu0 %v191
  %v3015 = vpop.f32.mrf.mxu0
  %v3016 = vadd.f32 %v440, %v3015
  %3017 = vmatmul.f32.gmra.mxu0 %v193
  %v3018 = vpop.f32.mrf.mxu0
  %v3019 = vadd.f32 %v440, %v3018
  %3020 = vmatmul.f32.gmra.mxu0 %v195
  %v3021 = vpop.f32.mrf.mxu0
  %v3022 = vadd.f32 %v440, %v3021
  %3023 = vmatmul.f32.gmra.mxu0 %v197
  %v3024 = vpop.f32.mrf.mxu0
  %v3025 = vadd.f32 %v440, %v3024
  %3026 = vmatmul.f32.gmra.mxu0 %v199
  %v3027 = vpop.f32.mrf.mxu0
  %v3028 = vadd.f32 %v440, %v3027
  %3029 = vmatmul.f32.gmra.mxu0 %v201
  %v3030 = vpop.f32.mrf.mxu0
  %v3031 = vadd.f32 %v440, %v3030
  %3032 = vmatmul.f32.gmra.mxu0 %v203
  %v3033 = vpop.f32.mrf.mxu0
  %v3034 = vadd.f32 %v440, %v3033
  %3035 = vmatmul.f32.gmra.mxu0 %v205
  %v3036 = vpop.f32.mrf.mxu0
  %v3037 = vadd.f32 %v440, %v3036
  %3038 = vmatmul.f32.gmra.mxu0 %v207
  %v3039 = vpop.f32.mrf.mxu0
  %v3040 = vadd.f32 %v440, %v3039
  %3041 = vmatmul.f32.gmra.mxu0 %v209
  %v3042 = vpop.f32.mrf.mxu0
  %v3043 = vadd.f32 %v440, %v3042
  %3044 = vmatmul.f32.gmra.mxu0 %v211
  %v3045 = vpop.f32.mrf.mxu0
  %v3046 = vadd.f32 %v440, %v3045
  %3047 = vmatmul.f32.gmra.mxu0 %v213
  %v3048 = vpop.f32.mrf.mxu0
  %v3049 = vadd.f32 %v440, %v3048
  %3050 = vmatmul.f32.gmra.mxu0 %v215
  %v3051 = vpop.f32.mrf.mxu0
  %v3052 = vadd.f32 %v440, %v3051
  %3053 = vmatmul.f32.gmra.mxu0 %v217
  %v3054 = vpop.f32.mrf.mxu0
  %v3055 = vadd.f32 %v440, %v3054
  %3056 = vmatmul.f32.gmra.mxu0 %v219
  %v3057 = vpop.f32.mrf.mxu0
  %v3058 = vadd.f32 %v440, %v3057
  %3059 = vmatmul.f32.gmra.mxu0 %v221
  %v3060 = vpop.f32.mrf.mxu0
  %v3061 = vadd.f32 %v440, %v3060
  %3062 = vmatmul.f32.gmra.mxu0 %v223
  %v3063 = vpop.f32.mrf.mxu0
  %v3064 = vadd.f32 %v440, %v3063
  %3065 = vmatmul.f32.gmra.mxu0 %v225
  %v3066 = vpop.f32.mrf.mxu0
  %v3067 = vadd.f32 %v440, %v3066
  %3068 = vmatmul.f32.gmra.mxu0 %v227
  %v3069 = vpop.f32.mrf.mxu0
  %v3070 = vadd.f32 %v440, %v3069
  %3071 = vmatmul.f32.gmra.mxu0 %v229
  %v3072 = vpop.f32.mrf.mxu0
  %v3073 = vadd.f32 %v440, %v3072
  %3074 = vmatmul.f32.gmra.mxu0 %v231
  %v3075 = vpop.f32.mrf.mxu0
  %v3076 = vadd.f32 %v440, %v3075
  %3077 = vmatmul.f32.gmra.mxu0 %v233
  %v3078 = vpop.f32.mrf.mxu0
  %v3079 = vadd.f32 %v440, %v3078
  %3080 = vmatmul.f32.gmra.mxu0 %v235
  %v3081 = vpop.f32.mrf.mxu0
  %v3082 = vadd.f32 %v440, %v3081
  %3083 = vmatmul.f32.gmra.mxu0 %v237
  %v3084 = vpop.f32.mrf.mxu0
  %v3085 = vadd.f32 %v440, %v3084
  %3086 = vmatmul.f32.gmra.mxu0 %v239
  %v3087 = vpop.f32.mrf.mxu0
  %v3088 = vadd.f32 %v440, %v3087
  %3089 = vmatmul.f32.gmra.mxu0 %v241
  %v3090 = vpop.f32.mrf.mxu0
  %v3091 = vadd.f32 %v440, %v3090
  %3092 = vmatmul.f32.gmra.mxu0 %v243
  %v3093 = vpop.f32.mrf.mxu0
  %v3094 = vadd.f32 %v440, %v3093
  %3095 = vmatmul.f32.gmra.mxu0 %v245
  %v3096 = vpop.f32.mrf.mxu0
  %v3097 = vadd.f32 %v440, %v3096
  %3098 = vmatmul.f32.gmra.mxu0 %v247
  %v3099 = vpop.f32.mrf.mxu0
  %v3100 = vadd.f32 %v440, %v3099
  %3101 = vmatmul.f32.gmra.mxu0 %v249
  %v3102 = vpop.f32.mrf.mxu0
  %v3103 = vadd.f32 %v440, %v3102
  %3104 = vmatmul.f32.gmra.mxu0 %v251
  %v3105 = vpop.f32.mrf.mxu0
  %v3106 = vadd.f32 %v440, %v3105
  %3107 = vmatmul.f32.gmra.mxu0 %v253
  %v3108 = vpop.f32.mrf.mxu0
  %v3109 = vadd.f32 %v440, %v3108
  %3110 = vmatmul.f32.gmra.mxu0 %v255
  %v3111 = vpop.f32.mrf.mxu0
  %v3112 = vadd.f32 %v440, %v3111
  %3113 = vmatmul.f32.gmra.mxu0 %v257
  %v3114 = vpop.f32.mrf.mxu0
  %v3115 = vadd.f32 %v440, %v3114
  %3116 = vmatmul.f32.gmra.mxu0 %v259
  %v3117 = vpop.f32.mrf.mxu0
  %v3118 = vadd.f32 %v440, %v3117
  %3119 = vmatmul.f32.gmra.mxu0 %v261
  %v3120 = vpop.f32.mrf.mxu0
  %v3121 = vadd.f32 %v440, %v3120
  %3122 = vmatmul.f32.gmra.mxu0 %v263
  %v3123 = vpop.f32.mrf.mxu0
  %v3124 = vadd.f32 %v440, %v3123
  %3125 = vmatmul.f32.gmra.mxu0 %v265
  %v3126 = vpop.f32.mrf.mxu0
  %v3127 = vadd.f32 %v440, %v3126
  %3128 = vmatmul.f32.gmra.mxu0 %v267
  %v3129 = vpop.f32.mrf.mxu0
  %v3130 = vadd.f32 %v440, %v3129
  %3131 = vmatmul.f32.gmra.mxu0 %v269
  %v3132 = vpop.f32.mrf.mxu0
  %v3133 = vadd.f32 %v440, %v3132
  %3134 = vmatmul.f32.gmra.mxu0 %v271
  %v3135 = vpop.f32.mrf.mxu0
  %v3136 = vadd.f32 %v440, %v3135
  %3137 = vmatmul.f32.gmra.mxu0 %v273
  %v3138 = vpop.f32.mrf.mxu0
  %v3139 = vadd.f32 %v440, %v3138
  %3140 = vmatmul.f32.gmra.mxu0 %v275
  %v3141 = vpop.f32.mrf.mxu0
  %v3142 = vadd.f32 %v440, %v3141
  %3143 = vmatmul.f32.gmra.mxu0 %v277
  %v3144 = vpop.f32.mrf.mxu0
  %v3145 = vadd.f32 %v440, %v3144
  %3146 = vmatmul.f32.gmra.mxu0 %v279
  %v3147 = vpop.f32.mrf.mxu0
  %v3148 = vadd.f32 %v440, %v3147
  %3149 = vmatmul.f32.gmra.mxu0 %v281
  %v3150 = vpop.f32.mrf.mxu0
  %v3151 = vadd.f32 %v440, %v3150
  %3152 = vmatmul.f32.gmra.mxu0 %v283
  %v3153 = vpop.f32.mrf.mxu0
  %v3154 = vadd.f32 %v440, %v3153
  %3155 = vmatmul.f32.gmra.mxu0 %v285
  %v3156 = vpop.f32.mrf.mxu0
  %v3157 = vadd.f32 %v440, %v3156
  %3158 = vmatmul.f32.gmra.mxu0 %v287
  %v3159 = vpop.f32.mrf.mxu0
  %v3160 = vadd.f32 %v440, %v3159
  %3161 = vmatmul.f32.gmra.mxu0 %v289
  %v3162 = vpop.f32.mrf.mxu0
  %v3163 = vadd.f32 %v440, %v3162
  %3164 = vmatmul.f32.gmra.mxu0 %v291
  %v3165 = vpop.f32.mrf.mxu0
  %v3166 = vadd.f32 %v440, %v3165
  %3167 = vmatmul.f32.gmra.mxu0 %v293
  %v3168 = vpop.f32.mrf.mxu0
  %v3169 = vadd.f32 %v440, %v3168
  %3170 = vmatmul.f32.gmra.mxu0 %v295
  %v3171 = vpop.f32.mrf.mxu0
  %v3172 = vadd.f32 %v440, %v3171
  %3173 = vmatmul.f32.gmra.mxu0 %v297
  %v3174 = vpop.f32.mrf.mxu0
  %v3175 = vadd.f32 %v440, %v3174
  %3176 = vmatmul.f32.gmra.mxu0 %v299
  %v3177 = vpop.f32.mrf.mxu0
  %v3178 = vadd.f32 %v440, %v3177
  %3179 = vmatmul.f32.gmra.mxu0 %v301
  %v3180 = vpop.f32.mrf.mxu0
  %v3181 = vadd.f32 %v440, %v3180
  %3182 = vmatmul.f32.gmra.mxu0 %v303
  %v3183 = vpop.f32.mrf.mxu0
  %v3184 = vadd.f32 %v440, %v3183
  %3185 = vmatmul.f32.gmra.mxu0 %v305
  %v3186 = vpop.f32.mrf.mxu0
  %v3187 = vadd.f32 %v440, %v3186
  %3188 = vdwg.mxu0
  %3189 = vmatpush.msra.mxu0 %v434
  %3190 = vmatpush.msra.mxu0 %v430
  %3191 = vmatpush.msra.mxu0 %v426
  %3192 = vmatpush.msra.mxu0 %v422
  %3193 = vmatpush.msra.mxu0 %v418
  %3194 = vmatpush.msra.mxu0 %v414
  %3195 = vmatpush.msra.mxu0 %v410
  %3196 = vmatpush.msra.mxu0 %v406
  %3197 = vmatpush.msra.mxu0 %v402
  %3198 = vmatpush.msra.mxu0 %v398
  %3199 = vmatpush.msra.mxu0 %v394
  %3200 = vmatpush.msra.mxu0 %v390
  %3201 = vmatpush.msra.mxu0 %v386
  %3202 = vmatpush.msra.mxu0 %v382
  %3203 = vmatpush.msra.mxu0 %v378
  %3204 = vmatpush.msra.mxu0 %v374
  %3205 = vmatmul.f32.gmra.mxu0 %v58
  %v3206 = vpop.f32.mrf.mxu0
  %v3207 = vadd.f32 %v2815, %v3206
  %3208 = vmatmul.f32.gmra.mxu0 %v60
  %v3209 = vpop.f32.mrf.mxu0
  %v3210 = vadd.f32 %v2818, %v3209
  %3211 = vmatmul.f32.gmra.mxu0 %v62
  %v3212 = vpop.f32.mrf.mxu0
  %v3213 = vadd.f32 %v2821, %v3212
  %3214 = vmatmul.f32.gmra.mxu0 %v64
  %v3215 = vpop.f32.mrf.mxu0
  %v3216 = vadd.f32 %v2824, %v3215
  %3217 = vmatmul.f32.gmra.mxu0 %v66
  %v3218 = vpop.f32.mrf.mxu0
  %v3219 = vadd.f32 %v2827, %v3218
  %3220 = vmatmul.f32.gmra.mxu0 %v68
  %v3221 = vpop.f32.mrf.mxu0
  %v3222 = vadd.f32 %v2830, %v3221
  %3223 = vmatmul.f32.gmra.mxu0 %v70
  %v3224 = vpop.f32.mrf.mxu0
  %v3225 = vadd.f32 %v2833, %v3224
  %3226 = vmatmul.f32.gmra.mxu0 %v72
  %v3227 = vpop.f32.mrf.mxu0
  %v3228 = vadd.f32 %v2836, %v3227
  %3229 = vmatmul.f32.gmra.mxu0 %v74
  %v3230 = vpop.f32.mrf.mxu0
  %v3231 = vadd.f32 %v2839, %v3230
  %3232 = vmatmul.f32.gmra.mxu0 %v76
  %v3233 = vpop.f32.mrf.mxu0
  %v3234 = vadd.f32 %v2842, %v3233
  %3235 = vmatmul.f32.gmra.mxu0 %v78
  %v3236 = vpop.f32.mrf.mxu0
  %v3237 = vadd.f32 %v2845, %v3236
  %3238 = vmatmul.f32.gmra.mxu0 %v80
  %v3239 = vpop.f32.mrf.mxu0
  %v3240 = vadd.f32 %v2848, %v3239
  %3241 = vmatmul.f32.gmra.mxu0 %v82
  %v3242 = vpop.f32.mrf.mxu0
  %v3243 = vadd.f32 %v2851, %v3242
  %3244 = vmatmul.f32.gmra.mxu0 %v84
  %v3245 = vpop.f32.mrf.mxu0
  %v3246 = vadd.f32 %v2854, %v3245
  %3247 = vmatmul.f32.gmra.mxu0 %v86
  %v3248 = vpop.f32.mrf.mxu0
  %v3249 = vadd.f32 %v2857, %v3248
  %3250 = vmatmul.f32.gmra.mxu0 %v88
  %v3251 = vpop.f32.mrf.mxu0
  %v3252 = vadd.f32 %v2860, %v3251
  %3253 = vmatmul.f32.gmra.mxu0 %v90
  %v3254 = vpop.f32.mrf.mxu0
  %v3255 = vadd.f32 %v2863, %v3254
  %3256 = vmatmul.f32.gmra.mxu0 %v92
  %v3257 = vpop.f32.mrf.mxu0
  %v3258 = vadd.f32 %v2866, %v3257
  %3259 = vmatmul.f32.gmra.mxu0 %v94
  %v3260 = vpop.f32.mrf.mxu0
  %v3261 = vadd.f32 %v2869, %v3260
  %3262 = vmatmul.f32.gmra.mxu0 %v96
  %v3263 = vpop.f32.mrf.mxu0
  %v3264 = vadd.f32 %v2872, %v3263
  %3265 = vmatmul.f32.gmra.mxu0 %v98
  %v3266 = vpop.f32.mrf.mxu0
  %v3267 = vadd.f32 %v2875, %v3266
  %3268 = vmatmul.f32.gmra.mxu0 %v100
  %v3269 = vpop.f32.mrf.mxu0
  %v3270 = vadd.f32 %v2878, %v3269
  %3271 = vmatmul.f32.gmra.mxu0 %v102
  %v3272 = vpop.f32.mrf.mxu0
  %v3273 = vadd.f32 %v2881, %v3272
  %3274 = vmatmul.f32.gmra.mxu0 %v104
  %v3275 = vpop.f32.mrf.mxu0
  %v3276 = vadd.f32 %v2884, %v3275
  %3277 = vmatmul.f32.gmra.mxu0 %v106
  %v3278 = vpop.f32.mrf.mxu0
  %v3279 = vadd.f32 %v2887, %v3278
  %3280 = vmatmul.f32.gmra.mxu0 %v108
  %v3281 = vpop.f32.mrf.mxu0
  %v3282 = vadd.f32 %v2890, %v3281
  %3283 = vmatmul.f32.gmra.mxu0 %v110
  %v3284 = vpop.f32.mrf.mxu0
  %v3285 = vadd.f32 %v2893, %v3284
  %3286 = vmatmul.f32.gmra.mxu0 %v112
  %v3287 = vpop.f32.mrf.mxu0
  %v3288 = vadd.f32 %v2896, %v3287
  %3289 = vmatmul.f32.gmra.mxu0 %v114
  %v3290 = vpop.f32.mrf.mxu0
  %v3291 = vadd.f32 %v2899, %v3290
  %3292 = vmatmul.f32.gmra.mxu0 %v116
  %v3293 = vpop.f32.mrf.mxu0
  %v3294 = vadd.f32 %v2902, %v3293
  %3295 = vmatmul.f32.gmra.mxu0 %v118
  %v3296 = vpop.f32.mrf.mxu0
  %v3297 = vadd.f32 %v2905, %v3296
  %3298 = vmatmul.f32.gmra.mxu0 %v120
  %v3299 = vpop.f32.mrf.mxu0
  %v3300 = vadd.f32 %v2908, %v3299
  %3301 = vmatmul.f32.gmra.mxu0 %v122
  %v3302 = vpop.f32.mrf.mxu0
  %v3303 = vadd.f32 %v2911, %v3302
  %3304 = vmatmul.f32.gmra.mxu0 %v124
  %v3305 = vpop.f32.mrf.mxu0
  %v3306 = vadd.f32 %v2914, %v3305
  %3307 = vmatmul.f32.gmra.mxu0 %v126
  %v3308 = vpop.f32.mrf.mxu0
  %v3309 = vadd.f32 %v2917, %v3308
  %3310 = vmatmul.f32.gmra.mxu0 %v128
  %v3311 = vpop.f32.mrf.mxu0
  %v3312 = vadd.f32 %v2920, %v3311
  %3313 = vmatmul.f32.gmra.mxu0 %v130
  %v3314 = vpop.f32.mrf.mxu0
  %v3315 = vadd.f32 %v2923, %v3314
  %3316 = vmatmul.f32.gmra.mxu0 %v132
  %v3317 = vpop.f32.mrf.mxu0
  %v3318 = vadd.f32 %v2926, %v3317
  %3319 = vmatmul.f32.gmra.mxu0 %v134
  %v3320 = vpop.f32.mrf.mxu0
  %v3321 = vadd.f32 %v2929, %v3320
  %3322 = vmatmul.f32.gmra.mxu0 %v136
  %v3323 = vpop.f32.mrf.mxu0
  %v3324 = vadd.f32 %v2932, %v3323
  %3325 = vmatmul.f32.gmra.mxu0 %v138
  %v3326 = vpop.f32.mrf.mxu0
  %v3327 = vadd.f32 %v2935, %v3326
  %3328 = vmatmul.f32.gmra.mxu0 %v140
  %v3329 = vpop.f32.mrf.mxu0
  %v3330 = vadd.f32 %v2938, %v3329
  %3331 = vmatmul.f32.gmra.mxu0 %v142
  %v3332 = vpop.f32.mrf.mxu0
  %v3333 = vadd.f32 %v2941, %v3332
  %3334 = vmatmul.f32.gmra.mxu0 %v144
  %v3335 = vpop.f32.mrf.mxu0
  %v3336 = vadd.f32 %v2944, %v3335
  %3337 = vmatmul.f32.gmra.mxu0 %v146
  %v3338 = vpop.f32.mrf.mxu0
  %v3339 = vadd.f32 %v2947, %v3338
  %3340 = vmatmul.f32.gmra.mxu0 %v148
  %v3341 = vpop.f32.mrf.mxu0
  %v3342 = vadd.f32 %v2950, %v3341
  %3343 = vmatmul.f32.gmra.mxu0 %v150
  %v3344 = vpop.f32.mrf.mxu0
  %v3345 = vadd.f32 %v2953, %v3344
  %3346 = vmatmul.f32.gmra.mxu0 %v152
  %v3347 = vpop.f32.mrf.mxu0
  %v3348 = vadd.f32 %v2956, %v3347
  %3349 = vmatmul.f32.gmra.mxu0 %v154
  %v3350 = vpop.f32.mrf.mxu0
  %v3351 = vadd.f32 %v2959, %v3350
  %3352 = vmatmul.f32.gmra.mxu0 %v156
  %v3353 = vpop.f32.mrf.mxu0
  %v3354 = vadd.f32 %v2962, %v3353
  %3355 = vmatmul.f32.gmra.mxu0 %v158
  %v3356 = vpop.f32.mrf.mxu0
  %v3357 = vadd.f32 %v2965, %v3356
  %3358 = vmatmul.f32.gmra.mxu0 %v160
  %v3359 = vpop.f32.mrf.mxu0
  %v3360 = vadd.f32 %v2968, %v3359
  %3361 = vmatmul.f32.gmra.mxu0 %v162
  %v3362 = vpop.f32.mrf.mxu0
  %v3363 = vadd.f32 %v2971, %v3362
  %3364 = vmatmul.f32.gmra.mxu0 %v164
  %v3365 = vpop.f32.mrf.mxu0
  %v3366 = vadd.f32 %v2974, %v3365
  %3367 = vmatmul.f32.gmra.mxu0 %v166
  %v3368 = vpop.f32.mrf.mxu0
  %v3369 = vadd.f32 %v2977, %v3368
  %3370 = vmatmul.f32.gmra.mxu0 %v168
  %v3371 = vpop.f32.mrf.mxu0
  %v3372 = vadd.f32 %v2980, %v3371
  %3373 = vmatmul.f32.gmra.mxu0 %v170
  %v3374 = vpop.f32.mrf.mxu0
  %v3375 = vadd.f32 %v2983, %v3374
  %3376 = vmatmul.f32.gmra.mxu0 %v172
  %v3377 = vpop.f32.mrf.mxu0
  %v3378 = vadd.f32 %v2986, %v3377
  %3379 = vmatmul.f32.gmra.mxu0 %v174
  %v3380 = vpop.f32.mrf.mxu0
  %v3381 = vadd.f32 %v2989, %v3380
  %3382 = vmatmul.f32.gmra.mxu0 %v176
  %v3383 = vpop.f32.mrf.mxu0
  %v3384 = vadd.f32 %v2992, %v3383
  %3385 = vmatmul.f32.gmra.mxu0 %v178
  %v3386 = vpop.f32.mrf.mxu0
  %v3387 = vadd.f32 %v2995, %v3386
  %3388 = vmatmul.f32.gmra.mxu0 %v180
  %v3389 = vpop.f32.mrf.mxu0
  %v3390 = vadd.f32 %v2998, %v3389
  %3391 = vmatmul.f32.gmra.mxu0 %v182
  %v3392 = vpop.f32.mrf.mxu0
  %v3393 = vadd.f32 %v3001, %v3392
  %3394 = vmatmul.f32.gmra.mxu0 %v184
  %v3395 = vpop.f32.mrf.mxu0
  %v3396 = vadd.f32 %v3004, %v3395
  %3397 = vmatmul.f32.gmra.mxu0 %v186
  %v3398 = vpop.f32.mrf.mxu0
  %v3399 = vadd.f32 %v3007, %v3398
  %3400 = vmatmul.f32.gmra.mxu0 %v188
  %v3401 = vpop.f32.mrf.mxu0
  %v3402 = vadd.f32 %v3010, %v3401
  %3403 = vmatmul.f32.gmra.mxu0 %v190
  %v3404 = vpop.f32.mrf.mxu0
  %v3405 = vadd.f32 %v3013, %v3404
  %3406 = vmatmul.f32.gmra.mxu0 %v192
  %v3407 = vpop.f32.mrf.mxu0
  %v3408 = vadd.f32 %v3016, %v3407
  %3409 = vmatmul.f32.gmra.mxu0 %v194
  %v3410 = vpop.f32.mrf.mxu0
  %v3411 = vadd.f32 %v3019, %v3410
  %3412 = vmatmul.f32.gmra.mxu0 %v196
  %v3413 = vpop.f32.mrf.mxu0
  %v3414 = vadd.f32 %v3022, %v3413
  %3415 = vmatmul.f32.gmra.mxu0 %v198
  %v3416 = vpop.f32.mrf.mxu0
  %v3417 = vadd.f32 %v3025, %v3416
  %3418 = vmatmul.f32.gmra.mxu0 %v200
  %v3419 = vpop.f32.mrf.mxu0
  %v3420 = vadd.f32 %v3028, %v3419
  %3421 = vmatmul.f32.gmra.mxu0 %v202
  %v3422 = vpop.f32.mrf.mxu0
  %v3423 = vadd.f32 %v3031, %v3422
  %3424 = vmatmul.f32.gmra.mxu0 %v204
  %v3425 = vpop.f32.mrf.mxu0
  %v3426 = vadd.f32 %v3034, %v3425
  %3427 = vmatmul.f32.gmra.mxu0 %v206
  %v3428 = vpop.f32.mrf.mxu0
  %v3429 = vadd.f32 %v3037, %v3428
  %3430 = vmatmul.f32.gmra.mxu0 %v208
  %v3431 = vpop.f32.mrf.mxu0
  %v3432 = vadd.f32 %v3040, %v3431
  %3433 = vmatmul.f32.gmra.mxu0 %v210
  %v3434 = vpop.f32.mrf.mxu0
  %v3435 = vadd.f32 %v3043, %v3434
  %3436 = vmatmul.f32.gmra.mxu0 %v212
  %v3437 = vpop.f32.mrf.mxu0
  %v3438 = vadd.f32 %v3046, %v3437
  %3439 = vmatmul.f32.gmra.mxu0 %v214
  %v3440 = vpop.f32.mrf.mxu0
  %v3441 = vadd.f32 %v3049, %v3440
  %3442 = vmatmul.f32.gmra.mxu0 %v216
  %v3443 = vpop.f32.mrf.mxu0
  %v3444 = vadd.f32 %v3052, %v3443
  %3445 = vmatmul.f32.gmra.mxu0 %v218
  %v3446 = vpop.f32.mrf.mxu0
  %v3447 = vadd.f32 %v3055, %v3446
  %3448 = vmatmul.f32.gmra.mxu0 %v220
  %v3449 = vpop.f32.mrf.mxu0
  %v3450 = vadd.f32 %v3058, %v3449
  %3451 = vmatmul.f32.gmra.mxu0 %v222
  %v3452 = vpop.f32.mrf.mxu0
  %v3453 = vadd.f32 %v3061, %v3452
  %3454 = vmatmul.f32.gmra.mxu0 %v224
  %v3455 = vpop.f32.mrf.mxu0
  %v3456 = vadd.f32 %v3064, %v3455
  %3457 = vmatmul.f32.gmra.mxu0 %v226
  %v3458 = vpop.f32.mrf.mxu0
  %v3459 = vadd.f32 %v3067, %v3458
  %3460 = vmatmul.f32.gmra.mxu0 %v228
  %v3461 = vpop.f32.mrf.mxu0
  %v3462 = vadd.f32 %v3070, %v3461
  %3463 = vmatmul.f32.gmra.mxu0 %v230
  %v3464 = vpop.f32.mrf.mxu0
  %v3465 = vadd.f32 %v3073, %v3464
  %3466 = vmatmul.f32.gmra.mxu0 %v232
  %v3467 = vpop.f32.mrf.mxu0
  %v3468 = vadd.f32 %v3076, %v3467
  %3469 = vmatmul.f32.gmra.mxu0 %v234
  %v3470 = vpop.f32.mrf.mxu0
  %v3471 = vadd.f32 %v3079, %v3470
  %3472 = vmatmul.f32.gmra.mxu0 %v236
  %v3473 = vpop.f32.mrf.mxu0
  %v3474 = vadd.f32 %v3082, %v3473
  %3475 = vmatmul.f32.gmra.mxu0 %v238
  %v3476 = vpop.f32.mrf.mxu0
  %v3477 = vadd.f32 %v3085, %v3476
  %3478 = vmatmul.f32.gmra.mxu0 %v240
  %v3479 = vpop.f32.mrf.mxu0
  %v3480 = vadd.f32 %v3088, %v3479
  %3481 = vmatmul.f32.gmra.mxu0 %v242
  %v3482 = vpop.f32.mrf.mxu0
  %v3483 = vadd.f32 %v3091, %v3482
  %3484 = vmatmul.f32.gmra.mxu0 %v244
  %v3485 = vpop.f32.mrf.mxu0
  %v3486 = vadd.f32 %v3094, %v3485
  %3487 = vmatmul.f32.gmra.mxu0 %v246
  %v3488 = vpop.f32.mrf.mxu0
  %v3489 = vadd.f32 %v3097, %v3488
  %3490 = vmatmul.f32.gmra.mxu0 %v248
  %v3491 = vpop.f32.mrf.mxu0
  %v3492 = vadd.f32 %v3100, %v3491
  %3493 = vmatmul.f32.gmra.mxu0 %v250
  %v3494 = vpop.f32.mrf.mxu0
  %v3495 = vadd.f32 %v3103, %v3494
  %3496 = vmatmul.f32.gmra.mxu0 %v252
  %v3497 = vpop.f32.mrf.mxu0
  %v3498 = vadd.f32 %v3106, %v3497
  %3499 = vmatmul.f32.gmra.mxu0 %v254
  %v3500 = vpop.f32.mrf.mxu0
  %v3501 = vadd.f32 %v3109, %v3500
  %3502 = vmatmul.f32.gmra.mxu0 %v256
  %v3503 = vpop.f32.mrf.mxu0
  %v3504 = vadd.f32 %v3112, %v3503
  %3505 = vmatmul.f32.gmra.mxu0 %v258
  %v3506 = vpop.f32.mrf.mxu0
  %v3507 = vadd.f32 %v3115, %v3506
  %3508 = vmatmul.f32.gmra.mxu0 %v260
  %v3509 = vpop.f32.mrf.mxu0
  %v3510 = vadd.f32 %v3118, %v3509
  %3511 = vmatmul.f32.gmra.mxu0 %v262
  %v3512 = vpop.f32.mrf.mxu0
  %v3513 = vadd.f32 %v3121, %v3512
  %3514 = vmatmul.f32.gmra.mxu0 %v264
  %v3515 = vpop.f32.mrf.mxu0
  %v3516 = vadd.f32 %v3124, %v3515
  %3517 = vmatmul.f32.gmra.mxu0 %v266
  %v3518 = vpop.f32.mrf.mxu0
  %v3519 = vadd.f32 %v3127, %v3518
  %3520 = vmatmul.f32.gmra.mxu0 %v268
  %v3521 = vpop.f32.mrf.mxu0
  %v3522 = vadd.f32 %v3130, %v3521
  %3523 = vmatmul.f32.gmra.mxu0 %v270
  %v3524 = vpop.f32.mrf.mxu0
  %v3525 = vadd.f32 %v3133, %v3524
  %3526 = vmatmul.f32.gmra.mxu0 %v272
  %v3527 = vpop.f32.mrf.mxu0
  %v3528 = vadd.f32 %v3136, %v3527
  %3529 = vmatmul.f32.gmra.mxu0 %v274
  %v3530 = vpop.f32.mrf.mxu0
  %v3531 = vadd.f32 %v3139, %v3530
  %3532 = vmatmul.f32.gmra.mxu0 %v276
  %v3533 = vpop.f32.mrf.mxu0
  %v3534 = vadd.f32 %v3142, %v3533
  %3535 = vmatmul.f32.gmra.mxu0 %v278
  %v3536 = vpop.f32.mrf.mxu0
  %v3537 = vadd.f32 %v3145, %v3536
  %3538 = vmatmul.f32.gmra.mxu0 %v280
  %v3539 = vpop.f32.mrf.mxu0
  %v3540 = vadd.f32 %v3148, %v3539
  %3541 = vmatmul.f32.gmra.mxu0 %v282
  %v3542 = vpop.f32.mrf.mxu0
  %v3543 = vadd.f32 %v3151, %v3542
  %3544 = vmatmul.f32.gmra.mxu0 %v284
  %v3545 = vpop.f32.mrf.mxu0
  %v3546 = vadd.f32 %v3154, %v3545
  %3547 = vmatmul.f32.gmra.mxu0 %v286
  %v3548 = vpop.f32.mrf.mxu0
  %v3549 = vadd.f32 %v3157, %v3548
  %3550 = vmatmul.f32.gmra.mxu0 %v288
  %v3551 = vpop.f32.mrf.mxu0
  %v3552 = vadd.f32 %v3160, %v3551
  %3553 = vmatmul.f32.gmra.mxu0 %v290
  %v3554 = vpop.f32.mrf.mxu0
  %v3555 = vadd.f32 %v3163, %v3554
  %3556 = vmatmul.f32.gmra.mxu0 %v292
  %v3557 = vpop.f32.mrf.mxu0
  %v3558 = vadd.f32 %v3166, %v3557
  %3559 = vmatmul.f32.gmra.mxu0 %v294
  %v3560 = vpop.f32.mrf.mxu0
  %v3561 = vadd.f32 %v3169, %v3560
  %3562 = vmatmul.f32.gmra.mxu0 %v296
  %v3563 = vpop.f32.mrf.mxu0
  %v3564 = vadd.f32 %v3172, %v3563
  %3565 = vmatmul.f32.gmra.mxu0 %v298
  %v3566 = vpop.f32.mrf.mxu0
  %v3567 = vadd.f32 %v3175, %v3566
  %3568 = vmatmul.f32.gmra.mxu0 %v300
  %v3569 = vpop.f32.mrf.mxu0
  %v3570 = vadd.f32 %v3178, %v3569
  %3571 = vmatmul.f32.gmra.mxu0 %v302
  %v3572 = vpop.f32.mrf.mxu0
  %v3573 = vadd.f32 %v3181, %v3572
  %3574 = vmatmul.f32.gmra.mxu0 %v304
  %v3575 = vpop.f32.mrf.mxu0
  %v3576 = vadd.f32 %v3184, %v3575
  %3577 = vmatmul.f32.gmra.mxu0 %v306
  %v3578 = vpop.f32.mrf.mxu0
  %v3579 = vadd.f32 %v3187, %v3578
  %3580 = vdwg.mxu0
  %v3581 = vtanh.pop %v855
  %v3582 = vtanh.pop %v1639
  %v3583 = vtanh.pop %v2423
  %v3584 = vtanh.pop %v3207
  %v3585 = vtanh.pop %v858
  %v3586 = vtanh.pop %v1642
  %v3587 = vtanh.pop %v2426
  %v3588 = vtanh.pop %v3210
  %v3589 = vtanh.pop %v861
  %v3590 = vtanh.pop %v1645
  %v3591 = vtanh.pop %v2429
  %v3592 = vtanh.pop %v3213
  %v3593 = vtanh.pop %v864
  %v3594 = vtanh.pop %v1648
  %v3595 = vtanh.pop %v2432
  %v3596 = vtanh.pop %v3216
  %v3597 = vtanh.pop %v867
  %v3598 = vtanh.pop %v1651
  %v3599 = vtanh.pop %v2435
  %v3600 = vtanh.pop %v3219
  %v3601 = vtanh.pop %v870
  %v3602 = vtanh.pop %v1654
  %v3603 = vtanh.pop %v2438
  %v3604 = vtanh.pop %v3222
  %v3605 = vtanh.pop %v873
  %v3606 = vtanh.pop %v1657
  %v3607 = vtanh.pop %v2441
  %v3608 = vtanh.pop %v3225
  %v3609 = vtanh.pop %v876
  %v3610 = vtanh.pop %v1660
  %v3611 = vtanh.pop %v2444
  %v3612 = vtanh.pop %v3228
  %v3613 = vtanh.pop %v879
  %v3614 = vtanh.pop %v1663
  %v3615 = vtanh.pop %v2447
  %v3616 = vtanh.pop %v3231
  %v3617 = vtanh.pop %v882
  %v3618 = vtanh.pop %v1666
  %v3619 = vtanh.pop %v2450
  %v3620 = vtanh.pop %v3234
  %v3621 = vtanh.pop %v885
  %v3622 = vtanh.pop %v1669
  %v3623 = vtanh.pop %v2453
  %v3624 = vtanh.pop %v3237
  %v3625 = vtanh.pop %v888
  %v3626 = vtanh.pop %v1672
  %v3627 = vtanh.pop %v2456
  %v3628 = vtanh.pop %v3240
  %v3629 = vtanh.pop %v891
  %v3630 = vtanh.pop %v1675
  %v3631 = vtanh.pop %v2459
  %v3632 = vtanh.pop %v3243
  %v3633 = vtanh.pop %v894
  %v3634 = vtanh.pop %v1678
  %v3635 = vtanh.pop %v2462
  %v3636 = vtanh.pop %v3246
  %v3637 = vtanh.pop %v897
  %v3638 = vtanh.pop %v1681
  %v3639 = vtanh.pop %v2465
  %v3640 = vtanh.pop %v3249
  %v3641 = vtanh.pop %v900
  %v3642 = vtanh.pop %v1684
  %v3643 = vtanh.pop %v2468
  %v3644 = vtanh.pop %v3252
  %v3645 = vtanh.pop %v903
  %v3646 = vtanh.pop %v1687
  %v3647 = vtanh.pop %v2471
  %v3648 = vtanh.pop %v3255
  %v3649 = vtanh.pop %v906
  %v3650 = vtanh.pop %v1690
  %v3651 = vtanh.pop %v2474
  %v3652 = vtanh.pop %v3258
  %v3653 = vtanh.pop %v909
  %v3654 = vtanh.pop %v1693
  %v3655 = vtanh.pop %v2477
  %v3656 = vtanh.pop %v3261
  %v3657 = vtanh.pop %v912
  %v3658 = vtanh.pop %v1696
  %v3659 = vtanh.pop %v2480
  %v3660 = vtanh.pop %v3264
  %v3661 = vtanh.pop %v915
  %v3662 = vtanh.pop %v1699
  %v3663 = vtanh.pop %v2483
  %v3664 = vtanh.pop %v3267
  %v3665 = vtanh.pop %v918
  %v3666 = vtanh.pop %v1702
  %v3667 = vtanh.pop %v2486
  %v3668 = vtanh.pop %v3270
  %v3669 = vtanh.pop %v921
  %v3670 = vtanh.pop %v1705
  %v3671 = vtanh.pop %v2489
  %v3672 = vtanh.pop %v3273
  %v3673 = vtanh.pop %v924
  %v3674 = vtanh.pop %v1708
  %v3675 = vtanh.pop %v2492
  %v3676 = vtanh.pop %v3276
  %v3677 = vtanh.pop %v927
  %v3678 = vtanh.pop %v1711
  %v3679 = vtanh.pop %v2495
  %v3680 = vtanh.pop %v3279
  %v3681 = vtanh.pop %v930
  %v3682 = vtanh.pop %v1714
  %v3683 = vtanh.pop %v2498
  %v3684 = vtanh.pop %v3282
  %v3685 = vtanh.pop %v933
  %v3686 = vtanh.pop %v1717
  %v3687 = vtanh.pop %v2501
  %v3688 = vtanh.pop %v3285
  %v3689 = vtanh.pop %v936
  %v3690 = vtanh.pop %v1720
  %v3691 = vtanh.pop %v2504
  %v3692 = vtanh.pop %v3288
  %v3693 = vtanh.pop %v939
  %v3694 = vtanh.pop %v1723
  %v3695 = vtanh.pop %v2507
  %v3696 = vtanh.pop %v3291
  %v3697 = vtanh.pop %v942
  %v3698 = vtanh.pop %v1726
  %v3699 = vtanh.pop %v2510
  %v3700 = vtanh.pop %v3294
  %v3701 = vtanh.pop %v945
  %v3702 = vtanh.pop %v1729
  %v3703 = vtanh.pop %v2513
  %v3704 = vtanh.pop %v3297
  %v3705 = vtanh.pop %v948
  %v3706 = vtanh.pop %v1732
  %v3707 = vtanh.pop %v2516
  %v3708 = vtanh.pop %v3300
  %v3709 = vtanh.pop %v951
  %v3710 = vtanh.pop %v1735
  %v3711 = vtanh.pop %v2519
  %v3712 = vtanh.pop %v3303
  %v3713 = vtanh.pop %v954
  %v3714 = vtanh.pop %v1738
  %v3715 = vtanh.pop %v2522
  %v3716 = vtanh.pop %v3306
  %v3717 = vtanh.pop %v957
  %v3718 = vtanh.pop %v1741
  %v3719 = vtanh.pop %v2525
  %v3720 = vtanh.pop %v3309
  %v3721 = vtanh.pop %v960
  %v3722 = vtanh.pop %v1744
  %v3723 = vtanh.pop %v2528
  %v3724 = vtanh.pop %v3312
  %v3725 = vtanh.pop %v963
  %v3726 = vtanh.pop %v1747
  %v3727 = vtanh.pop %v2531
  %v3728 = vtanh.pop %v3315
  %v3729 = vtanh.pop %v966
  %v3730 = vtanh.pop %v1750
  %v3731 = vtanh.pop %v2534
  %v3732 = vtanh.pop %v3318
  %v3733 = vtanh.pop %v969
  %v3734 = vtanh.pop %v1753
  %v3735 = vtanh.pop %v2537
  %v3736 = vtanh.pop %v3321
  %v3737 = vtanh.pop %v972
  %v3738 = vtanh.pop %v1756
  %v3739 = vtanh.pop %v2540
  %v3740 = vtanh.pop %v3324
  %v3741 = vtanh.pop %v975
  %v3742 = vtanh.pop %v1759
  %v3743 = vtanh.pop %v2543
  %v3744 = vtanh.pop %v3327
  %v3745 = vtanh.pop %v978
  %v3746 = vtanh.pop %v1762
  %v3747 = vtanh.pop %v2546
  %v3748 = vtanh.pop %v3330
  %v3749 = vtanh.pop %v981
  %v3750 = vtanh.pop %v1765
  %v3751 = vtanh.pop %v2549
  %v3752 = vtanh.pop %v3333
  %v3753 = vtanh.pop %v984
  %v3754 = vtanh.pop %v1768
  %v3755 = vtanh.pop %v2552
  %v3756 = vtanh.pop %v3336
  %v3757 = vtanh.pop %v987
  %v3758 = vtanh.pop %v1771
  %v3759 = vtanh.pop %v2555
  %v3760 = vtanh.pop %v3339
  %v3761 = vtanh.pop %v990
  %v3762 = vtanh.pop %v1774
  %v3763 = vtanh.pop %v2558
  %v3764 = vtanh.pop %v3342
  %v3765 = vtanh.pop %v993
  %v3766 = vtanh.pop %v1777
  %v3767 = vtanh.pop %v2561
  %v3768 = vtanh.pop %v3345
  %v3769 = vtanh.pop %v996
  %v3770 = vtanh.pop %v1780
  %v3771 = vtanh.pop %v2564
  %v3772 = vtanh.pop %v3348
  %v3773 = vtanh.pop %v999
  %v3774 = vtanh.pop %v1783
  %v3775 = vtanh.pop %v2567
  %v3776 = vtanh.pop %v3351
  %v3777 = vtanh.pop %v1002
  %v3778 = vtanh.pop %v1786
  %v3779 = vtanh.pop %v2570
  %v3780 = vtanh.pop %v3354
  %v3781 = vtanh.pop %v1005
  %v3782 = vtanh.pop %v1789
  %v3783 = vtanh.pop %v2573
  %v3784 = vtanh.pop %v3357
  %v3785 = vtanh.pop %v1008
  %v3786 = vtanh.pop %v1792
  %v3787 = vtanh.pop %v2576
  %v3788 = vtanh.pop %v3360
  %v3789 = vtanh.pop %v1011
  %v3790 = vtanh.pop %v1795
  %v3791 = vtanh.pop %v2579
  %v3792 = vtanh.pop %v3363
  %v3793 = vtanh.pop %v1014
  %v3794 = vtanh.pop %v1798
  %v3795 = vtanh.pop %v2582
  %v3796 = vtanh.pop %v3366
  %v3797 = vtanh.pop %v1017
  %v3798 = vtanh.pop %v1801
  %v3799 = vtanh.pop %v2585
  %v3800 = vtanh.pop %v3369
  %v3801 = vtanh.pop %v1020
  %v3802 = vtanh.pop %v1804
  %v3803 = vtanh.pop %v2588
  %v3804 = vtanh.pop %v3372
  %v3805 = vtanh.pop %v1023
  %v3806 = vtanh.pop %v1807
  %v3807 = vtanh.pop %v2591
  %v3808 = vtanh.pop %v3375
  %v3809 = vtanh.pop %v1026
  %v3810 = vtanh.pop %v1810
  %v3811 = vtanh.pop %v2594
  %v3812 = vtanh.pop %v3378
  %v3813 = vtanh.pop %v1029
  %v3814 = vtanh.pop %v1813
  %v3815 = vtanh.pop %v2597
  %v3816 = vtanh.pop %v3381
  %v3817 = vtanh.pop %v1032
  %v3818 = vtanh.pop %v1816
  %v3819 = vtanh.pop %v2600
  %v3820 = vtanh.pop %v3384
  %v3821 = vtanh.pop %v1035
  %v3822 = vtanh.pop %v1819
  %v3823 = vtanh.pop %v2603
  %v3824 = vtanh.pop %v3387
  %v3825 = vtanh.pop %v1038
  %v3826 = vtanh.pop %v1822
  %v3827 = vtanh.pop %v2606
  %v3828 = vtanh.pop %v3390
  %v3829 = vtanh.pop %v1041
  %v3830 = vtanh.pop %v1825
  %v3831 = vtanh.pop %v2609
  %v3832 = vtanh.pop %v3393
  %v3833 = vtanh.pop %v1044
  %v3834 = vtanh.pop %v1828
  %v3835 = vtanh.pop %v2612
  %v3836 = vtanh.pop %v3396
  %v3837 = vtanh.pop %v1047
  %v3838 = vtanh.pop %v1831
  %v3839 = vtanh.pop %v2615
  %v3840 = vtanh.pop %v3399
  %v3841 = vtanh.pop %v1050
  %v3842 = vtanh.pop %v1834
  %v3843 = vtanh.pop %v2618
  %v3844 = vtanh.pop %v3402
  %v3845 = vtanh.pop %v1053
  %v3846 = vtanh.pop %v1837
  %v3847 = vtanh.pop %v2621
  %v3848 = vtanh.pop %v3405
  %v3849 = vtanh.pop %v1056
  %v3850 = vtanh.pop %v1840
  %v3851 = vtanh.pop %v2624
  %v3852 = vtanh.pop %v3408
  %v3853 = vtanh.pop %v1059
  %v3854 = vtanh.pop %v1843
  %v3855 = vtanh.pop %v2627
  %v3856 = vtanh.pop %v3411
  %v3857 = vtanh.pop %v1062
  %v3858 = vtanh.pop %v1846
  %v3859 = vtanh.pop %v2630
  %v3860 = vtanh.pop %v3414
  %v3861 = vtanh.pop %v1065
  %v3862 = vtanh.pop %v1849
  %v3863 = vtanh.pop %v2633
  %v3864 = vtanh.pop %v3417
  %v3865 = vtanh.pop %v1068
  %v3866 = vtanh.pop %v1852
  %v3867 = vtanh.pop %v2636
  %v3868 = vtanh.pop %v3420
  %v3869 = vtanh.pop %v1071
  %v3870 = vtanh.pop %v1855
  %v3871 = vtanh.pop %v2639
  %v3872 = vtanh.pop %v3423
  %v3873 = vtanh.pop %v1074
  %v3874 = vtanh.pop %v1858
  %v3875 = vtanh.pop %v2642
  %v3876 = vtanh.pop %v3426
  %v3877 = vtanh.pop %v1077
  %v3878 = vtanh.pop %v1861
  %v3879 = vtanh.pop %v2645
  %v3880 = vtanh.pop %v3429
  %v3881 = vtanh.pop %v1080
  %v3882 = vtanh.pop %v1864
  %v3883 = vtanh.pop %v2648
  %v3884 = vtanh.pop %v3432
  %v3885 = vtanh.pop %v1083
  %v3886 = vtanh.pop %v1867
  %v3887 = vtanh.pop %v2651
  %v3888 = vtanh.pop %v3435
  %v3889 = vtanh.pop %v1086
  %v3890 = vtanh.pop %v1870
  %v3891 = vtanh.pop %v2654
  %v3892 = vtanh.pop %v3438
  %v3893 = vtanh.pop %v1089
  %v3894 = vtanh.pop %v1873
  %v3895 = vtanh.pop %v2657
  %v3896 = vtanh.pop %v3441
  %v3897 = vtanh.pop %v1092
  %v3898 = vtanh.pop %v1876
  %v3899 = vtanh.pop %v2660
  %v3900 = vtanh.pop %v3444
  %v3901 = vtanh.pop %v1095
  %v3902 = vtanh.pop %v1879
  %v3903 = vtanh.pop %v2663
  %v3904 = vtanh.pop %v3447
  %v3905 = vtanh.pop %v1098
  %v3906 = vtanh.pop %v1882
  %v3907 = vtanh.pop %v2666
  %v3908 = vtanh.pop %v3450
  %v3909 = vtanh.pop %v1101
  %v3910 = vtanh.pop %v1885
  %v3911 = vtanh.pop %v2669
  %v3912 = vtanh.pop %v3453
  %v3913 = vtanh.pop %v1104
  %v3914 = vtanh.pop %v1888
  %v3915 = vtanh.pop %v2672
  %v3916 = vtanh.pop %v3456
  %v3917 = vtanh.pop %v1107
  %v3918 = vtanh.pop %v1891
  %v3919 = vtanh.pop %v2675
  %v3920 = vtanh.pop %v3459
  %v3921 = vtanh.pop %v1110
  %v3922 = vtanh.pop %v1894
  %v3923 = vtanh.pop %v2678
  %v3924 = vtanh.pop %v3462
  %v3925 = vtanh.pop %v1113
  %v3926 = vtanh.pop %v1897
  %v3927 = vtanh.pop %v2681
  %v3928 = vtanh.pop %v3465
  %v3929 = vtanh.pop %v1116
  %v3930 = vtanh.pop %v1900
  %v3931 = vtanh.pop %v2684
  %v3932 = vtanh.pop %v3468
  %v3933 = vtanh.pop %v1119
  %v3934 = vtanh.pop %v1903
  %v3935 = vtanh.pop %v2687
  %v3936 = vtanh.pop %v3471
  %v3937 = vtanh.pop %v1122
  %v3938 = vtanh.pop %v1906
  %v3939 = vtanh.pop %v2690
  %v3940 = vtanh.pop %v3474
  %v3941 = vtanh.pop %v1125
  %v3942 = vtanh.pop %v1909
  %v3943 = vtanh.pop %v2693
  %v3944 = vtanh.pop %v3477
  %v3945 = vtanh.pop %v1128
  %v3946 = vtanh.pop %v1912
  %v3947 = vtanh.pop %v2696
  %v3948 = vtanh.pop %v3480
  %v3949 = vtanh.pop %v1131
  %v3950 = vtanh.pop %v1915
  %v3951 = vtanh.pop %v2699
  %v3952 = vtanh.pop %v3483
  %v3953 = vtanh.pop %v1134
  %v3954 = vtanh.pop %v1918
  %v3955 = vtanh.pop %v2702
  %v3956 = vtanh.pop %v3486
  %v3957 = vtanh.pop %v1137
  %v3958 = vtanh.pop %v1921
  %v3959 = vtanh.pop %v2705
  %v3960 = vtanh.pop %v3489
  %v3961 = vtanh.pop %v1140
  %v3962 = vtanh.pop %v1924
  %v3963 = vtanh.pop %v2708
  %v3964 = vtanh.pop %v3492
  %v3965 = vtanh.pop %v1143
  %v3966 = vtanh.pop %v1927
  %v3967 = vtanh.pop %v2711
  %v3968 = vtanh.pop %v3495
  %v3969 = vtanh.pop %v1146
  %v3970 = vtanh.pop %v1930
  %v3971 = vtanh.pop %v2714
  %v3972 = vtanh.pop %v3498
  %v3973 = vtanh.pop %v1149
  %v3974 = vtanh.pop %v1933
  %v3975 = vtanh.pop %v2717
  %v3976 = vtanh.pop %v3501
  %v3977 = vtanh.pop %v1152
  %v3978 = vtanh.pop %v1936
  %v3979 = vtanh.pop %v2720
  %v3980 = vtanh.pop %v3504
  %v3981 = vtanh.pop %v1155
  %v3982 = vtanh.pop %v1939
  %v3983 = vtanh.pop %v2723
  %v3984 = vtanh.pop %v3507
  %v3985 = vtanh.pop %v1158
  %v3986 = vtanh.pop %v1942
  %v3987 = vtanh.pop %v2726
  %v3988 = vtanh.pop %v3510
  %v3989 = vtanh.pop %v1161
  %v3990 = vtanh.pop %v1945
  %v3991 = vtanh.pop %v2729
  %v3992 = vtanh.pop %v3513
  %v3993 = vtanh.pop %v1164
  %v3994 = vtanh.pop %v1948
  %v3995 = vtanh.pop %v2732
  %v3996 = vtanh.pop %v3516
  %v3997 = vtanh.pop %v1167
  %v3998 = vtanh.pop %v1951
  %v3999 = vtanh.pop %v2735
  %v4000 = vtanh.pop %v3519
  %v4001 = vtanh.pop %v1170
  %v4002 = vtanh.pop %v1954
  %v4003 = vtanh.pop %v2738
  %v4004 = vtanh.pop %v3522
  %v4005 = vtanh.pop %v1173
  %v4006 = vtanh.pop %v1957
  %v4007 = vtanh.pop %v2741
  %v4008 = vtanh.pop %v3525
  %v4009 = vtanh.pop %v1176
  %v4010 = vtanh.pop %v1960
  %v4011 = vtanh.pop %v2744
  %v4012 = vtanh.pop %v3528
  %v4013 = vtanh.pop %v1179
  %v4014 = vtanh.pop %v1963
  %v4015 = vtanh.pop %v2747
  %v4016 = vtanh.pop %v3531
  %v4017 = vtanh.pop %v1182
  %v4018 = vtanh.pop %v1966
  %v4019 = vtanh.pop %v2750
  %v4020 = vtanh.pop %v3534
  %v4021 = vtanh.pop %v1185
  %v4022 = vtanh.pop %v1969
  %v4023 = vtanh.pop %v2753
  %v4024 = vtanh.pop %v3537
  %v4025 = vtanh.pop %v1188
  %v4026 = vtanh.pop %v1972
  %v4027 = vtanh.pop %v2756
  %v4028 = vtanh.pop %v3540
  %v4029 = vtanh.pop %v1191
  %v4030 = vtanh.pop %v1975
  %v4031 = vtanh.pop %v2759
  %v4032 = vtanh.pop %v3543
  %v4033 = vtanh.pop %v1194
  %v4034 = vtanh.pop %v1978
  %v4035 = vtanh.pop %v2762
  %v4036 = vtanh.pop %v3546
  %v4037 = vtanh.pop %v1197
  %v4038 = vtanh.pop %v1981
  %v4039 = vtanh.pop %v2765
  %v4040 = vtanh.pop %v3549
  %v4041 = vtanh.pop %v1200
  %v4042 = vtanh.pop %v1984
  %v4043 = vtanh.pop %v2768
  %v4044 = vtanh.pop %v3552
  %v4045 = vtanh.pop %v1203
  %v4046 = vtanh.pop %v1987
  %v4047 = vtanh.pop %v2771
  %v4048 = vtanh.pop %v3555
  %v4049 = vtanh.pop %v1206
  %v4050 = vtanh.pop %v1990
  %v4051 = vtanh.pop %v2774
  %v4052 = vtanh.pop %v3558
  %v4053 = vtanh.pop %v1209
  %v4054 = vtanh.pop %v1993
  %v4055 = vtanh.pop %v2777
  %v4056 = vtanh.pop %v3561
  %v4057 = vtanh.pop %v1212
  %v4058 = vtanh.pop %v1996
  %v4059 = vtanh.pop %v2780
  %v4060 = vtanh.pop %v3564
  %v4061 = vtanh.pop %v1215
  %v4062 = vtanh.pop %v1999
  %v4063 = vtanh.pop %v2783
  %v4064 = vtanh.pop %v3567
  %v4065 = vtanh.pop %v1218
  %v4066 = vtanh.pop %v2002
  %v4067 = vtanh.pop %v2786
  %v4068 = vtanh.pop %v3570
  %v4069 = vtanh.pop %v1221
  %v4070 = vtanh.pop %v2005
  %v4071 = vtanh.pop %v2789
  %v4072 = vtanh.pop %v3573
  %v4073 = vtanh.pop %v1224
  %v4074 = vtanh.pop %v2008
  %v4075 = vtanh.pop %v2792
  %v4076 = vtanh.pop %v3576
  %v4077 = vtanh.pop %v1227
  %v4078 = vtanh.pop %v2011
  %v4079 = vtanh.pop %v2795
  %v4080 = vtanh.pop %v3579
  %v4081 = vld [vmem:[%s3] sm:$0xff]
  %v4082 = vld [vmem:[%s3 + $0x8] sm:$0xff]
  %v4083 = vld [vmem:[%s3 + $0x10] sm:$0xff]
  %v4084 = vld [vmem:[%s3 + $0x18] sm:$0xff]
  %v4085 = vadd.f32 %v3581, %v3585
  %v4086 = vadd.f32 %v4085, %v3589
  %v4087 = vadd.f32 %v4086, %v3593
  %v4088 = vadd.f32 %v4087, %v3597
  %v4089 = vadd.f32 %v4088, %v3601
  %v4090 = vadd.f32 %v4089, %v3605
  %v4091 = vadd.f32 %v4090, %v3609
  %v4092 = vadd.f32 %v4091, %v3613
  %v4093 = vadd.f32 %v4092, %v3617
  %v4094 = vadd.f32 %v4093, %v3621
  %v4095 = vadd.f32 %v4094, %v3625
  %v4096 = vadd.f32 %v4095, %v3629
  %v4097 = vadd.f32 %v4096, %v3633
  %v4098 = vadd.f32 %v4097, %v3637
  %v4099 = vadd.f32 %v4098, %v3641
  %v4100 = vadd.f32 %v4099, %v3645
  %v4101 = vadd.f32 %v4100, %v3649
  %v4102 = vadd.f32 %v4101, %v3653
  %v4103 = vadd.f32 %v4102, %v3657
  %v4104 = vadd.f32 %v4103, %v3661
  %v4105 = vadd.f32 %v4104, %v3665
  %v4106 = vadd.f32 %v4105, %v3669
  %v4107 = vadd.f32 %v4106, %v3673
  %v4108 = vadd.f32 %v4107, %v3677
  %v4109 = vadd.f32 %v4108, %v3681
  %v4110 = vadd.f32 %v4109, %v3685
  %v4111 = vadd.f32 %v4110, %v3689
  %v4112 = vadd.f32 %v4111, %v3693
  %v4113 = vadd.f32 %v4112, %v3697
  %v4114 = vadd.f32 %v4113, %v3701
  %v4115 = vadd.f32 %v4114, %v3705
  %v4116 = vadd.f32 %v4115, %v3709
  %v4117 = vadd.f32 %v4116, %v3713
  %v4118 = vadd.f32 %v4117, %v3717
  %v4119 = vadd.f32 %v4118, %v3721
  %v4120 = vadd.f32 %v4119, %v3725
  %v4121 = vadd.f32 %v4120, %v3729
  %v4122 = vadd.f32 %v4121, %v3733
  %v4123 = vadd.f32 %v4122, %v3737
  %v4124 = vadd.f32 %v4123, %v3741
  %v4125 = vadd.f32 %v4124, %v3745
  %v4126 = vadd.f32 %v4125, %v3749
  %v4127 = vadd.f32 %v4126, %v3753
  %v4128 = vadd.f32 %v4127, %v3757
  %v4129 = vadd.f32 %v4128, %v3761
  %v4130 = vadd.f32 %v4129, %v3765
  %v4131 = vadd.f32 %v4130, %v3769
  %v4132 = vadd.f32 %v4131, %v3773
  %v4133 = vadd.f32 %v4132, %v3777
  %v4134 = vadd.f32 %v4133, %v3781
  %v4135 = vadd.f32 %v4134, %v3785
  %v4136 = vadd.f32 %v4135, %v3789
  %v4137 = vadd.f32 %v4136, %v3793
  %v4138 = vadd.f32 %v4137, %v3797
  %v4139 = vadd.f32 %v4138, %v3801
  %v4140 = vadd.f32 %v4139, %v3805
  %v4141 = vadd.f32 %v4140, %v3809
  %v4142 = vadd.f32 %v4141, %v3813
  %v4143 = vadd.f32 %v4142, %v3817
  %v4144 = vadd.f32 %v4143, %v3821
  %v4145 = vadd.f32 %v4144, %v3825
  %v4146 = vadd.f32 %v4145, %v3829
  %v4147 = vadd.f32 %v4146, %v3833
  %v4148 = vadd.f32 %v4147, %v3837
  %v4149 = vadd.f32 %v4148, %v3841
  %v4150 = vadd.f32 %v4149, %v3845
  %v4151 = vadd.f32 %v4150, %v3849
  %v4152 = vadd.f32 %v4151, %v3853
  %v4153 = vadd.f32 %v4152, %v3857
  %v4154 = vadd.f32 %v4153, %v3861
  %v4155 = vadd.f32 %v4154, %v3865
  %v4156 = vadd.f32 %v4155, %v3869
  %v4157 = vadd.f32 %v4156, %v3873
  %v4158 = vadd.f32 %v4157, %v3877
  %v4159 = vadd.f32 %v4158, %v3881
  %v4160 = vadd.f32 %v4159, %v3885
  %v4161 = vadd.f32 %v4160, %v3889
  %v4162 = vadd.f32 %v4161, %v3893
  %v4163 = vadd.f32 %v4162, %v3897
  %v4164 = vadd.f32 %v4163, %v3901
  %v4165 = vadd.f32 %v4164, %v3905
  %v4166 = vadd.f32 %v4165, %v3909
  %v4167 = vadd.f32 %v4166, %v3913
  %v4168 = vadd.f32 %v4167, %v3917
  %v4169 = vadd.f32 %v4168, %v3921
  %v4170 = vadd.f32 %v4169, %v3925
  %v4171 = vadd.f32 %v4170, %v3929
  %v4172 = vadd.f32 %v4171, %v3933
  %v4173 = vadd.f32 %v4172, %v3937
  %v4174 = vadd.f32 %v4173, %v3941
  %v4175 = vadd.f32 %v4174, %v3945
  %v4176 = vadd.f32 %v4175, %v3949
  %v4177 = vadd.f32 %v4176, %v3953
  %v4178 = vadd.f32 %v4177, %v3957
  %v4179 = vadd.f32 %v4178, %v3961
  %v4180 = vadd.f32 %v4179, %v3965
  %v4181 = vadd.f32 %v4180, %v3969
  %v4182 = vadd.f32 %v4181, %v3973
  %v4183 = vadd.f32 %v4182, %v3977
  %v4184 = vadd.f32 %v4183, %v3981
  %v4185 = vadd.f32 %v4184, %v3985
  %v4186 = vadd.f32 %v4185, %v3989
  %v4187 = vadd.f32 %v4186, %v3993
  %v4188 = vadd.f32 %v4187, %v3997
  %v4189 = vadd.f32 %v4188, %v4001
  %v4190 = vadd.f32 %v4189, %v4005
  %v4191 = vadd.f32 %v4190, %v4009
  %v4192 = vadd.f32 %v4191, %v4013
  %v4193 = vadd.f32 %v4192, %v4017
  %v4194 = vadd.f32 %v4193, %v4021
  %v4195 = vadd.f32 %v4194, %v4025
  %v4196 = vadd.f32 %v4195, %v4029
  %v4197 = vadd.f32 %v4196, %v4033
  %v4198 = vadd.f32 %v4197, %v4037
  %v4199 = vadd.f32 %v4198, %v4041
  %v4200 = vadd.f32 %v4199, %v4045
  %v4201 = vadd.f32 %v4200, %v4049
  %v4202 = vadd.f32 %v4201, %v4053
  %v4203 = vadd.f32 %v4202, %v4057
  %v4204 = vadd.f32 %v4203, %v4061
  %v4205 = vadd.f32 %v4204, %v4065
  %v4206 = vadd.f32 %v4205, %v4069
  %v4207 = vadd.f32 %v4206, %v4073
  %v4208 = vadd.f32 %v4207, %v4077
  %v4209 = vrot.slane %v4208, 4
  %v4210 = vadd.f32 %v4208, %v4209
  %v4211 = vrot.slane %v4210, 2
  %v4212 = vadd.f32 %v4210, %v4211
  %v4213 = vrot.slane %v4212, 1
  %v4214 = vadd.f32 %v4212, %v4213
  %v4215 = vadd.f32 %v3582, %v3586
  %v4216 = vadd.f32 %v4215, %v3590
  %v4217 = vadd.f32 %v4216, %v3594
  %v4218 = vadd.f32 %v4217, %v3598
  %v4219 = vadd.f32 %v4218, %v3602
  %v4220 = vadd.f32 %v4219, %v3606
  %v4221 = vadd.f32 %v4220, %v3610
  %v4222 = vadd.f32 %v4221, %v3614
  %v4223 = vadd.f32 %v4222, %v3618
  %v4224 = vadd.f32 %v4223, %v3622
  %v4225 = vadd.f32 %v4224, %v3626
  %v4226 = vadd.f32 %v4225, %v3630
  %v4227 = vadd.f32 %v4226, %v3634
  %v4228 = vadd.f32 %v4227, %v3638
  %v4229 = vadd.f32 %v4228, %v3642
  %v4230 = vadd.f32 %v4229, %v3646
  %v4231 = vadd.f32 %v4230, %v3650
  %v4232 = vadd.f32 %v4231, %v3654
  %v4233 = vadd.f32 %v4232, %v3658
  %v4234 = vadd.f32 %v4233, %v3662
  %v4235 = vadd.f32 %v4234, %v3666
  %v4236 = vadd.f32 %v4235, %v3670
  %v4237 = vadd.f32 %v4236, %v3674
  %v4238 = vadd.f32 %v4237, %v3678
  %v4239 = vadd.f32 %v4238, %v3682
  %v4240 = vadd.f32 %v4239, %v3686
  %v4241 = vadd.f32 %v4240, %v3690
  %v4242 = vadd.f32 %v4241, %v3694
  %v4243 = vadd.f32 %v4242, %v3698
  %v4244 = vadd.f32 %v4243, %v3702
  %v4245 = vadd.f32 %v4244, %v3706
  %v4246 = vadd.f32 %v4245, %v3710
  %v4247 = vadd.f32 %v4246, %v3714
  %v4248 = vadd.f32 %v4247, %v3718
  %v4249 = vadd.f32 %v4248, %v3722
  %v4250 = vadd.f32 %v4249, %v3726
  %v4251 = vadd.f32 %v4250, %v3730
  %v4252 = vadd.f32 %v4251, %v3734
  %v4253 = vadd.f32 %v4252, %v3738
  %v4254 = vadd.f32 %v4253, %v3742
  %v4255 = vadd.f32 %v4254, %v3746
  %v4256 = vadd.f32 %v4255, %v3750
  %v4257 = vadd.f32 %v4256, %v3754
  %v4258 = vadd.f32 %v4257, %v3758
  %v4259 = vadd.f32 %v4258, %v3762
  %v4260 = vadd.f32 %v4259, %v3766
  %v4261 = vadd.f32 %v4260, %v3770
  %v4262 = vadd.f32 %v4261, %v3774
  %v4263 = vadd.f32 %v4262, %v3778
  %v4264 = vadd.f32 %v4263, %v3782
  %v4265 = vadd.f32 %v4264, %v3786
  %v4266 = vadd.f32 %v4265, %v3790
  %v4267 = vadd.f32 %v4266, %v3794
  %v4268 = vadd.f32 %v4267, %v3798
  %v4269 = vadd.f32 %v4268, %v3802
  %v4270 = vadd.f32 %v4269, %v3806
  %v4271 = vadd.f32 %v4270, %v3810
  %v4272 = vadd.f32 %v4271, %v3814
  %v4273 = vadd.f32 %v4272, %v3818
  %v4274 = vadd.f32 %v4273, %v3822
  %v4275 = vadd.f32 %v4274, %v3826
  %v4276 = vadd.f32 %v4275, %v3830
  %v4277 = vadd.f32 %v4276, %v3834
  %v4278 = vadd.f32 %v4277, %v3838
  %v4279 = vadd.f32 %v4278, %v3842
  %v4280 = vadd.f32 %v4279, %v3846
  %v4281 = vadd.f32 %v4280, %v3850
  %v4282 = vadd.f32 %v4281, %v3854
  %v4283 = vadd.f32 %v4282, %v3858
  %v4284 = vadd.f32 %v4283, %v3862
  %v4285 = vadd.f32 %v4284, %v3866
  %v4286 = vadd.f32 %v4285, %v3870
  %v4287 = vadd.f32 %v4286, %v3874
  %v4288 = vadd.f32 %v4287, %v3878
  %v4289 = vadd.f32 %v4288, %v3882
  %v4290 = vadd.f32 %v4289, %v3886
  %v4291 = vadd.f32 %v4290, %v3890
  %v4292 = vadd.f32 %v4291, %v3894
  %v4293 = vadd.f32 %v4292, %v3898
  %v4294 = vadd.f32 %v4293, %v3902
  %v4295 = vadd.f32 %v4294, %v3906
  %v4296 = vadd.f32 %v4295, %v3910
  %v4297 = vadd.f32 %v4296, %v3914
  %v4298 = vadd.f32 %v4297, %v3918
  %v4299 = vadd.f32 %v4298, %v3922
  %v4300 = vadd.f32 %v4299, %v3926
  %v4301 = vadd.f32 %v4300, %v3930
  %v4302 = vadd.f32 %v4301, %v3934
  %v4303 = vadd.f32 %v4302, %v3938
  %v4304 = vadd.f32 %v4303, %v3942
  %v4305 = vadd.f32 %v4304, %v3946
  %v4306 = vadd.f32 %v4305, %v3950
  %v4307 = vadd.f32 %v4306, %v3954
  %v4308 = vadd.f32 %v4307, %v3958
  %v4309 = vadd.f32 %v4308, %v3962
  %v4310 = vadd.f32 %v4309, %v3966
  %v4311 = vadd.f32 %v4310, %v3970
  %v4312 = vadd.f32 %v4311, %v3974
  %v4313 = vadd.f32 %v4312, %v3978
  %v4314 = vadd.f32 %v4313, %v3982
  %v4315 = vadd.f32 %v4314, %v3986
  %v4316 = vadd.f32 %v4315, %v3990
  %v4317 = vadd.f32 %v4316, %v3994
  %v4318 = vadd.f32 %v4317, %v3998
  %v4319 = vadd.f32 %v4318, %v4002
  %v4320 = vadd.f32 %v4319, %v4006
  %v4321 = vadd.f32 %v4320, %v4010
  %v4322 = vadd.f32 %v4321, %v4014
  %v4323 = vadd.f32 %v4322, %v4018
  %v4324 = vadd.f32 %v4323, %v4022
  %v4325 = vadd.f32 %v4324, %v4026
  %v4326 = vadd.f32 %v4325, %v4030
  %v4327 = vadd.f32 %v4326, %v4034
  %v4328 = vadd.f32 %v4327, %v4038
  %v4329 = vadd.f32 %v4328, %v4042
  %v4330 = vadd.f32 %v4329, %v4046
  %v4331 = vadd.f32 %v4330, %v4050
  %v4332 = vadd.f32 %v4331, %v4054
  %v4333 = vadd.f32 %v4332, %v4058
  %v4334 = vadd.f32 %v4333, %v4062
  %v4335 = vadd.f32 %v4334, %v4066
  %v4336 = vadd.f32 %v4335, %v4070
  %v4337 = vadd.f32 %v4336, %v4074
  %v4338 = vadd.f32 %v4337, %v4078
  %v4339 = vrot.slane %v4338, 4
  %v4340 = vadd.f32 %v4338, %v4339
  %v4341 = vrot.slane %v4340, 2
  %v4342 = vadd.f32 %v4340, %v4341
  %v4343 = vrot.slane %v4342, 1
  %v4344 = vadd.f32 %v4342, %v4343
  %v4345 = vadd.f32 %v3583, %v3587
  %v4346 = vadd.f32 %v4345, %v3591
  %v4347 = vadd.f32 %v4346, %v3595
  %v4348 = vadd.f32 %v4347, %v3599
  %v4349 = vadd.f32 %v4348, %v3603
  %v4350 = vadd.f32 %v4349, %v3607
  %v4351 = vadd.f32 %v4350, %v3611
  %v4352 = vadd.f32 %v4351, %v3615
  %v4353 = vadd.f32 %v4352, %v3619
  %v4354 = vadd.f32 %v4353, %v3623
  %v4355 = vadd.f32 %v4354, %v3627
  %v4356 = vadd.f32 %v4355, %v3631
  %v4357 = vadd.f32 %v4356, %v3635
  %v4358 = vadd.f32 %v4357, %v3639
  %v4359 = vadd.f32 %v4358, %v3643
  %v4360 = vadd.f32 %v4359, %v3647
  %v4361 = vadd.f32 %v4360, %v3651
  %v4362 = vadd.f32 %v4361, %v3655
  %v4363 = vadd.f32 %v4362, %v3659
  %v4364 = vadd.f32 %v4363, %v3663
  %v4365 = vadd.f32 %v4364, %v3667
  %v4366 = vadd.f32 %v4365, %v3671
  %v4367 = vadd.f32 %v4366, %v3675
  %v4368 = vadd.f32 %v4367, %v3679
  %v4369 = vadd.f32 %v4368, %v3683
  %v4370 = vadd.f32 %v4369, %v3687
  %v4371 = vadd.f32 %v4370, %v3691
  %v4372 = vadd.f32 %v4371, %v3695
  %v4373 = vadd.f32 %v4372, %v3699
  %v4374 = vadd.f32 %v4373, %v3703
  %v4375 = vadd.f32 %v4374, %v3707
  %v4376 = vadd.f32 %v4375, %v3711
  %v4377 = vadd.f32 %v4376, %v3715
  %v4378 = vadd.f32 %v4377, %v3719
  %v4379 = vadd.f32 %v4378, %v3723
  %v4380 = vadd.f32 %v4379, %v3727
  %v4381 = vadd.f32 %v4380, %v3731
  %v4382 = vadd.f32 %v4381, %v3735
  %v4383 = vadd.f32 %v4382, %v3739
  %v4384 = vadd.f32 %v4383, %v3743
  %v4385 = vadd.f32 %v4384, %v3747
  %v4386 = vadd.f32 %v4385, %v3751
  %v4387 = vadd.f32 %v4386, %v3755
  %v4388 = vadd.f32 %v4387, %v3759
  %v4389 = vadd.f32 %v4388, %v3763
  %v4390 = vadd.f32 %v4389, %v3767
  %v4391 = vadd.f32 %v4390, %v3771
  %v4392 = vadd.f32 %v4391, %v3775
  %v4393 = vadd.f32 %v4392, %v3779
  %v4394 = vadd.f32 %v4393, %v3783
  %v4395 = vadd.f32 %v4394, %v3787
  %v4396 = vadd.f32 %v4395, %v3791
  %v4397 = vadd.f32 %v4396, %v3795
  %v4398 = vadd.f32 %v4397, %v3799
  %v4399 = vadd.f32 %v4398, %v3803
  %v4400 = vadd.f32 %v4399, %v3807
  %v4401 = vadd.f32 %v4400, %v3811
  %v4402 = vadd.f32 %v4401, %v3815
  %v4403 = vadd.f32 %v4402, %v3819
  %v4404 = vadd.f32 %v4403, %v3823
  %v4405 = vadd.f32 %v4404, %v3827
  %v4406 = vadd.f32 %v4405, %v3831
  %v4407 = vadd.f32 %v4406, %v3835
  %v4408 = vadd.f32 %v4407, %v3839
  %v4409 = vadd.f32 %v4408, %v3843
  %v4410 = vadd.f32 %v4409, %v3847
  %v4411 = vadd.f32 %v4410, %v3851
  %v4412 = vadd.f32 %v4411, %v3855
  %v4413 = vadd.f32 %v4412, %v3859
  %v4414 = vadd.f32 %v4413, %v3863
  %v4415 = vadd.f32 %v4414, %v3867
  %v4416 = vadd.f32 %v4415, %v3871
  %v4417 = vadd.f32 %v4416, %v3875
  %v4418 = vadd.f32 %v4417, %v3879
  %v4419 = vadd.f32 %v4418, %v3883
  %v4420 = vadd.f32 %v4419, %v3887
  %v4421 = vadd.f32 %v4420, %v3891
  %v4422 = vadd.f32 %v4421, %v3895
  %v4423 = vadd.f32 %v4422, %v3899
  %v4424 = vadd.f32 %v4423, %v3903
  %v4425 = vadd.f32 %v4424, %v3907
  %v4426 = vadd.f32 %v4425, %v3911
  %v4427 = vadd.f32 %v4426, %v3915
  %v4428 = vadd.f32 %v4427, %v3919
  %v4429 = vadd.f32 %v4428, %v3923
  %v4430 = vadd.f32 %v4429, %v3927
  %v4431 = vadd.f32 %v4430, %v3931
  %v4432 = vadd.f32 %v4431, %v3935
  %v4433 = vadd.f32 %v4432, %v3939
  %v4434 = vadd.f32 %v4433, %v3943
  %v4435 = vadd.f32 %v4434, %v3947
  %v4436 = vadd.f32 %v4435, %v3951
  %v4437 = vadd.f32 %v4436, %v3955
  %v4438 = vadd.f32 %v4437, %v3959
  %v4439 = vadd.f32 %v4438, %v3963
  %v4440 = vadd.f32 %v4439, %v3967
  %v4441 = vadd.f32 %v4440, %v3971
  %v4442 = vadd.f32 %v4441, %v3975
  %v4443 = vadd.f32 %v4442, %v3979
  %v4444 = vadd.f32 %v4443, %v3983
  %v4445 = vadd.f32 %v4444, %v3987
  %v4446 = vadd.f32 %v4445, %v3991
  %v4447 = vadd.f32 %v4446, %v3995
  %v4448 = vadd.f32 %v4447, %v3999
  %v4449 = vadd.f32 %v4448, %v4003
  %v4450 = vadd.f32 %v4449, %v4007
  %v4451 = vadd.f32 %v4450, %v4011
  %v4452 = vadd.f32 %v4451, %v4015
  %v4453 = vadd.f32 %v4452, %v4019
  %v4454 = vadd.f32 %v4453, %v4023
  %v4455 = vadd.f32 %v4454, %v4027
  %v4456 = vadd.f32 %v4455, %v4031
  %v4457 = vadd.f32 %v4456, %v4035
  %v4458 = vadd.f32 %v4457, %v4039
  %v4459 = vadd.f32 %v4458, %v4043
  %v4460 = vadd.f32 %v4459, %v4047
  %v4461 = vadd.f32 %v4460, %v4051
  %v4462 = vadd.f32 %v4461, %v4055
  %v4463 = vadd.f32 %v4462, %v4059
  %v4464 = vadd.f32 %v4463, %v4063
  %v4465 = vadd.f32 %v4464, %v4067
  %v4466 = vadd.f32 %v4465, %v4071
  %v4467 = vadd.f32 %v4466, %v4075
  %v4468 = vadd.f32 %v4467, %v4079
  %v4469 = vrot.slane %v4468, 4
  %v4470 = vadd.f32 %v4468, %v4469
  %v4471 = vrot.slane %v4470, 2
  %v4472 = vadd.f32 %v4470, %v4471
  %v4473 = vrot.slane %v4472, 1
  %v4474 = vadd.f32 %v4472, %v4473
  %v4475 = vadd.f32 %v3584, %v3588
  %v4476 = vadd.f32 %v4475, %v3592
  %v4477 = vadd.f32 %v4476, %v3596
  %v4478 = vadd.f32 %v4477, %v3600
  %v4479 = vadd.f32 %v4478, %v3604
  %v4480 = vadd.f32 %v4479, %v3608
  %v4481 = vadd.f32 %v4480, %v3612
  %v4482 = vadd.f32 %v4481, %v3616
  %v4483 = vadd.f32 %v4482, %v3620
  %v4484 = vadd.f32 %v4483, %v3624
  %v4485 = vadd.f32 %v4484, %v3628
  %v4486 = vadd.f32 %v4485, %v3632
  %v4487 = vadd.f32 %v4486, %v3636
  %v4488 = vadd.f32 %v4487, %v3640
  %v4489 = vadd.f32 %v4488, %v3644
  %v4490 = vadd.f32 %v4489, %v3648
  %v4491 = vadd.f32 %v4490, %v3652
  %v4492 = vadd.f32 %v4491, %v3656
  %v4493 = vadd.f32 %v4492, %v3660
  %v4494 = vadd.f32 %v4493, %v3664
  %v4495 = vadd.f32 %v4494, %v3668
  %v4496 = vadd.f32 %v4495, %v3672
  %v4497 = vadd.f32 %v4496, %v3676
  %v4498 = vadd.f32 %v4497, %v3680
  %v4499 = vadd.f32 %v4498, %v3684
  %v4500 = vadd.f32 %v4499, %v3688
  %v4501 = vadd.f32 %v4500, %v3692
  %v4502 = vadd.f32 %v4501, %v3696
  %v4503 = vadd.f32 %v4502, %v3700
  %v4504 = vadd.f32 %v4503, %v3704
  %v4505 = vadd.f32 %v4504, %v3708
  %v4506 = vadd.f32 %v4505, %v3712
  %v4507 = vadd.f32 %v4506, %v3716
  %v4508 = vadd.f32 %v4507, %v3720
  %v4509 = vadd.f32 %v4508, %v3724
  %v4510 = vadd.f32 %v4509, %v3728
  %v4511 = vadd.f32 %v4510, %v3732
  %v4512 = vadd.f32 %v4511, %v3736
  %v4513 = vadd.f32 %v4512, %v3740
  %v4514 = vadd.f32 %v4513, %v3744
  %v4515 = vadd.f32 %v4514, %v3748
  %v4516 = vadd.f32 %v4515, %v3752
  %v4517 = vadd.f32 %v4516, %v3756
  %v4518 = vadd.f32 %v4517, %v3760
  %v4519 = vadd.f32 %v4518, %v3764
  %v4520 = vadd.f32 %v4519, %v3768
  %v4521 = vadd.f32 %v4520, %v3772
  %v4522 = vadd.f32 %v4521, %v3776
  %v4523 = vadd.f32 %v4522, %v3780
  %v4524 = vadd.f32 %v4523, %v3784
  %v4525 = vadd.f32 %v4524, %v3788
  %v4526 = vadd.f32 %v4525, %v3792
  %v4527 = vadd.f32 %v4526, %v3796
  %v4528 = vadd.f32 %v4527, %v3800
  %v4529 = vadd.f32 %v4528, %v3804
  %v4530 = vadd.f32 %v4529, %v3808
  %v4531 = vadd.f32 %v4530, %v3812
  %v4532 = vadd.f32 %v4531, %v3816
  %v4533 = vadd.f32 %v4532, %v3820
  %v4534 = vadd.f32 %v4533, %v3824
  %v4535 = vadd.f32 %v4534, %v3828
  %v4536 = vadd.f32 %v4535, %v3832
  %v4537 = vadd.f32 %v4536, %v3836
  %v4538 = vadd.f32 %v4537, %v3840
  %v4539 = vadd.f32 %v4538, %v3844
  %v4540 = vadd.f32 %v4539, %v3848
  %v4541 = vadd.f32 %v4540, %v3852
  %v4542 = vadd.f32 %v4541, %v3856
  %v4543 = vadd.f32 %v4542, %v3860
  %v4544 = vadd.f32 %v4543, %v3864
  %v4545 = vadd.f32 %v4544, %v3868
  %v4546 = vadd.f32 %v4545, %v3872
  %v4547 = vadd.f32 %v4546, %v3876
  %v4548 = vadd.f32 %v4547, %v3880
  %v4549 = vadd.f32 %v4548, %v3884
  %v4550 = vadd.f32 %v4549, %v3888
  %v4551 = vadd.f32 %v4550, %v3892
  %v4552 = vadd.f32 %v4551, %v3896
  %v4553 = vadd.f32 %v4552, %v3900
  %v4554 = vadd.f32 %v4553, %v3904
  %v4555 = vadd.f32 %v4554, %v3908
  %v4556 = vadd.f32 %v4555, %v3912
  %v4557 = vadd.f32 %v4556, %v3916
  %v4558 = vadd.f32 %v4557, %v3920
  %v4559 = vadd.f32 %v4558, %v3924
  %v4560 = vadd.f32 %v4559, %v3928
  %v4561 = vadd.f32 %v4560, %v3932
  %v4562 = vadd.f32 %v4561, %v3936
  %v4563 = vadd.f32 %v4562, %v3940
  %v4564 = vadd.f32 %v4563, %v3944
  %v4565 = vadd.f32 %v4564, %v3948
  %v4566 = vadd.f32 %v4565, %v3952
  %v4567 = vadd.f32 %v4566, %v3956
  %v4568 = vadd.f32 %v4567, %v3960
  %v4569 = vadd.f32 %v4568, %v3964
  %v4570 = vadd.f32 %v4569, %v3968
  %v4571 = vadd.f32 %v4570, %v3972
  %v4572 = vadd.f32 %v4571, %v3976
  %v4573 = vadd.f32 %v4572, %v3980
  %v4574 = vadd.f32 %v4573, %v3984
  %v4575 = vadd.f32 %v4574, %v3988
  %v4576 = vadd.f32 %v4575, %v3992
  %v4577 = vadd.f32 %v4576, %v3996
  %v4578 = vadd.f32 %v4577, %v4000
  %v4579 = vadd.f32 %v4578, %v4004
  %v4580 = vadd.f32 %v4579, %v4008
  %v4581 = vadd.f32 %v4580, %v4012
  %v4582 = vadd.f32 %v4581, %v4016
  %v4583 = vadd.f32 %v4582, %v4020
  %v4584 = vadd.f32 %v4583, %v4024
  %v4585 = vadd.f32 %v4584, %v4028
  %v4586 = vadd.f32 %v4585, %v4032
  %v4587 = vadd.f32 %v4586, %v4036
  %v4588 = vadd.f32 %v4587, %v4040
  %v4589 = vadd.f32 %v4588, %v4044
  %v4590 = vadd.f32 %v4589, %v4048
  %v4591 = vadd.f32 %v4590, %v4052
  %v4592 = vadd.f32 %v4591, %v4056
  %v4593 = vadd.f32 %v4592, %v4060
  %v4594 = vadd.f32 %v4593, %v4064
  %v4595 = vadd.f32 %v4594, %v4068
  %v4596 = vadd.f32 %v4595, %v4072
  %v4597 = vadd.f32 %v4596, %v4076
  %v4598 = vadd.f32 %v4597, %v4080
  %v4599 = vrot.slane %v4598, 4
  %v4600 = vadd.f32 %v4598, %v4599
  %v4601 = vrot.slane %v4600, 2
  %v4602 = vadd.f32 %v4600, %v4601
  %v4603 = vrot.slane %v4602, 1
  %v4604 = vadd.f32 %v4602, %v4603
  %v4605 = vadd.f32 %v4081, %v4214
  %v4606 = vadd.f32 %v4082, %v4344
  %v4607 = vadd.f32 %v4083, %v4474
  %v4608 = vadd.f32 %v4084, %v4604
  %4609 = vst [vmem:[%s3] sm:$0xff] %v4605
  %4610 = vst [vmem:[%s3 + $0x8] sm:$0xff] %v4606
  %4611 = vst [vmem:[%s3 + $0x10] sm:$0xff] %v4607
  %4612 = vst [vmem:[%s3 + $0x18] sm:$0xff] %v4608
  // Predicated region
  $region18: #{semantic_attention.2} parent=0 // pred_check
    _
  $region19: #{semantic_attention.2} parent=0 // pred_check_branch
    %4614 = sbr.rel (0) target = $region21
  $region20: #{semantic_attention.2} parent=0 // pred_region
    _
  $region21: #{semantic_attention.2} parent=0 // pred_fallthru
    _
  // Predicated region
  $region22: #{semantic_attention.2} parent=0 // pred_check
    _
  $region23: #{semantic_attention.2} parent=0 // pred_check_branch
    %4616 = sbr.rel (0) target = $region25
  $region24: #{semantic_attention.2} parent=0 // pred_region
    _
  $region25: #{semantic_attention.2} parent=0 // pred_fallthru
    _

</llo_original>
